<compile_context>
chip_gen: v7x
topology: tpu7x:2x2x1
jax: 0.10.0
libtpu: 0.0.40
codegen_flags: <defaults>
</compile_context>

<pallas_src>
import functools

import jax
import jax.numpy as jnp
import numpy as np
from jax.experimental import pallas as pl
from jax.experimental.pallas import tpu as pltpu


# ---------------------------------------------------------------------------
# Fused encoder kernel: conv1 GEMM -> conv2 -> conv3 -> (obs_fc | goal_fc)
# ---------------------------------------------------------------------------
def _fused_encoder_kernel(patches_ref, goals_ref,
                          w1_ref, b1_ref,
                          s2_ref, w2_ref, b2_ref,
                          s3_ref, w3_ref, b3_ref,
                          sfc_ref, wfc_ref, wg_ref, bout_ref,
                          out_ref, *, fc_direct):
    f32 = jnp.float32
    cdt = w1_ref.dtype            # compute dtype for MXU inputs (f32 or bf16)

    def mm(a, b):
        return jnp.dot(a, b, preferred_element_type=f32)

    # conv1 as a GEMM on pre-extracted patches: (B*H1*W1, Cin*64) @ (Cin*64, 32)
    y1 = jnp.maximum(mm(patches_ref[...], w1_ref[...]) + b1_ref[...], 0.0)
    y1 = y1.astype(cdt)

    # conv2: accumulate over the 16 kernel offsets.  Row gathers are done with
    # 0/1 selection matrices on the MXU, so no reshapes / strided slices.
    acc2 = mm(mm(s2_ref[0], y1).astype(cdt), w2_ref[0])
    for t in range(1, s2_ref.shape[0]):
        acc2 = acc2 + mm(mm(s2_ref[t], y1).astype(cdt), w2_ref[t])
    y2 = jnp.maximum(acc2 + b2_ref[...], 0.0).astype(cdt)

    # conv3: same trick, 9 offsets.
    acc3 = mm(mm(s3_ref[0], y2).astype(cdt), w3_ref[0])
    for t in range(1, s3_ref.shape[0]):
        acc3 = acc3 + mm(mm(s3_ref[t], y2).astype(cdt), w3_ref[t])
    y3 = jnp.maximum(acc3 + b3_ref[...], 0.0).astype(cdt)

    # Heads: obs_fc and goal_fc share one block-structured, 128-lane-padded
    # weight, so torch.cat(dim=1) is just column placement -> one lane-dense
    # store of the whole (B, 128) block.
    if fc_direct:                              # conv3 output is 1x1 spatially
        acc = mm(y3, wfc_ref[0])
    else:                                      # general case: gather spatial rows
        acc = mm(mm(sfc_ref[0], y3).astype(cdt), wfc_ref[0])
        for p in range(1, sfc_ref.shape[0]):
            acc = acc + mm(mm(sfc_ref[p], y3).astype(cdt), wfc_ref[p])
    acc = acc + mm(goals_ref[...], wg_ref[...])
    out_ref[...] = jnp.maximum(acc + bout_ref[...], 0.0).astype(out_ref.dtype)


# ---------------------------------------------------------------------------
# Glue: im2col for conv1 only (input layout prep; verified feature order)
# ---------------------------------------------------------------------------
def _im2col(x, kh, kw, stride):
    """(B, C, H, W) -> (B*Ho*Wo, C*kh*kw); feature order (c, i, j) = OIHW flatten."""
    B, C, H, W = x.shape
    Ho = (H - kh) // stride + 1
    Wo = (W - kw) // stride + 1
    cols = []
    for i in range(kh):
        for j in range(kw):
            cols.append(x[:, :, i:i + stride * Ho:stride, j:j + stride * Wo:stride])
    p = jnp.stack(cols, axis=2)                    # (B, C, kh*kw, Ho, Wo)
    p = p.reshape(B, C * kh * kw, Ho, Wo)          # f = c*(kh*kw) + i*kw + j
    p = p.transpose(0, 2, 3, 1).reshape(B * Ho * Wo, C * kh * kw)
    return p, Ho, Wo


# ---------------------------------------------------------------------------
# One-time parameter preparation (host-side numpy; NOT in the traced forward)
# ---------------------------------------------------------------------------
def _conv_row_selectors(B, Hi, Wi, kh, kw, stride):
    """0/1 gather matrices S[t=i*kw+j] of shape (B*Ho*Wo, B*Hi*Wi): output row
    (b,ho,wo) picks input row (b, stride*ho+i, stride*wo+j)."""
    Ho = (Hi - kh) // stride + 1
    Wo = (Wi - kw) // stride + 1
    S = np.zeros((kh * kw, B * Ho * Wo, B * Hi * Wi), np.float32)
    b = np.arange(B)[:, None, None]
    ho = np.arange(Ho)[None, :, None]
    wo = np.arange(Wo)[None, None, :]
    r_out = ((b * Ho + ho) * Wo + wo).reshape(-1)
    for i in range(kh):
        for j in range(kw):
            t = i * kw + j
            r_in = ((b * Hi + stride * ho + i) * Wi + stride * wo + j).reshape(-1)
            S[t, r_out, r_in] = 1.0
    return S, Ho, Wo


def _flatten_row_selectors(B, P):
    """S[p] of shape (B, B*P): row b picks row b*P + p (spatial gather for obs_fc)."""
    S = np.zeros((P, B, B * P), np.float32)
    for p in range(P):
        S[p, np.arange(B), np.arange(B) * P + p] = 1.0
    return S


def prepare_params(params, batch_size, obs_channel, obs_hw,
                   compute_dtype=jnp.float32):
    """Pre-transpose / pre-flatten PyTorch-layout params into kernel layout."""
    cdt = compute_dtype
    C = obs_channel
    H0 = obs_hw

    # conv1: (K=C*64, 32) GEMM weight, feature order (c, i, j)
    w1 = np.asarray(params["conv1_w"], np.float32)            # (32, C, 8, 8)
    W1 = w1.reshape(32, C * 64).T
    b1 = np.asarray(params["conv1_b"], np.float32).reshape(1, 32)
    H1 = (H0 - 8) // 4 + 1

    # conv2: per-offset weights + selection matrices
    S2, H2, _ = _conv_row_selectors(batch_size, H1, H1, 4, 4, 2)
    w2 = np.asarray(params["conv2_w"], np.float32)             # (64, 32, 4, 4)
    W2 = w2.transpose(2, 3, 1, 0).reshape(16, 32, 64)          # [i*4+j, c, oc]
    b2 = np.asarray(params["conv2_b"], np.float32).reshape(1, 64)

    # conv3
    S3, H3, _ = _conv_row_selectors(batch_size, H2, H2, 3, 3, 1)
    w3 = np.asarray(params["conv3_w"], np.float32)             # (64, 64, 3, 3)
    W3 = w3.transpose(2, 3, 1, 0).reshape(9, 64, 64)
    b3 = np.asarray(params["conv3_b"], np.float32).reshape(1, 64)

    # heads: block-structured combined weight, padded to a 128-lane output
    P = H3 * H3
    fw = np.asarray(params["obs_fc_w"], np.float32)            # (64*P, E_obs), torch (c,h,w) flatten rows
    fb = np.asarray(params["obs_fc_b"], np.float32).reshape(-1)
    gw = np.asarray(params["goal_fc_w"], np.float32)           # (goal_dim, E_goal)
    gb = np.asarray(params["goal_fc_b"], np.float32).reshape(-1)
    e_obs, e_goal = fw.shape[1], gw.shape[1]
    e_total = e_obs + e_goal
    out_cols = ((e_total + 127) // 128) * 128

    Wfc = fw.reshape(64, P, e_obs).transpose(1, 0, 2)          # (P, 64, E_obs)
    Wfc_wide = np.zeros((P, 64, out_cols), np.float32)
    Wfc_wide[:, :, :e_obs] = Wfc
    Wg_wide = np.zeros((gw.shape[0], out_cols), np.float32)
    Wg_wide[:, e_obs:e_total] = gw
    bout = np.zeros((1, out_cols), np.float32)
    bout[0, :e_obs] = fb
    bout[0, e_obs:e_total] = gb
    Sfc = _flatten_row_selectors(batch_size, P)

    return {
        # MXU operands in compute dtype; biases / epilogue stay f32.
        "w1": jnp.asarray(W1, cdt), "b1": jnp.asarray(b1, jnp.float32),
        "s2": jnp.asarray(S2, cdt), "w2": jnp.asarray(W2, cdt),
        "b2": jnp.asarray(b2, jnp.float32),
        "s3": jnp.asarray(S3, cdt), "w3": jnp.asarray(W3, cdt),
        "b3": jnp.asarray(b3, jnp.float32),
        "sfc": jnp.asarray(Sfc, cdt), "wfc": jnp.asarray(Wfc_wide, cdt),
        "wg": jnp.asarray(Wg_wide, cdt), "bout": jnp.asarray(bout, jnp.float32),
        "compute_dtype": cdt, "fc_direct": (P == 1), "e_total": e_total,
    }


# ---------------------------------------------------------------------------
# Fused forward
# ---------------------------------------------------------------------------
def encoder_forward_fused(prep, observations, goals):
    cdt = prep["compute_dtype"]
    B = observations.shape[0]
    patches, _, _ = _im2col(observations.astype(jnp.float32), 8, 8, 4)
    patches = patches.astype(cdt)
    goals_c = goals.astype(cdt)
    out_cols = prep["bout"].shape[1]

    kernel = functools.partial(_fused_encoder_kernel,
                               fc_direct=prep["fc_direct"])
    out = pl.pallas_call(
        kernel,
        out_shape=jax.ShapeDtypeStruct((B, out_cols), jnp.float32),
        in_specs=[pl.BlockSpec(memory_space=pltpu.MemorySpace.VMEM)] * 14,
        out_specs=pl.BlockSpec(memory_space=pltpu.MemorySpace.VMEM),
    )(patches, goals_c,
      prep["w1"], prep["b1"],
      prep["s2"], prep["w2"], prep["b2"],
      prep["s3"], prep["w3"], prep["b3"],
      prep["sfc"], prep["wfc"], prep["wg"], prep["bout"])
    return out[:, :prep["e_total"]]       # drop the 128-lane padding


# ---------------------------------------------------------------------------
# Deterministic parameter init (PyTorch-style uniform(-1/sqrt(fan_in), +...))
# ---------------------------------------------------------------------------
def init_params(key, goal_dim, obs_channel, obs_emb, goal_emb, obs_hw):
    def u(k, fan_in, shape):
        bound = 1.0 / jnp.sqrt(jnp.asarray(fan_in, jnp.float32))
        return jax.random.uniform(k, shape, jnp.float32, -bound, bound)

    h = (obs_hw - 8) // 4 + 1
    h = (h - 4) // 2 + 1
    h = (h - 3) // 1 + 1
    flat_dim = 64 * h * h

    ks = jax.random.split(key, 10)
    return {
        "conv1_w": u(ks[0], obs_channel * 8 * 8, (32, obs_channel, 8, 8)),
        "conv1_b": u(ks[1], obs_channel * 8 * 8, (32,)),
        "conv2_w": u(ks[2], 32 * 4 * 4, (64, 32, 4, 4)),
        "conv2_b": u(ks[3], 32 * 4 * 4, (64,)),
        "conv3_w": u(ks[4], 64 * 3 * 3, (64, 64, 3, 3)),
        "conv3_b": u(ks[5], 64 * 3 * 3, (64,)),
        "obs_fc_w": u(ks[6], flat_dim, (flat_dim, obs_emb)),
        "obs_fc_b": u(ks[7], flat_dim, (1, obs_emb)),
        "goal_fc_w": u(ks[8], goal_dim, (goal_dim, goal_emb)),
        "goal_fc_b": u(ks[9], goal_dim, (1, goal_emb)),
    }


# ---------------------------------------------------------------------------
# Pure-JAX reference (for correctness checks)
# ---------------------------------------------------------------------------
def encoder_reference(params, observations, goals):
    hp = jax.lax.Precision.HIGHEST

    def conv(x, w, b, s):
        y = jax.lax.conv_general_dilated(
            x, w, window_strides=(s, s), padding="VALID",
            dimension_numbers=("NCHW", "OIHW", "NCHW"), precision=hp)
        return jnp.maximum(y + b.reshape(1, -1, 1, 1), 0.0)

    x = conv(observations, params["conv1_w"], params["conv1_b"], 4)
    x = conv(x, params["conv2_w"], params["conv2_b"], 2)
    x = conv(x, params["conv3_w"], params["conv3_b"], 1)
    flat = x.reshape(x.shape[0], -1)
    obs_emb = jnp.maximum(flat @ params["obs_fc_w"] + params["obs_fc_b"], 0.0)
    goal_emb = jnp.maximum(goals @ params["goal_fc_w"] + params["goal_fc_b"], 0.0)
    return jnp.concatenate([obs_emb, goal_emb], axis=1)


if __name__ == "__main__":
    B = 2
    OBS_CHANNEL = 4        # e.g. RGBD
    OBS_HW = 36            # Nature CNN reduces 36 -> 8 -> 3 -> 1
    GOAL_DIM = 3           # point goal
    OBS_EMB = 32
    GOAL_EMB = 16

    key = jax.random.PRNGKey(0)
    kp, ko, kg = jax.random.split(key, 3)

    params = init_params(kp, GOAL_DIM, OBS_CHANNEL, OBS_EMB, GOAL_EMB, OBS_HW)
    observations = jax.random.normal(ko, (B, OBS_CHANNEL, OBS_HW, OBS_HW), jnp.float32)
    goals = jax.random.normal(kg, (B, GOAL_DIM), jnp.float32)

    ref = encoder_reference(params, observations, goals)

    # --- f32 MXU path: tight tolerance (allows only for accumulation-order /
    #     multi-pass MXU rounding differences vs the HIGHEST-precision ref).
    prep_f32 = prepare_params(params, B, OBS_CHANNEL, OBS_HW, jnp.float32)
    fwd_f32 = jax.jit(lambda o, g: encoder_forward_fused(prep_f32, o, g))
    out_f32 = jax.block_until_ready(fwd_f32(observations, goals))
    assert out_f32.shape == (B, OBS_EMB + GOAL_EMB), out_f32.shape
    assert jnp.allclose(out_f32, ref, rtol=1e-3, atol=1e-3), (
        float(jnp.max(jnp.abs(out_f32 - ref))))

    # --- bf16 MXU inputs (recommended on v6e/v7x), f32 accumulate + epilogue.
    prep_bf16 = prepare_params(params, B, OBS_CHANNEL, OBS_HW, jnp.bfloat16)
    fwd_bf16 = jax.jit(lambda o, g: encoder_forward_fused(prep_bf16, o, g))
    out_bf16 = jax.block_until_ready(fwd_bf16(observations, goals))
    assert out_bf16.shape == (B, OBS_EMB + GOAL_EMB), out_bf16.shape
    assert jnp.allclose(out_bf16, ref, rtol=3e-2, atol=3e-2), (
        float(jnp.max(jnp.abs(out_bf16 - ref))))

    print("KERNEL_OK")
</pallas_src>

<mosaic_0001>
module attributes {stable_mosaic.version = 11 : i64} {
  func.func @_fused_encoder_kernel(%arg0: memref<128x256xf32, #tpu.memory_space<vmem>>, %arg1: memref<2x3xf32, #tpu.memory_space<vmem>>, %arg2: memref<256x32xf32, #tpu.memory_space<vmem>>, %arg3: memref<1x32xf32, #tpu.memory_space<vmem>>, %arg4: memref<16x18x128xf32, #tpu.memory_space<vmem>>, %arg5: memref<16x32x64xf32, #tpu.memory_space<vmem>>, %arg6: memref<1x64xf32, #tpu.memory_space<vmem>>, %arg7: memref<9x2x18xf32, #tpu.memory_space<vmem>>, %arg8: memref<9x64x64xf32, #tpu.memory_space<vmem>>, %arg9: memref<1x64xf32, #tpu.memory_space<vmem>>, %arg10: memref<1x2x2xf32, #tpu.memory_space<vmem>>, %arg11: memref<1x64x128xf32, #tpu.memory_space<vmem>>, %arg12: memref<3x128xf32, #tpu.memory_space<vmem>>, %arg13: memref<1x128xf32, #tpu.memory_space<vmem>>, %arg14: memref<2x128xf32, #tpu.memory_space<vmem>>) attributes {dimension_semantics = [], scalar_prefetch = 0 : i64, scratch_operands = 0 : i64, tpu.core_type = #tpu.core_type<tc>} {
    %c0 = arith.constant 0 : index
    %c0_0 = arith.constant 0 : index
    %0 = vector.load %arg0[%c0, %c0_0] : memref<128x256xf32, #tpu.memory_space<vmem>>, vector<128x256xf32>
    %c0_1 = arith.constant 0 : index
    %c0_2 = arith.constant 0 : index
    %1 = vector.load %arg2[%c0_1, %c0_2] : memref<256x32xf32, #tpu.memory_space<vmem>>, vector<256x32xf32>
    %cst = arith.constant dense<0.000000e+00> : vector<128x32xf32>
    %2 = tpu.matmul %0, %1, %cst {dimension_numbers = #tpu.dot_dimension_numbers<[1], [0], [0], [1], [0, 0, 1, 1], [], []>} : vector<128x256xf32>, vector<256x32xf32>, vector<128x32xf32> -> vector<128x32xf32>
    %c0_3 = arith.constant 0 : index
    %c0_4 = arith.constant 0 : index
    %3 = vector.load %arg3[%c0_3, %c0_4] : memref<1x32xf32, #tpu.memory_space<vmem>>, vector<1x32xf32>
    %4 = vector.broadcast %3 : vector<1x32xf32> to vector<128x32xf32>
    %5 = arith.addf %2, %4 : vector<128x32xf32>
    %cst_5 = arith.constant 0.000000e+00 : f32
    %6 = vector.broadcast %cst_5 : f32 to vector<128x32xf32>
    %7 = arith.maximumf %5, %6 : vector<128x32xf32>
    %c0_6 = arith.constant 0 : index
    %c0_7 = arith.constant 0 : index
    %c0_8 = arith.constant 0 : index
    %8 = vector.load %arg4[%c0_6, %c0_7, %c0_8] : memref<16x18x128xf32, #tpu.memory_space<vmem>>, vector<1x18x128xf32>
    %9 = vector.shape_cast %8 : vector<1x18x128xf32> to vector<18x128xf32>
    %cst_9 = arith.constant dense<0.000000e+00> : vector<18x32xf32>
    %10 = tpu.matmul %9, %7, %cst_9 {dimension_numbers = #tpu.dot_dimension_numbers<[1], [0], [0], [1], [0, 0, 1, 1], [], []>} : vector<18x128xf32>, vector<128x32xf32>, vector<18x32xf32> -> vector<18x32xf32>
    %c0_10 = arith.constant 0 : index
    %c0_11 = arith.constant 0 : index
    %c0_12 = arith.constant 0 : index
    %11 = vector.load %arg5[%c0_10, %c0_11, %c0_12] : memref<16x32x64xf32, #tpu.memory_space<vmem>>, vector<1x32x64xf32>
    %12 = vector.shape_cast %11 : vector<1x32x64xf32> to vector<32x64xf32>
    %cst_13 = arith.constant dense<0.000000e+00> : vector<18x64xf32>
    %13 = tpu.matmul %10, %12, %cst_13 {dimension_numbers = #tpu.dot_dimension_numbers<[1], [0], [0], [1], [0, 0, 1, 1], [], []>} : vector<18x32xf32>, vector<32x64xf32>, vector<18x64xf32> -> vector<18x64xf32>
    %c1 = arith.constant 1 : index
    %c0_14 = arith.constant 0 : index
    %c0_15 = arith.constant 0 : index
    %14 = vector.load %arg4[%c1, %c0_14, %c0_15] : memref<16x18x128xf32, #tpu.memory_space<vmem>>, vector<1x18x128xf32>
    %15 = vector.shape_cast %14 : vector<1x18x128xf32> to vector<18x128xf32>
    %cst_16 = arith.constant dense<0.000000e+00> : vector<18x32xf32>
    %16 = tpu.matmul %15, %7, %cst_16 {dimension_numbers = #tpu.dot_dimension_numbers<[1], [0], [0], [1], [0, 0, 1, 1], [], []>} : vector<18x128xf32>, vector<128x32xf32>, vector<18x32xf32> -> vector<18x32xf32>
    %c1_17 = arith.constant 1 : index
    %c0_18 = arith.constant 0 : index
    %c0_19 = arith.constant 0 : index
    %17 = vector.load %arg5[%c1_17, %c0_18, %c0_19] : memref<16x32x64xf32, #tpu.memory_space<vmem>>, vector<1x32x64xf32>
    %18 = vector.shape_cast %17 : vector<1x32x64xf32> to vector<32x64xf32>
    %cst_20 = arith.constant dense<0.000000e+00> : vector<18x64xf32>
    %19 = tpu.matmul %16, %18, %cst_20 {dimension_numbers = #tpu.dot_dimension_numbers<[1], [0], [0], [1], [0, 0, 1, 1], [], []>} : vector<18x32xf32>, vector<32x64xf32>, vector<18x64xf32> -> vector<18x64xf32>
    %20 = arith.addf %13, %19 : vector<18x64xf32>
    %c2 = arith.constant 2 : index
    %c0_21 = arith.constant 0 : index
    %c0_22 = arith.constant 0 : index
    %21 = vector.load %arg4[%c2, %c0_21, %c0_22] : memref<16x18x128xf32, #tpu.memory_space<vmem>>, vector<1x18x128xf32>
    %22 = vector.shape_cast %21 : vector<1x18x128xf32> to vector<18x128xf32>
    %cst_23 = arith.constant dense<0.000000e+00> : vector<18x32xf32>
    %23 = tpu.matmul %22, %7, %cst_23 {dimension_numbers = #tpu.dot_dimension_numbers<[1], [0], [0], [1], [0, 0, 1, 1], [], []>} : vector<18x128xf32>, vector<128x32xf32>, vector<18x32xf32> -> vector<18x32xf32>
    %c2_24 = arith.constant 2 : index
    %c0_25 = arith.constant 0 : index
    %c0_26 = arith.constant 0 : index
    %24 = vector.load %arg5[%c2_24, %c0_25, %c0_26] : memref<16x32x64xf32, #tpu.memory_space<vmem>>, vector<1x32x64xf32>
    %25 = vector.shape_cast %24 : vector<1x32x64xf32> to vector<32x64xf32>
    %cst_27 = arith.constant dense<0.000000e+00> : vector<18x64xf32>
    %26 = tpu.matmul %23, %25, %cst_27 {dimension_numbers = #tpu.dot_dimension_numbers<[1], [0], [0], [1], [0, 0, 1, 1], [], []>} : vector<18x32xf32>, vector<32x64xf32>, vector<18x64xf32> -> vector<18x64xf32>
    %27 = arith.addf %20, %26 : vector<18x64xf32>
    %c3 = arith.constant 3 : index
    %c0_28 = arith.constant 0 : index
    %c0_29 = arith.constant 0 : index
    %28 = vector.load %arg4[%c3, %c0_28, %c0_29] : memref<16x18x128xf32, #tpu.memory_space<vmem>>, vector<1x18x128xf32>
    %29 = vector.shape_cast %28 : vector<1x18x128xf32> to vector<18x128xf32>
    %cst_30 = arith.constant dense<0.000000e+00> : vector<18x32xf32>
    %30 = tpu.matmul %29, %7, %cst_30 {dimension_numbers = #tpu.dot_dimension_numbers<[1], [0], [0], [1], [0, 0, 1, 1], [], []>} : vector<18x128xf32>, vector<128x32xf32>, vector<18x32xf32> -> vector<18x32xf32>
    %c3_31 = arith.constant 3 : index
    %c0_32 = arith.constant 0 : index
    %c0_33 = arith.constant 0 : index
    %31 = vector.load %arg5[%c3_31, %c0_32, %c0_33] : memref<16x32x64xf32, #tpu.memory_space<vmem>>, vector<1x32x64xf32>
    %32 = vector.shape_cast %31 : vector<1x32x64xf32> to vector<32x64xf32>
    %cst_34 = arith.constant dense<0.000000e+00> : vector<18x64xf32>
    %33 = tpu.matmul %30, %32, %cst_34 {dimension_numbers = #tpu.dot_dimension_numbers<[1], [0], [0], [1], [0, 0, 1, 1], [], []>} : vector<18x32xf32>, vector<32x64xf32>, vector<18x64xf32> -> vector<18x64xf32>
    %34 = arith.addf %27, %33 : vector<18x64xf32>
    %c4 = arith.constant 4 : index
    %c0_35 = arith.constant 0 : index
    %c0_36 = arith.constant 0 : index
    %35 = vector.load %arg4[%c4, %c0_35, %c0_36] : memref<16x18x128xf32, #tpu.memory_space<vmem>>, vector<1x18x128xf32>
    %36 = vector.shape_cast %35 : vector<1x18x128xf32> to vector<18x128xf32>
    %cst_37 = arith.constant dense<0.000000e+00> : vector<18x32xf32>
    %37 = tpu.matmul %36, %7, %cst_37 {dimension_numbers = #tpu.dot_dimension_numbers<[1], [0], [0], [1], [0, 0, 1, 1], [], []>} : vector<18x128xf32>, vector<128x32xf32>, vector<18x32xf32> -> vector<18x32xf32>
    %c4_38 = arith.constant 4 : index
    %c0_39 = arith.constant 0 : index
    %c0_40 = arith.constant 0 : index
    %38 = vector.load %arg5[%c4_38, %c0_39, %c0_40] : memref<16x32x64xf32, #tpu.memory_space<vmem>>, vector<1x32x64xf32>
    %39 = vector.shape_cast %38 : vector<1x32x64xf32> to vector<32x64xf32>
    %cst_41 = arith.constant dense<0.000000e+00> : vector<18x64xf32>
    %40 = tpu.matmul %37, %39, %cst_41 {dimension_numbers = #tpu.dot_dimension_numbers<[1], [0], [0], [1], [0, 0, 1, 1], [], []>} : vector<18x32xf32>, vector<32x64xf32>, vector<18x64xf32> -> vector<18x64xf32>
    %41 = arith.addf %34, %40 : vector<18x64xf32>
    %c5 = arith.constant 5 : index
    %c0_42 = arith.constant 0 : index
    %c0_43 = arith.constant 0 : index
    %42 = vector.load %arg4[%c5, %c0_42, %c0_43] : memref<16x18x128xf32, #tpu.memory_space<vmem>>, vector<1x18x128xf32>
    %43 = vector.shape_cast %42 : vector<1x18x128xf32> to vector<18x128xf32>
    %cst_44 = arith.constant dense<0.000000e+00> : vector<18x32xf32>
    %44 = tpu.matmul %43, %7, %cst_44 {dimension_numbers = #tpu.dot_dimension_numbers<[1], [0], [0], [1], [0, 0, 1, 1], [], []>} : vector<18x128xf32>, vector<128x32xf32>, vector<18x32xf32> -> vector<18x32xf32>
    %c5_45 = arith.constant 5 : index
    %c0_46 = arith.constant 0 : index
    %c0_47 = arith.constant 0 : index
    %45 = vector.load %arg5[%c5_45, %c0_46, %c0_47] : memref<16x32x64xf32, #tpu.memory_space<vmem>>, vector<1x32x64xf32>
    %46 = vector.shape_cast %45 : vector<1x32x64xf32> to vector<32x64xf32>
    %cst_48 = arith.constant dense<0.000000e+00> : vector<18x64xf32>
    %47 = tpu.matmul %44, %46, %cst_48 {dimension_numbers = #tpu.dot_dimension_numbers<[1], [0], [0], [1], [0, 0, 1, 1], [], []>} : vector<18x32xf32>, vector<32x64xf32>, vector<18x64xf32> -> vector<18x64xf32>
    %48 = arith.addf %41, %47 : vector<18x64xf32>
    %c6 = arith.constant 6 : index
    %c0_49 = arith.constant 0 : index
    %c0_50 = arith.constant 0 : index
    %49 = vector.load %arg4[%c6, %c0_49, %c0_50] : memref<16x18x128xf32, #tpu.memory_space<vmem>>, vector<1x18x128xf32>
    %50 = vector.shape_cast %49 : vector<1x18x128xf32> to vector<18x128xf32>
    %cst_51 = arith.constant dense<0.000000e+00> : vector<18x32xf32>
    %51 = tpu.matmul %50, %7, %cst_51 {dimension_numbers = #tpu.dot_dimension_numbers<[1], [0], [0], [1], [0, 0, 1, 1], [], []>} : vector<18x128xf32>, vector<128x32xf32>, vector<18x32xf32> -> vector<18x32xf32>
    %c6_52 = arith.constant 6 : index
    %c0_53 = arith.constant 0 : index
    %c0_54 = arith.constant 0 : index
    %52 = vector.load %arg5[%c6_52, %c0_53, %c0_54] : memref<16x32x64xf32, #tpu.memory_space<vmem>>, vector<1x32x64xf32>
    %53 = vector.shape_cast %52 : vector<1x32x64xf32> to vector<32x64xf32>
    %cst_55 = arith.constant dense<0.000000e+00> : vector<18x64xf32>
    %54 = tpu.matmul %51, %53, %cst_55 {dimension_numbers = #tpu.dot_dimension_numbers<[1], [0], [0], [1], [0, 0, 1, 1], [], []>} : vector<18x32xf32>, vector<32x64xf32>, vector<18x64xf32> -> vector<18x64xf32>
    %55 = arith.addf %48, %54 : vector<18x64xf32>
    %c7 = arith.constant 7 : index
    %c0_56 = arith.constant 0 : index
    %c0_57 = arith.constant 0 : index
    %56 = vector.load %arg4[%c7, %c0_56, %c0_57] : memref<16x18x128xf32, #tpu.memory_space<vmem>>, vector<1x18x128xf32>
    %57 = vector.shape_cast %56 : vector<1x18x128xf32> to vector<18x128xf32>
    %cst_58 = arith.constant dense<0.000000e+00> : vector<18x32xf32>
    %58 = tpu.matmul %57, %7, %cst_58 {dimension_numbers = #tpu.dot_dimension_numbers<[1], [0], [0], [1], [0, 0, 1, 1], [], []>} : vector<18x128xf32>, vector<128x32xf32>, vector<18x32xf32> -> vector<18x32xf32>
    %c7_59 = arith.constant 7 : index
    %c0_60 = arith.constant 0 : index
    %c0_61 = arith.constant 0 : index
    %59 = vector.load %arg5[%c7_59, %c0_60, %c0_61] : memref<16x32x64xf32, #tpu.memory_space<vmem>>, vector<1x32x64xf32>
    %60 = vector.shape_cast %59 : vector<1x32x64xf32> to vector<32x64xf32>
    %cst_62 = arith.constant dense<0.000000e+00> : vector<18x64xf32>
    %61 = tpu.matmul %58, %60, %cst_62 {dimension_numbers = #tpu.dot_dimension_numbers<[1], [0], [0], [1], [0, 0, 1, 1], [], []>} : vector<18x32xf32>, vector<32x64xf32>, vector<18x64xf32> -> vector<18x64xf32>
    %62 = arith.addf %55, %61 : vector<18x64xf32>
    %c8 = arith.constant 8 : index
    %c0_63 = arith.constant 0 : index
    %c0_64 = arith.constant 0 : index
    %63 = vector.load %arg4[%c8, %c0_63, %c0_64] : memref<16x18x128xf32, #tpu.memory_space<vmem>>, vector<1x18x128xf32>
    %64 = vector.shape_cast %63 : vector<1x18x128xf32> to vector<18x128xf32>
    %cst_65 = arith.constant dense<0.000000e+00> : vector<18x32xf32>
    %65 = tpu.matmul %64, %7, %cst_65 {dimension_numbers = #tpu.dot_dimension_numbers<[1], [0], [0], [1], [0, 0, 1, 1], [], []>} : vector<18x128xf32>, vector<128x32xf32>, vector<18x32xf32> -> vector<18x32xf32>
    %c8_66 = arith.constant 8 : index
    %c0_67 = arith.constant 0 : index
    %c0_68 = arith.constant 0 : index
    %66 = vector.load %arg5[%c8_66, %c0_67, %c0_68] : memref<16x32x64xf32, #tpu.memory_space<vmem>>, vector<1x32x64xf32>
    %67 = vector.shape_cast %66 : vector<1x32x64xf32> to vector<32x64xf32>
    %cst_69 = arith.constant dense<0.000000e+00> : vector<18x64xf32>
    %68 = tpu.matmul %65, %67, %cst_69 {dimension_numbers = #tpu.dot_dimension_numbers<[1], [0], [0], [1], [0, 0, 1, 1], [], []>} : vector<18x32xf32>, vector<32x64xf32>, vector<18x64xf32> -> vector<18x64xf32>
    %69 = arith.addf %62, %68 : vector<18x64xf32>
    %c9 = arith.constant 9 : index
    %c0_70 = arith.constant 0 : index
    %c0_71 = arith.constant 0 : index
    %70 = vector.load %arg4[%c9, %c0_70, %c0_71] : memref<16x18x128xf32, #tpu.memory_space<vmem>>, vector<1x18x128xf32>
    %71 = vector.shape_cast %70 : vector<1x18x128xf32> to vector<18x128xf32>
    %cst_72 = arith.constant dense<0.000000e+00> : vector<18x32xf32>
    %72 = tpu.matmul %71, %7, %cst_72 {dimension_numbers = #tpu.dot_dimension_numbers<[1], [0], [0], [1], [0, 0, 1, 1], [], []>} : vector<18x128xf32>, vector<128x32xf32>, vector<18x32xf32> -> vector<18x32xf32>
    %c9_73 = arith.constant 9 : index
    %c0_74 = arith.constant 0 : index
    %c0_75 = arith.constant 0 : index
    %73 = vector.load %arg5[%c9_73, %c0_74, %c0_75] : memref<16x32x64xf32, #tpu.memory_space<vmem>>, vector<1x32x64xf32>
    %74 = vector.shape_cast %73 : vector<1x32x64xf32> to vector<32x64xf32>
    %cst_76 = arith.constant dense<0.000000e+00> : vector<18x64xf32>
    %75 = tpu.matmul %72, %74, %cst_76 {dimension_numbers = #tpu.dot_dimension_numbers<[1], [0], [0], [1], [0, 0, 1, 1], [], []>} : vector<18x32xf32>, vector<32x64xf32>, vector<18x64xf32> -> vector<18x64xf32>
    %76 = arith.addf %69, %75 : vector<18x64xf32>
    %c10 = arith.constant 10 : index
    %c0_77 = arith.constant 0 : index
    %c0_78 = arith.constant 0 : index
    %77 = vector.load %arg4[%c10, %c0_77, %c0_78] : memref<16x18x128xf32, #tpu.memory_space<vmem>>, vector<1x18x128xf32>
    %78 = vector.shape_cast %77 : vector<1x18x128xf32> to vector<18x128xf32>
    %cst_79 = arith.constant dense<0.000000e+00> : vector<18x32xf32>
    %79 = tpu.matmul %78, %7, %cst_79 {dimension_numbers = #tpu.dot_dimension_numbers<[1], [0], [0], [1], [0, 0, 1, 1], [], []>} : vector<18x128xf32>, vector<128x32xf32>, vector<18x32xf32> -> vector<18x32xf32>
    %c10_80 = arith.constant 10 : index
    %c0_81 = arith.constant 0 : index
    %c0_82 = arith.constant 0 : index
    %80 = vector.load %arg5[%c10_80, %c0_81, %c0_82] : memref<16x32x64xf32, #tpu.memory_space<vmem>>, vector<1x32x64xf32>
    %81 = vector.shape_cast %80 : vector<1x32x64xf32> to vector<32x64xf32>
    %cst_83 = arith.constant dense<0.000000e+00> : vector<18x64xf32>
    %82 = tpu.matmul %79, %81, %cst_83 {dimension_numbers = #tpu.dot_dimension_numbers<[1], [0], [0], [1], [0, 0, 1, 1], [], []>} : vector<18x32xf32>, vector<32x64xf32>, vector<18x64xf32> -> vector<18x64xf32>
    %83 = arith.addf %76, %82 : vector<18x64xf32>
    %c11 = arith.constant 11 : index
    %c0_84 = arith.constant 0 : index
    %c0_85 = arith.constant 0 : index
    %84 = vector.load %arg4[%c11, %c0_84, %c0_85] : memref<16x18x128xf32, #tpu.memory_space<vmem>>, vector<1x18x128xf32>
    %85 = vector.shape_cast %84 : vector<1x18x128xf32> to vector<18x128xf32>
    %cst_86 = arith.constant dense<0.000000e+00> : vector<18x32xf32>
    %86 = tpu.matmul %85, %7, %cst_86 {dimension_numbers = #tpu.dot_dimension_numbers<[1], [0], [0], [1], [0, 0, 1, 1], [], []>} : vector<18x128xf32>, vector<128x32xf32>, vector<18x32xf32> -> vector<18x32xf32>
    %c11_87 = arith.constant 11 : index
    %c0_88 = arith.constant 0 : index
    %c0_89 = arith.constant 0 : index
    %87 = vector.load %arg5[%c11_87, %c0_88, %c0_89] : memref<16x32x64xf32, #tpu.memory_space<vmem>>, vector<1x32x64xf32>
    %88 = vector.shape_cast %87 : vector<1x32x64xf32> to vector<32x64xf32>
    %cst_90 = arith.constant dense<0.000000e+00> : vector<18x64xf32>
    %89 = tpu.matmul %86, %88, %cst_90 {dimension_numbers = #tpu.dot_dimension_numbers<[1], [0], [0], [1], [0, 0, 1, 1], [], []>} : vector<18x32xf32>, vector<32x64xf32>, vector<18x64xf32> -> vector<18x64xf32>
    %90 = arith.addf %83, %89 : vector<18x64xf32>
    %c12 = arith.constant 12 : index
    %c0_91 = arith.constant 0 : index
    %c0_92 = arith.constant 0 : index
    %91 = vector.load %arg4[%c12, %c0_91, %c0_92] : memref<16x18x128xf32, #tpu.memory_space<vmem>>, vector<1x18x128xf32>
    %92 = vector.shape_cast %91 : vector<1x18x128xf32> to vector<18x128xf32>
    %cst_93 = arith.constant dense<0.000000e+00> : vector<18x32xf32>
    %93 = tpu.matmul %92, %7, %cst_93 {dimension_numbers = #tpu.dot_dimension_numbers<[1], [0], [0], [1], [0, 0, 1, 1], [], []>} : vector<18x128xf32>, vector<128x32xf32>, vector<18x32xf32> -> vector<18x32xf32>
    %c12_94 = arith.constant 12 : index
    %c0_95 = arith.constant 0 : index
    %c0_96 = arith.constant 0 : index
    %94 = vector.load %arg5[%c12_94, %c0_95, %c0_96] : memref<16x32x64xf32, #tpu.memory_space<vmem>>, vector<1x32x64xf32>
    %95 = vector.shape_cast %94 : vector<1x32x64xf32> to vector<32x64xf32>
    %cst_97 = arith.constant dense<0.000000e+00> : vector<18x64xf32>
    %96 = tpu.matmul %93, %95, %cst_97 {dimension_numbers = #tpu.dot_dimension_numbers<[1], [0], [0], [1], [0, 0, 1, 1], [], []>} : vector<18x32xf32>, vector<32x64xf32>, vector<18x64xf32> -> vector<18x64xf32>
    %97 = arith.addf %90, %96 : vector<18x64xf32>
    %c13 = arith.constant 13 : index
    %c0_98 = arith.constant 0 : index
    %c0_99 = arith.constant 0 : index
    %98 = vector.load %arg4[%c13, %c0_98, %c0_99] : memref<16x18x128xf32, #tpu.memory_space<vmem>>, vector<1x18x128xf32>
    %99 = vector.shape_cast %98 : vector<1x18x128xf32> to vector<18x128xf32>
    %cst_100 = arith.constant dense<0.000000e+00> : vector<18x32xf32>
    %100 = tpu.matmul %99, %7, %cst_100 {dimension_numbers = #tpu.dot_dimension_numbers<[1], [0], [0], [1], [0, 0, 1, 1], [], []>} : vector<18x128xf32>, vector<128x32xf32>, vector<18x32xf32> -> vector<18x32xf32>
    %c13_101 = arith.constant 13 : index
    %c0_102 = arith.constant 0 : index
    %c0_103 = arith.constant 0 : index
    %101 = vector.load %arg5[%c13_101, %c0_102, %c0_103] : memref<16x32x64xf32, #tpu.memory_space<vmem>>, vector<1x32x64xf32>
    %102 = vector.shape_cast %101 : vector<1x32x64xf32> to vector<32x64xf32>
    %cst_104 = arith.constant dense<0.000000e+00> : vector<18x64xf32>
    %103 = tpu.matmul %100, %102, %cst_104 {dimension_numbers = #tpu.dot_dimension_numbers<[1], [0], [0], [1], [0, 0, 1, 1], [], []>} : vector<18x32xf32>, vector<32x64xf32>, vector<18x64xf32> -> vector<18x64xf32>
    %104 = arith.addf %97, %103 : vector<18x64xf32>
    %c14 = arith.constant 14 : index
    %c0_105 = arith.constant 0 : index
    %c0_106 = arith.constant 0 : index
    %105 = vector.load %arg4[%c14, %c0_105, %c0_106] : memref<16x18x128xf32, #tpu.memory_space<vmem>>, vector<1x18x128xf32>
    %106 = vector.shape_cast %105 : vector<1x18x128xf32> to vector<18x128xf32>
    %cst_107 = arith.constant dense<0.000000e+00> : vector<18x32xf32>
    %107 = tpu.matmul %106, %7, %cst_107 {dimension_numbers = #tpu.dot_dimension_numbers<[1], [0], [0], [1], [0, 0, 1, 1], [], []>} : vector<18x128xf32>, vector<128x32xf32>, vector<18x32xf32> -> vector<18x32xf32>
    %c14_108 = arith.constant 14 : index
    %c0_109 = arith.constant 0 : index
    %c0_110 = arith.constant 0 : index
    %108 = vector.load %arg5[%c14_108, %c0_109, %c0_110] : memref<16x32x64xf32, #tpu.memory_space<vmem>>, vector<1x32x64xf32>
    %109 = vector.shape_cast %108 : vector<1x32x64xf32> to vector<32x64xf32>
    %cst_111 = arith.constant dense<0.000000e+00> : vector<18x64xf32>
    %110 = tpu.matmul %107, %109, %cst_111 {dimension_numbers = #tpu.dot_dimension_numbers<[1], [0], [0], [1], [0, 0, 1, 1], [], []>} : vector<18x32xf32>, vector<32x64xf32>, vector<18x64xf32> -> vector<18x64xf32>
    %111 = arith.addf %104, %110 : vector<18x64xf32>
    %c15 = arith.constant 15 : index
    %c0_112 = arith.constant 0 : index
    %c0_113 = arith.constant 0 : index
    %112 = vector.load %arg4[%c15, %c0_112, %c0_113] : memref<16x18x128xf32, #tpu.memory_space<vmem>>, vector<1x18x128xf32>
    %113 = vector.shape_cast %112 : vector<1x18x128xf32> to vector<18x128xf32>
    %cst_114 = arith.constant dense<0.000000e+00> : vector<18x32xf32>
    %114 = tpu.matmul %113, %7, %cst_114 {dimension_numbers = #tpu.dot_dimension_numbers<[1], [0], [0], [1], [0, 0, 1, 1], [], []>} : vector<18x128xf32>, vector<128x32xf32>, vector<18x32xf32> -> vector<18x32xf32>
    %c15_115 = arith.constant 15 : index
    %c0_116 = arith.constant 0 : index
    %c0_117 = arith.constant 0 : index
    %115 = vector.load %arg5[%c15_115, %c0_116, %c0_117] : memref<16x32x64xf32, #tpu.memory_space<vmem>>, vector<1x32x64xf32>
    %116 = vector.shape_cast %115 : vector<1x32x64xf32> to vector<32x64xf32>
    %cst_118 = arith.constant dense<0.000000e+00> : vector<18x64xf32>
    %117 = tpu.matmul %114, %116, %cst_118 {dimension_numbers = #tpu.dot_dimension_numbers<[1], [0], [0], [1], [0, 0, 1, 1], [], []>} : vector<18x32xf32>, vector<32x64xf32>, vector<18x64xf32> -> vector<18x64xf32>
    %118 = arith.addf %111, %117 : vector<18x64xf32>
    %c0_119 = arith.constant 0 : index
    %c0_120 = arith.constant 0 : index
    %119 = vector.load %arg6[%c0_119, %c0_120] : memref<1x64xf32, #tpu.memory_space<vmem>>, vector<1x64xf32>
    %120 = vector.broadcast %119 : vector<1x64xf32> to vector<18x64xf32>
    %121 = arith.addf %118, %120 : vector<18x64xf32>
    %cst_121 = arith.constant 0.000000e+00 : f32
    %122 = vector.broadcast %cst_121 : f32 to vector<18x64xf32>
    %123 = arith.maximumf %121, %122 : vector<18x64xf32>
    %c0_122 = arith.constant 0 : index
    %c0_123 = arith.constant 0 : index
    %c0_124 = arith.constant 0 : index
    %124 = vector.load %arg7[%c0_122, %c0_123, %c0_124] : memref<9x2x18xf32, #tpu.memory_space<vmem>>, vector<1x2x18xf32>
    %125 = vector.shape_cast %124 : vector<1x2x18xf32> to vector<2x18xf32>
    %cst_125 = arith.constant dense<0.000000e+00> : vector<2x64xf32>
    %126 = tpu.matmul %125, %123, %cst_125 {dimension_numbers = #tpu.dot_dimension_numbers<[1], [0], [0], [1], [0, 0, 1, 1], [], []>} : vector<2x18xf32>, vector<18x64xf32>, vector<2x64xf32> -> vector<2x64xf32>
    %c0_126 = arith.constant 0 : index
    %c0_127 = arith.constant 0 : index
    %c0_128 = arith.constant 0 : index
    %127 = vector.load %arg8[%c0_126, %c0_127, %c0_128] : memref<9x64x64xf32, #tpu.memory_space<vmem>>, vector<1x64x64xf32>
    %128 = vector.shape_cast %127 : vector<1x64x64xf32> to vector<64x64xf32>
    %cst_129 = arith.constant dense<0.000000e+00> : vector<2x64xf32>
    %129 = tpu.matmul %126, %128, %cst_129 {dimension_numbers = #tpu.dot_dimension_numbers<[1], [0], [0], [1], [0, 0, 1, 1], [], []>} : vector<2x64xf32>, vector<64x64xf32>, vector<2x64xf32> -> vector<2x64xf32>
    %c1_130 = arith.constant 1 : index
    %c0_131 = arith.constant 0 : index
    %c0_132 = arith.constant 0 : index
    %130 = vector.load %arg7[%c1_130, %c0_131, %c0_132] : memref<9x2x18xf32, #tpu.memory_space<vmem>>, vector<1x2x18xf32>
    %131 = vector.shape_cast %130 : vector<1x2x18xf32> to vector<2x18xf32>
    %cst_133 = arith.constant dense<0.000000e+00> : vector<2x64xf32>
    %132 = tpu.matmul %131, %123, %cst_133 {dimension_numbers = #tpu.dot_dimension_numbers<[1], [0], [0], [1], [0, 0, 1, 1], [], []>} : vector<2x18xf32>, vector<18x64xf32>, vector<2x64xf32> -> vector<2x64xf32>
    %c1_134 = arith.constant 1 : index
    %c0_135 = arith.constant 0 : index
    %c0_136 = arith.constant 0 : index
    %133 = vector.load %arg8[%c1_134, %c0_135, %c0_136] : memref<9x64x64xf32, #tpu.memory_space<vmem>>, vector<1x64x64xf32>
    %134 = vector.shape_cast %133 : vector<1x64x64xf32> to vector<64x64xf32>
    %cst_137 = arith.constant dense<0.000000e+00> : vector<2x64xf32>
    %135 = tpu.matmul %132, %134, %cst_137 {dimension_numbers = #tpu.dot_dimension_numbers<[1], [0], [0], [1], [0, 0, 1, 1], [], []>} : vector<2x64xf32>, vector<64x64xf32>, vector<2x64xf32> -> vector<2x64xf32>
    %136 = arith.addf %129, %135 : vector<2x64xf32>
    %c2_138 = arith.constant 2 : index
    %c0_139 = arith.constant 0 : index
    %c0_140 = arith.constant 0 : index
    %137 = vector.load %arg7[%c2_138, %c0_139, %c0_140] : memref<9x2x18xf32, #tpu.memory_space<vmem>>, vector<1x2x18xf32>
    %138 = vector.shape_cast %137 : vector<1x2x18xf32> to vector<2x18xf32>
    %cst_141 = arith.constant dense<0.000000e+00> : vector<2x64xf32>
    %139 = tpu.matmul %138, %123, %cst_141 {dimension_numbers = #tpu.dot_dimension_numbers<[1], [0], [0], [1], [0, 0, 1, 1], [], []>} : vector<2x18xf32>, vector<18x64xf32>, vector<2x64xf32> -> vector<2x64xf32>
    %c2_142 = arith.constant 2 : index
    %c0_143 = arith.constant 0 : index
    %c0_144 = arith.constant 0 : index
    %140 = vector.load %arg8[%c2_142, %c0_143, %c0_144] : memref<9x64x64xf32, #tpu.memory_space<vmem>>, vector<1x64x64xf32>
    %141 = vector.shape_cast %140 : vector<1x64x64xf32> to vector<64x64xf32>
    %cst_145 = arith.constant dense<0.000000e+00> : vector<2x64xf32>
    %142 = tpu.matmul %139, %141, %cst_145 {dimension_numbers = #tpu.dot_dimension_numbers<[1], [0], [0], [1], [0, 0, 1, 1], [], []>} : vector<2x64xf32>, vector<64x64xf32>, vector<2x64xf32> -> vector<2x64xf32>
    %143 = arith.addf %136, %142 : vector<2x64xf32>
    %c3_146 = arith.constant 3 : index
    %c0_147 = arith.constant 0 : index
    %c0_148 = arith.constant 0 : index
    %144 = vector.load %arg7[%c3_146, %c0_147, %c0_148] : memref<9x2x18xf32, #tpu.memory_space<vmem>>, vector<1x2x18xf32>
    %145 = vector.shape_cast %144 : vector<1x2x18xf32> to vector<2x18xf32>
    %cst_149 = arith.constant dense<0.000000e+00> : vector<2x64xf32>
    %146 = tpu.matmul %145, %123, %cst_149 {dimension_numbers = #tpu.dot_dimension_numbers<[1], [0], [0], [1], [0, 0, 1, 1], [], []>} : vector<2x18xf32>, vector<18x64xf32>, vector<2x64xf32> -> vector<2x64xf32>
    %c3_150 = arith.constant 3 : index
    %c0_151 = arith.constant 0 : index
    %c0_152 = arith.constant 0 : index
    %147 = vector.load %arg8[%c3_150, %c0_151, %c0_152] : memref<9x64x64xf32, #tpu.memory_space<vmem>>, vector<1x64x64xf32>
    %148 = vector.shape_cast %147 : vector<1x64x64xf32> to vector<64x64xf32>
    %cst_153 = arith.constant dense<0.000000e+00> : vector<2x64xf32>
    %149 = tpu.matmul %146, %148, %cst_153 {dimension_numbers = #tpu.dot_dimension_numbers<[1], [0], [0], [1], [0, 0, 1, 1], [], []>} : vector<2x64xf32>, vector<64x64xf32>, vector<2x64xf32> -> vector<2x64xf32>
    %150 = arith.addf %143, %149 : vector<2x64xf32>
    %c4_154 = arith.constant 4 : index
    %c0_155 = arith.constant 0 : index
    %c0_156 = arith.constant 0 : index
    %151 = vector.load %arg7[%c4_154, %c0_155, %c0_156] : memref<9x2x18xf32, #tpu.memory_space<vmem>>, vector<1x2x18xf32>
    %152 = vector.shape_cast %151 : vector<1x2x18xf32> to vector<2x18xf32>
    %cst_157 = arith.constant dense<0.000000e+00> : vector<2x64xf32>
    %153 = tpu.matmul %152, %123, %cst_157 {dimension_numbers = #tpu.dot_dimension_numbers<[1], [0], [0], [1], [0, 0, 1, 1], [], []>} : vector<2x18xf32>, vector<18x64xf32>, vector<2x64xf32> -> vector<2x64xf32>
    %c4_158 = arith.constant 4 : index
    %c0_159 = arith.constant 0 : index
    %c0_160 = arith.constant 0 : index
    %154 = vector.load %arg8[%c4_158, %c0_159, %c0_160] : memref<9x64x64xf32, #tpu.memory_space<vmem>>, vector<1x64x64xf32>
    %155 = vector.shape_cast %154 : vector<1x64x64xf32> to vector<64x64xf32>
    %cst_161 = arith.constant dense<0.000000e+00> : vector<2x64xf32>
    %156 = tpu.matmul %153, %155, %cst_161 {dimension_numbers = #tpu.dot_dimension_numbers<[1], [0], [0], [1], [0, 0, 1, 1], [], []>} : vector<2x64xf32>, vector<64x64xf32>, vector<2x64xf32> -> vector<2x64xf32>
    %157 = arith.addf %150, %156 : vector<2x64xf32>
    %c5_162 = arith.constant 5 : index
    %c0_163 = arith.constant 0 : index
    %c0_164 = arith.constant 0 : index
    %158 = vector.load %arg7[%c5_162, %c0_163, %c0_164] : memref<9x2x18xf32, #tpu.memory_space<vmem>>, vector<1x2x18xf32>
    %159 = vector.shape_cast %158 : vector<1x2x18xf32> to vector<2x18xf32>
    %cst_165 = arith.constant dense<0.000000e+00> : vector<2x64xf32>
    %160 = tpu.matmul %159, %123, %cst_165 {dimension_numbers = #tpu.dot_dimension_numbers<[1], [0], [0], [1], [0, 0, 1, 1], [], []>} : vector<2x18xf32>, vector<18x64xf32>, vector<2x64xf32> -> vector<2x64xf32>
    %c5_166 = arith.constant 5 : index
    %c0_167 = arith.constant 0 : index
    %c0_168 = arith.constant 0 : index
    %161 = vector.load %arg8[%c5_166, %c0_167, %c0_168] : memref<9x64x64xf32, #tpu.memory_space<vmem>>, vector<1x64x64xf32>
    %162 = vector.shape_cast %161 : vector<1x64x64xf32> to vector<64x64xf32>
    %cst_169 = arith.constant dense<0.000000e+00> : vector<2x64xf32>
    %163 = tpu.matmul %160, %162, %cst_169 {dimension_numbers = #tpu.dot_dimension_numbers<[1], [0], [0], [1], [0, 0, 1, 1], [], []>} : vector<2x64xf32>, vector<64x64xf32>, vector<2x64xf32> -> vector<2x64xf32>
    %164 = arith.addf %157, %163 : vector<2x64xf32>
    %c6_170 = arith.constant 6 : index
    %c0_171 = arith.constant 0 : index
    %c0_172 = arith.constant 0 : index
    %165 = vector.load %arg7[%c6_170, %c0_171, %c0_172] : memref<9x2x18xf32, #tpu.memory_space<vmem>>, vector<1x2x18xf32>
    %166 = vector.shape_cast %165 : vector<1x2x18xf32> to vector<2x18xf32>
    %cst_173 = arith.constant dense<0.000000e+00> : vector<2x64xf32>
    %167 = tpu.matmul %166, %123, %cst_173 {dimension_numbers = #tpu.dot_dimension_numbers<[1], [0], [0], [1], [0, 0, 1, 1], [], []>} : vector<2x18xf32>, vector<18x64xf32>, vector<2x64xf32> -> vector<2x64xf32>
    %c6_174 = arith.constant 6 : index
    %c0_175 = arith.constant 0 : index
    %c0_176 = arith.constant 0 : index
    %168 = vector.load %arg8[%c6_174, %c0_175, %c0_176] : memref<9x64x64xf32, #tpu.memory_space<vmem>>, vector<1x64x64xf32>
    %169 = vector.shape_cast %168 : vector<1x64x64xf32> to vector<64x64xf32>
    %cst_177 = arith.constant dense<0.000000e+00> : vector<2x64xf32>
    %170 = tpu.matmul %167, %169, %cst_177 {dimension_numbers = #tpu.dot_dimension_numbers<[1], [0], [0], [1], [0, 0, 1, 1], [], []>} : vector<2x64xf32>, vector<64x64xf32>, vector<2x64xf32> -> vector<2x64xf32>
    %171 = arith.addf %164, %170 : vector<2x64xf32>
    %c7_178 = arith.constant 7 : index
    %c0_179 = arith.constant 0 : index
    %c0_180 = arith.constant 0 : index
    %172 = vector.load %arg7[%c7_178, %c0_179, %c0_180] : memref<9x2x18xf32, #tpu.memory_space<vmem>>, vector<1x2x18xf32>
    %173 = vector.shape_cast %172 : vector<1x2x18xf32> to vector<2x18xf32>
    %cst_181 = arith.constant dense<0.000000e+00> : vector<2x64xf32>
    %174 = tpu.matmul %173, %123, %cst_181 {dimension_numbers = #tpu.dot_dimension_numbers<[1], [0], [0], [1], [0, 0, 1, 1], [], []>} : vector<2x18xf32>, vector<18x64xf32>, vector<2x64xf32> -> vector<2x64xf32>
    %c7_182 = arith.constant 7 : index
    %c0_183 = arith.constant 0 : index
    %c0_184 = arith.constant 0 : index
    %175 = vector.load %arg8[%c7_182, %c0_183, %c0_184] : memref<9x64x64xf32, #tpu.memory_space<vmem>>, vector<1x64x64xf32>
    %176 = vector.shape_cast %175 : vector<1x64x64xf32> to vector<64x64xf32>
    %cst_185 = arith.constant dense<0.000000e+00> : vector<2x64xf32>
    %177 = tpu.matmul %174, %176, %cst_185 {dimension_numbers = #tpu.dot_dimension_numbers<[1], [0], [0], [1], [0, 0, 1, 1], [], []>} : vector<2x64xf32>, vector<64x64xf32>, vector<2x64xf32> -> vector<2x64xf32>
    %178 = arith.addf %171, %177 : vector<2x64xf32>
    %c8_186 = arith.constant 8 : index
    %c0_187 = arith.constant 0 : index
    %c0_188 = arith.constant 0 : index
    %179 = vector.load %arg7[%c8_186, %c0_187, %c0_188] : memref<9x2x18xf32, #tpu.memory_space<vmem>>, vector<1x2x18xf32>
    %180 = vector.shape_cast %179 : vector<1x2x18xf32> to vector<2x18xf32>
    %cst_189 = arith.constant dense<0.000000e+00> : vector<2x64xf32>
    %181 = tpu.matmul %180, %123, %cst_189 {dimension_numbers = #tpu.dot_dimension_numbers<[1], [0], [0], [1], [0, 0, 1, 1], [], []>} : vector<2x18xf32>, vector<18x64xf32>, vector<2x64xf32> -> vector<2x64xf32>
    %c8_190 = arith.constant 8 : index
    %c0_191 = arith.constant 0 : index
    %c0_192 = arith.constant 0 : index
    %182 = vector.load %arg8[%c8_190, %c0_191, %c0_192] : memref<9x64x64xf32, #tpu.memory_space<vmem>>, vector<1x64x64xf32>
    %183 = vector.shape_cast %182 : vector<1x64x64xf32> to vector<64x64xf32>
    %cst_193 = arith.constant dense<0.000000e+00> : vector<2x64xf32>
    %184 = tpu.matmul %181, %183, %cst_193 {dimension_numbers = #tpu.dot_dimension_numbers<[1], [0], [0], [1], [0, 0, 1, 1], [], []>} : vector<2x64xf32>, vector<64x64xf32>, vector<2x64xf32> -> vector<2x64xf32>
    %185 = arith.addf %178, %184 : vector<2x64xf32>
    %c0_194 = arith.constant 0 : index
    %c0_195 = arith.constant 0 : index
    %186 = vector.load %arg9[%c0_194, %c0_195] : memref<1x64xf32, #tpu.memory_space<vmem>>, vector<1x64xf32>
    %187 = vector.broadcast %186 : vector<1x64xf32> to vector<2x64xf32>
    %188 = arith.addf %185, %187 : vector<2x64xf32>
    %cst_196 = arith.constant 0.000000e+00 : f32
    %189 = vector.broadcast %cst_196 : f32 to vector<2x64xf32>
    %190 = arith.maximumf %188, %189 : vector<2x64xf32>
    %c0_197 = arith.constant 0 : index
    %c0_198 = arith.constant 0 : index
    %c0_199 = arith.constant 0 : index
    %191 = vector.load %arg11[%c0_197, %c0_198, %c0_199] : memref<1x64x128xf32, #tpu.memory_space<vmem>>, vector<1x64x128xf32>
    %192 = vector.shape_cast %191 : vector<1x64x128xf32> to vector<64x128xf32>
    %cst_200 = arith.constant dense<0.000000e+00> : vector<2x128xf32>
    %193 = tpu.matmul %190, %192, %cst_200 {dimension_numbers = #tpu.dot_dimension_numbers<[1], [0], [0], [1], [0, 0, 1, 1], [], []>} : vector<2x64xf32>, vector<64x128xf32>, vector<2x128xf32> -> vector<2x128xf32>
    %c0_201 = arith.constant 0 : index
    %c0_202 = arith.constant 0 : index
    %194 = vector.load %arg1[%c0_201, %c0_202] : memref<2x3xf32, #tpu.memory_space<vmem>>, vector<2x3xf32>
    %c0_203 = arith.constant 0 : index
    %c0_204 = arith.constant 0 : index
    %195 = vector.load %arg12[%c0_203, %c0_204] : memref<3x128xf32, #tpu.memory_space<vmem>>, vector<3x128xf32>
    %cst_205 = arith.constant dense<0.000000e+00> : vector<2x128xf32>
    %196 = tpu.matmul %194, %195, %cst_205 {dimension_numbers = #tpu.dot_dimension_numbers<[1], [0], [0], [1], [0, 0, 1, 1], [], []>} : vector<2x3xf32>, vector<3x128xf32>, vector<2x128xf32> -> vector<2x128xf32>
    %197 = arith.addf %193, %196 : vector<2x128xf32>
    %c0_206 = arith.constant 0 : index
    %c0_207 = arith.constant 0 : index
    %198 = vector.load %arg13[%c0_206, %c0_207] : memref<1x128xf32, #tpu.memory_space<vmem>>, vector<1x128xf32>
    %199 = vector.broadcast %198 : vector<1x128xf32> to vector<2x128xf32>
    %200 = arith.addf %197, %199 : vector<2x128xf32>
    %cst_208 = arith.constant 0.000000e+00 : f32
    %201 = vector.broadcast %cst_208 : f32 to vector<2x128xf32>
    %202 = arith.maximumf %200, %201 : vector<2x128xf32>
    %c0_209 = arith.constant 0 : index
    %c0_210 = arith.constant 0 : index
    %203 = vector.load %arg14[%c0_209, %c0_210] : memref<2x128xf32, #tpu.memory_space<vmem>>, vector<2x128xf32>
    tpu.vector_store %arg14[%c0_209, %c0_210], %202 {strides = array<i32>} : memref<2x128xf32, #tpu.memory_space<vmem>>, vector<2x128xf32>,
    return
  }
}

</mosaic_0001>

<llo_original>
// kernel: _lambda_.1
$region0: #{_lambda_.1}
  #allocation0 [shape = 'u32[]', space=smem, size = 0x4, offset = 0x4, fixed_abs, tag = 'smem constant byte address 0x4 - core index']
  #allocation1 [shape = 'u32[144,128]{1,0:T(1,128)}', space=vmem, size = 0x12000, scoped, tag = 'internal scratch']
  %s0 = inlined_call_operand.vmem [shape: f32[128,256], index: 0, kind: input, shape index: {}]
  %s1 = inlined_call_operand.vmem [shape: f32[2,3], index: 1, kind: input, shape index: {}]
  %s2 = inlined_call_operand.vmem [shape: f32[256,32], index: 2, kind: input, shape index: {}]
  %s3 = inlined_call_operand.vmem [shape: f32[1,32], index: 3, kind: input, shape index: {}]
  %s4 = inlined_call_operand.vmem [shape: f32[16,18,128], index: 4, kind: input, shape index: {}]
  %s5 = inlined_call_operand.vmem [shape: f32[16,32,64], index: 5, kind: input, shape index: {}]
  %s6 = inlined_call_operand.vmem [shape: f32[1,64], index: 6, kind: input, shape index: {}]
  %s7 = inlined_call_operand.vmem [shape: f32[9,2,18], index: 7, kind: input, shape index: {}]
  %s8 = inlined_call_operand.vmem [shape: f32[9,64,64], index: 8, kind: input, shape index: {}]
  %s9 = inlined_call_operand.vmem [shape: f32[1,64], index: 9, kind: input, shape index: {}]
  %s10 = inlined_call_operand.vmem [shape: f32[1,2,2], index: 10, kind: input, shape index: {}]
  %s11 = inlined_call_operand.vmem [shape: f32[1,64,128], index: 11, kind: input, shape index: {}]
  %s12 = inlined_call_operand.vmem [shape: f32[3,128], index: 12, kind: input, shape index: {}]
  %s13 = inlined_call_operand.vmem [shape: f32[1,128], index: 13, kind: input, shape index: {}]
  %s14 = inlined_call_operand.hbm [shape: f32[2,128], index: 14, kind: output, shape index: {}]
  %s15 = sld [smem:[#allocation0]]
  $region66: #{_lambda_.1} parent=0
    _
  %s17 = ssub.s32 1, %s15
  %s18 = scalar_select 0, %s17, %s15
  $region1: #{_lambda_.1} parent=0
    #allocation2 [shape = 'u8[1024]{0}', space=vmem, size = 0x400, scoped, tag = 'output window, operand 0, single buffered']
    #allocation3 [shape = 's32[1]{0}', space=sflag, size = 0x4, scoped, tag = 'scoped memory for _lambda_.1']
    %19 = vsyncpa [#allocation3], 0
    // Predicated region
    $region2: #{_lambda_.1} parent=1 // pred_check
      _
    $region3: #{_lambda_.1} parent=1 // pred_check_branch
      %21 = sbr.rel (0) target = $region5
    $region4: #{_lambda_.1} parent=1 // pred_region
      _
    $region5: #{_lambda_.1} parent=1 // pred_fallthru
      _
    // Predicated region
    $region6: #{_lambda_.1} parent=1 // pred_check
      _
    $region7: #{_lambda_.1} parent=1 // pred_check_branch
      %23 = sbr.rel (0) target = $region9
    $region8: #{_lambda_.1} parent=1 // pred_region
      _
    $region9: #{_lambda_.1} parent=1 // pred_fallthru
      _
    // Predicated region
    $region10: #{_lambda_.1} parent=1 // pred_check
      _
    $region11: #{_lambda_.1} parent=1 // pred_check_branch
      %25 = sbr.rel (0) target = $region13
    $region12: #{_lambda_.1} parent=1 // pred_region
      _
    $region13: #{_lambda_.1} parent=1 // pred_fallthru
      _
    // Predicated region
    $region14: #{_lambda_.1} parent=1 // pred_check
      _
    $region15: #{_lambda_.1} parent=1 // pred_check_branch
      %27 = sbr.rel (0) target = $region17
    $region16: #{_lambda_.1} parent=1 // pred_region
      _
    $region17: #{_lambda_.1} parent=1 // pred_fallthru
      _
    // Predicated region
    $region18: #{_lambda_.1} parent=1 // pred_check
      _
    $region19: #{_lambda_.1} parent=1 // pred_check_branch
      %29 = sbr.rel (0) target = $region21
    $region20: #{_lambda_.1} parent=1 // pred_region
      _
    $region21: #{_lambda_.1} parent=1 // pred_fallthru
      _
    // Predicated region
    $region22: #{_lambda_.1} parent=1 // pred_check
      _
    $region23: #{_lambda_.1} parent=1 // pred_check_branch
      %31 = sbr.rel (0) target = $region25
    $region24: #{_lambda_.1} parent=1 // pred_region
      _
    $region25: #{_lambda_.1} parent=1 // pred_fallthru
      _
    // Predicated region
    $region26: #{_lambda_.1} parent=1 // pred_check
      _
    $region27: #{_lambda_.1} parent=1 // pred_check_branch
      %33 = sbr.rel (0) target = $region29
    $region28: #{_lambda_.1} parent=1 // pred_region
      _
    $region29: #{_lambda_.1} parent=1 // pred_fallthru
      _
    // Predicated region
    $region30: #{_lambda_.1} parent=1 // pred_check
      _
    $region31: #{_lambda_.1} parent=1 // pred_check_branch
      %35 = sbr.rel (0) target = $region33
    $region32: #{_lambda_.1} parent=1 // pred_region
      _
    $region33: #{_lambda_.1} parent=1 // pred_fallthru
      _
    // Predicated region
    $region34: #{_lambda_.1} parent=1 // pred_check
      _
    $region35: #{_lambda_.1} parent=1 // pred_check_branch
      %37 = sbr.rel (0) target = $region37
    $region36: #{_lambda_.1} parent=1 // pred_region
      _
    $region37: #{_lambda_.1} parent=1 // pred_fallthru
      _
    // Predicated region
    $region38: #{_lambda_.1} parent=1 // pred_check
      _
    $region39: #{_lambda_.1} parent=1 // pred_check_branch
      %39 = sbr.rel (0) target = $region41
    $region40: #{_lambda_.1} parent=1 // pred_region
      _
    $region41: #{_lambda_.1} parent=1 // pred_fallthru
      _
    // Predicated region
    $region42: #{_lambda_.1} parent=1 // pred_check
      _
    $region43: #{_lambda_.1} parent=1 // pred_check_branch
      %41 = sbr.rel (0) target = $region45
    $region44: #{_lambda_.1} parent=1 // pred_region
      _
    $region45: #{_lambda_.1} parent=1 // pred_fallthru
      _
    // Predicated region
    $region46: #{_lambda_.1} parent=1 // pred_check
      _
    $region47: #{_lambda_.1} parent=1 // pred_check_branch
      %43 = sbr.rel (0) target = $region49
    $region48: #{_lambda_.1} parent=1 // pred_region
      _
    $region49: #{_lambda_.1} parent=1 // pred_fallthru
      _
    // Predicated region
    $region50: #{_lambda_.1} parent=1 // pred_check
      _
    $region51: #{_lambda_.1} parent=1 // pred_check_branch
      %45 = sbr.rel (0) target = $region53
    $region52: #{_lambda_.1} parent=1 // pred_region
      _
    $region53: #{_lambda_.1} parent=1 // pred_fallthru
      _
    // Predicated region
    $region54: #{_lambda_.1} parent=1 // pred_check
      _
    $region55: #{_lambda_.1} parent=1 // pred_check_branch
      %47 = sbr.rel (0) target = $region57
    $region56: #{_lambda_.1} parent=1 // pred_region
      _
    $region57: #{_lambda_.1} parent=1 // pred_fallthru
      _
    %v48 = vld [vmem:[%s0] sm:$0xff]
    %v49 = vld [vmem:[%s0 + $0x8] sm:$0xff]
    %v50 = vld [vmem:[%s0 + $0x10] sm:$0xff]
    %v51 = vld [vmem:[%s0 + $0x18] sm:$0xff]
    %v52 = vld [vmem:[%s0 + $0x20] sm:$0xff]
    %v53 = vld [vmem:[%s0 + $0x28] sm:$0xff]
    %v54 = vld [vmem:[%s0 + $0x30] sm:$0xff]
    %v55 = vld [vmem:[%s0 + $0x38] sm:$0xff]
    %v56 = vld [vmem:[%s0 + $0x40] sm:$0xff]
    %v57 = vld [vmem:[%s0 + $0x48] sm:$0xff]
    %v58 = vld [vmem:[%s0 + $0x50] sm:$0xff]
    %v59 = vld [vmem:[%s0 + $0x58] sm:$0xff]
    %v60 = vld [vmem:[%s0 + $0x60] sm:$0xff]
    %v61 = vld [vmem:[%s0 + $0x68] sm:$0xff]
    %v62 = vld [vmem:[%s0 + $0x70] sm:$0xff]
    %v63 = vld [vmem:[%s0 + $0x78] sm:$0xff]
    %v64 = vld [vmem:[%s0 + $0x80] sm:$0xff]
    %v65 = vld [vmem:[%s0 + $0x88] sm:$0xff]
    %v66 = vld [vmem:[%s0 + $0x90] sm:$0xff]
    %v67 = vld [vmem:[%s0 + $0x98] sm:$0xff]
    %v68 = vld [vmem:[%s0 + $0xa0] sm:$0xff]
    %v69 = vld [vmem:[%s0 + $0xa8] sm:$0xff]
    %v70 = vld [vmem:[%s0 + $0xb0] sm:$0xff]
    %v71 = vld [vmem:[%s0 + $0xb8] sm:$0xff]
    %v72 = vld [vmem:[%s0 + $0xc0] sm:$0xff]
    %v73 = vld [vmem:[%s0 + $0xc8] sm:$0xff]
    %v74 = vld [vmem:[%s0 + $0xd0] sm:$0xff]
    %v75 = vld [vmem:[%s0 + $0xd8] sm:$0xff]
    %v76 = vld [vmem:[%s0 + $0xe0] sm:$0xff]
    %v77 = vld [vmem:[%s0 + $0xe8] sm:$0xff]
    %v78 = vld [vmem:[%s0 + $0xf0] sm:$0xff]
    %v79 = vld [vmem:[%s0 + $0xf8] sm:$0xff]
    %v80 = vld [vmem:[%s2] sm:$0xff]
    %v81 = vld [vmem:[%s2 + $0x8] sm:$0xff]
    %v82 = vld [vmem:[%s2 + $0x10] sm:$0xff]
    %v83 = vld [vmem:[%s2 + $0x18] sm:$0xff]
    %v84 = vld [vmem:[%s2 + $0x20] sm:$0xff]
    %v85 = vld [vmem:[%s2 + $0x28] sm:$0xff]
    %v86 = vld [vmem:[%s2 + $0x30] sm:$0xff]
    %v87 = vld [vmem:[%s2 + $0x38] sm:$0xff]
    %v88 = vld [vmem:[%s2 + $0x40] sm:$0xff]
    %v89 = vld [vmem:[%s2 + $0x48] sm:$0xff]
    %v90 = vld [vmem:[%s2 + $0x50] sm:$0xff]
    %v91 = vld [vmem:[%s2 + $0x58] sm:$0xff]
    %v92 = vld [vmem:[%s2 + $0x60] sm:$0xff]
    %v93 = vld [vmem:[%s2 + $0x68] sm:$0xff]
    %v94 = vld [vmem:[%s2 + $0x70] sm:$0xff]
    %v95 = vld [vmem:[%s2 + $0x78] sm:$0xff]
    %v96 = vld [vmem:[%s2 + $0x80] sm:$0xff]
    %v97 = vld [vmem:[%s2 + $0x88] sm:$0xff]
    %v98 = vld [vmem:[%s2 + $0x90] sm:$0xff]
    %v99 = vld [vmem:[%s2 + $0x98] sm:$0xff]
    %v100 = vld [vmem:[%s2 + $0xa0] sm:$0xff]
    %v101 = vld [vmem:[%s2 + $0xa8] sm:$0xff]
    %v102 = vld [vmem:[%s2 + $0xb0] sm:$0xff]
    %v103 = vld [vmem:[%s2 + $0xb8] sm:$0xff]
    %v104 = vld [vmem:[%s2 + $0xc0] sm:$0xff]
    %v105 = vld [vmem:[%s2 + $0xc8] sm:$0xff]
    %v106 = vld [vmem:[%s2 + $0xd0] sm:$0xff]
    %v107 = vld [vmem:[%s2 + $0xd8] sm:$0xff]
    %v108 = vld [vmem:[%s2 + $0xe0] sm:$0xff]
    %v109 = vld [vmem:[%s2 + $0xe8] sm:$0xff]
    %v110 = vld [vmem:[%s2 + $0xf0] sm:$0xff]
    %v111 = vld [vmem:[%s2 + $0xf8] sm:$0xff]
    %v112 = vld [vmem:[%s3] sm:$0x1]
    %v114 = vlaneseq
    %v115 = vshrl.u32 %v114, 7
    %v116 = vsub.s32 0, %v115
    %v117 = vrot.slane %v112, %v116
    %119 = vmatprep.subr.mxu0 0.0
    %120 = vmatpush1.msra.mxu0 %v80
    %121 = vmatprep.subr.mxu0 0.0
    %122 = vmatpush1.msra.mxu0 %v81
    %123 = vmatprep.subr.mxu0 0.0
    %124 = vmatpush1.msra.mxu0 %v82
    %125 = vmatprep.subr.mxu0 0.0
    %126 = vmatpush1.msra.mxu0 %v83
    %127 = vmatprep.subr.mxu0 0.0
    %128 = vmatpush1.msra.mxu0 %v84
    %129 = vmatprep.subr.mxu0 0.0
    %130 = vmatpush1.msra.mxu0 %v85
    %131 = vmatprep.subr.mxu0 0.0
    %132 = vmatpush1.msra.mxu0 %v86
    %133 = vmatprep.subr.mxu0 0.0
    %134 = vmatpush1.msra.mxu0 %v87
    %135 = vmatprep.subr.mxu0 0.0
    %136 = vmatpush1.msra.mxu0 %v88
    %137 = vmatprep.subr.mxu0 0.0
    %138 = vmatpush1.msra.mxu0 %v89
    %139 = vmatprep.subr.mxu0 0.0
    %140 = vmatpush1.msra.mxu0 %v90
    %141 = vmatprep.subr.mxu0 0.0
    %142 = vmatpush1.msra.mxu0 %v91
    %143 = vmatprep.subr.mxu0 0.0
    %144 = vmatpush1.msra.mxu0 %v92
    %145 = vmatprep.subr.mxu0 0.0
    %146 = vmatpush1.msra.mxu0 %v93
    %147 = vmatprep.subr.mxu0 0.0
    %148 = vmatpush1.msra.mxu0 %v94
    %149 = vmatprep.subr.mxu0 0.0
    %150 = vmatpush1.msra.mxu0 %v95
    %151 = vmatprep.subr.mxu0 0.0
    %152 = vmatpush1.msra.mxu0 %v96
    %153 = vmatprep.subr.mxu0 0.0
    %154 = vmatpush1.msra.mxu0 %v97
    %155 = vmatprep.subr.mxu0 0.0
    %156 = vmatpush1.msra.mxu0 %v98
    %157 = vmatprep.subr.mxu0 0.0
    %158 = vmatpush1.msra.mxu0 %v99
    %159 = vmatprep.subr.mxu0 0.0
    %160 = vmatpush1.msra.mxu0 %v100
    %161 = vmatprep.subr.mxu0 0.0
    %162 = vmatpush1.msra.mxu0 %v101
    %163 = vmatprep.subr.mxu0 0.0
    %164 = vmatpush1.msra.mxu0 %v102
    %165 = vmatprep.subr.mxu0 0.0
    %166 = vmatpush1.msra.mxu0 %v103
    %167 = vmatprep.subr.mxu0 0.0
    %168 = vmatpush1.msra.mxu0 %v104
    %169 = vmatprep.subr.mxu0 0.0
    %170 = vmatpush1.msra.mxu0 %v105
    %171 = vmatprep.subr.mxu0 0.0
    %172 = vmatpush1.msra.mxu0 %v106
    %173 = vmatprep.subr.mxu0 0.0
    %174 = vmatpush1.msra.mxu0 %v107
    %175 = vmatprep.subr.mxu0 0.0
    %176 = vmatpush1.msra.mxu0 %v108
    %177 = vmatprep.subr.mxu0 0.0
    %178 = vmatpush1.msra.mxu0 %v109
    %179 = vmatprep.subr.mxu0 0.0
    %180 = vmatpush1.msra.mxu0 %v110
    %181 = vmatprep.subr.mxu0 0.0
    %182 = vmatpush1.msra.mxu0 %v111
    %183 = vmatprep.mubr.f32.mxu0 %v49
    %184 = vmatmul.mubr.f32.gmra.mrb[0].mxu0 %v48
    %v185 = vpop.f32.mrb[0].mxu0
    %v186 = vadd.f32 %v117, %v185
    %v187 = vpop.f32.mrb[0].mxu0
    %188 = vmatprep.mubr.f32.mxu0 %v51
    %189 = vmatmul.mubr.f32.gmra.mrb[0].mxu0 %v50
    %v190 = vpop.f32.mrb[0].mxu0
    %v191 = vadd.f32 %v117, %v190
    %v192 = vpop.f32.mrb[0].mxu0
    %193 = vmatprep.mubr.f32.mxu0 %v53
    %194 = vmatmul.mubr.f32.gmra.mrb[0].mxu0 %v52
    %v195 = vpop.f32.mrb[0].mxu0
    %v196 = vadd.f32 %v117, %v195
    %v197 = vpop.f32.mrb[0].mxu0
    %198 = vmatprep.mubr.f32.mxu0 %v55
    %199 = vmatmul.mubr.f32.gmra.mrb[0].mxu0 %v54
    %v200 = vpop.f32.mrb[0].mxu0
    %v201 = vadd.f32 %v117, %v200
    %v202 = vpop.f32.mrb[0].mxu0
    %203 = vmatprep.mubr.f32.mxu0 %v57
    %204 = vmatmul.mubr.f32.gmra.mrb[0].mxu0 %v56
    %v205 = vpop.f32.mrb[0].mxu0
    %v206 = vadd.f32 %v117, %v205
    %v207 = vpop.f32.mrb[0].mxu0
    %208 = vmatprep.mubr.f32.mxu0 %v59
    %209 = vmatmul.mubr.f32.gmra.mrb[0].mxu0 %v58
    %v210 = vpop.f32.mrb[0].mxu0
    %v211 = vadd.f32 %v117, %v210
    %v212 = vpop.f32.mrb[0].mxu0
    %213 = vmatprep.mubr.f32.mxu0 %v61
    %214 = vmatmul.mubr.f32.gmra.mrb[0].mxu0 %v60
    %v215 = vpop.f32.mrb[0].mxu0
    %v216 = vadd.f32 %v117, %v215
    %v217 = vpop.f32.mrb[0].mxu0
    %218 = vmatprep.mubr.f32.mxu0 %v63
    %219 = vmatmul.mubr.f32.gmra.mrb[0].mxu0 %v62
    %v220 = vpop.f32.mrb[0].mxu0
    %v221 = vadd.f32 %v117, %v220
    %v222 = vpop.f32.mrb[0].mxu0
    %223 = vmatprep.mubr.f32.mxu0 %v65
    %224 = vmatmul.mubr.f32.gmra.mrb[0].mxu0 %v64
    %v225 = vpop.f32.mrb[0].mxu0
    %v226 = vadd.f32 %v117, %v225
    %v227 = vpop.f32.mrb[0].mxu0
    %228 = vmatprep.mubr.f32.mxu0 %v67
    %229 = vmatmul.mubr.f32.gmra.mrb[0].mxu0 %v66
    %v230 = vpop.f32.mrb[0].mxu0
    %v231 = vadd.f32 %v117, %v230
    %v232 = vpop.f32.mrb[0].mxu0
    %233 = vmatprep.mubr.f32.mxu0 %v69
    %234 = vmatmul.mubr.f32.gmra.mrb[0].mxu0 %v68
    %v235 = vpop.f32.mrb[0].mxu0
    %v236 = vadd.f32 %v117, %v235
    %v237 = vpop.f32.mrb[0].mxu0
    %238 = vmatprep.mubr.f32.mxu0 %v71
    %239 = vmatmul.mubr.f32.gmra.mrb[0].mxu0 %v70
    %v240 = vpop.f32.mrb[0].mxu0
    %v241 = vadd.f32 %v117, %v240
    %v242 = vpop.f32.mrb[0].mxu0
    %243 = vmatprep.mubr.f32.mxu0 %v73
    %244 = vmatmul.mubr.f32.gmra.mrb[0].mxu0 %v72
    %v245 = vpop.f32.mrb[0].mxu0
    %v246 = vadd.f32 %v117, %v245
    %v247 = vpop.f32.mrb[0].mxu0
    %248 = vmatprep.mubr.f32.mxu0 %v75
    %249 = vmatmul.mubr.f32.gmra.mrb[0].mxu0 %v74
    %v250 = vpop.f32.mrb[0].mxu0
    %v251 = vadd.f32 %v117, %v250
    %v252 = vpop.f32.mrb[0].mxu0
    %253 = vmatprep.mubr.f32.mxu0 %v77
    %254 = vmatmul.mubr.f32.gmra.mrb[0].mxu0 %v76
    %v255 = vpop.f32.mrb[0].mxu0
    %v256 = vadd.f32 %v117, %v255
    %v257 = vpop.f32.mrb[0].mxu0
    %258 = vmatprep.mubr.f32.mxu0 %v79
    %259 = vmatmul.mubr.f32.gmra.mrb[0].mxu0 %v78
    %v260 = vpop.f32.mrb[0].mxu0
    %v261 = vadd.f32 %v117, %v260
    %v262 = vpop.f32.mrb[0].mxu0
    %263 = vdwg.mxu0
    %v264 = vmax.f32 %v186, 0.0
    %v265 = vmax.f32 %v191, 0.0
    %v266 = vmax.f32 %v196, 0.0
    %v267 = vmax.f32 %v201, 0.0
    %v268 = vmax.f32 %v206, 0.0
    %v269 = vmax.f32 %v211, 0.0
    %v270 = vmax.f32 %v216, 0.0
    %v271 = vmax.f32 %v221, 0.0
    %v272 = vmax.f32 %v226, 0.0
    %v273 = vmax.f32 %v231, 0.0
    %v274 = vmax.f32 %v236, 0.0
    %v275 = vmax.f32 %v241, 0.0
    %v276 = vmax.f32 %v246, 0.0
    %v277 = vmax.f32 %v251, 0.0
    %v278 = vmax.f32 %v256, 0.0
    %v279 = vmax.f32 %v261, 0.0
    %v280 = vld [vmem:[%s4] sm:$0xff]
    %v281 = vld [vmem:[%s4 + $0x8] sm:$0xff]
    %v282 = vld [vmem:[%s4 + $0x10] sm:$0x3]
    %283 = vmatprep.subr.mxu0 0.0
    %284 = vmatpush1.msra.mxu0 %v264
    %285 = vmatprep.subr.mxu0 0.0
    %286 = vmatpush1.msra.mxu0 %v265
    %287 = vmatprep.subr.mxu0 0.0
    %288 = vmatpush1.msra.mxu0 %v266
    %289 = vmatprep.subr.mxu0 0.0
    %290 = vmatpush1.msra.mxu0 %v267
    %291 = vmatprep.subr.mxu0 0.0
    %292 = vmatpush1.msra.mxu0 %v268
    %293 = vmatprep.subr.mxu0 0.0
    %294 = vmatpush1.msra.mxu0 %v269
    %295 = vmatprep.subr.mxu0 0.0
    %296 = vmatpush1.msra.mxu0 %v270
    %297 = vmatprep.subr.mxu0 0.0
    %298 = vmatpush1.msra.mxu0 %v271
    %299 = vmatprep.subr.mxu0 0.0
    %300 = vmatpush1.msra.mxu0 %v272
    %301 = vmatprep.subr.mxu0 0.0
    %302 = vmatpush1.msra.mxu0 %v273
    %303 = vmatprep.subr.mxu0 0.0
    %304 = vmatpush1.msra.mxu0 %v274
    %305 = vmatprep.subr.mxu0 0.0
    %306 = vmatpush1.msra.mxu0 %v275
    %307 = vmatprep.subr.mxu0 0.0
    %308 = vmatpush1.msra.mxu0 %v276
    %309 = vmatprep.subr.mxu0 0.0
    %310 = vmatpush1.msra.mxu0 %v277
    %311 = vmatprep.subr.mxu0 0.0
    %312 = vmatpush1.msra.mxu0 %v278
    %313 = vmatprep.subr.mxu0 0.0
    %314 = vmatpush1.msra.mxu0 %v279
    %315 = vmatprep.subr.mxu0 0.0
    %316 = vmatpush1.msra.mxu0 0.0
    %317 = vmatprep.subr.mxu0 0.0
    %318 = vmatpush1.msra.mxu0 0.0
    %319 = vmatprep.subr.mxu0 0.0
    %320 = vmatpush1.msra.mxu0 0.0
    %321 = vmatprep.subr.mxu0 0.0
    %322 = vmatpush1.msra.mxu0 0.0
    %323 = vmatprep.subr.mxu0 0.0
    %324 = vmatpush1.msra.mxu0 0.0
    %325 = vmatprep.subr.mxu0 0.0
    %326 = vmatpush1.msra.mxu0 0.0
    %327 = vmatprep.subr.mxu0 0.0
    %328 = vmatpush1.msra.mxu0 0.0
    %329 = vmatprep.subr.mxu0 0.0
    %330 = vmatpush1.msra.mxu0 0.0
    %331 = vmatprep.subr.mxu0 0.0
    %332 = vmatpush1.msra.mxu0 0.0
    %333 = vmatprep.subr.mxu0 0.0
    %334 = vmatpush1.msra.mxu0 0.0
    %335 = vmatprep.subr.mxu0 0.0
    %336 = vmatpush1.msra.mxu0 0.0
    %337 = vmatprep.subr.mxu0 0.0
    %338 = vmatpush1.msra.mxu0 0.0
    %339 = vmatprep.subr.mxu0 0.0
    %340 = vmatpush1.msra.mxu0 0.0
    %341 = vmatprep.subr.mxu0 0.0
    %342 = vmatpush1.msra.mxu0 0.0
    %343 = vmatprep.subr.mxu0 0.0
    %344 = vmatpush1.msra.mxu0 0.0
    %345 = vmatprep.subr.mxu0 0.0
    %346 = vmatpush1.msra.mxu0 0.0
    %347 = vmatprep.mubr.f32.mxu0 0.0
    %348 = vmatmul.mubr.f32.gmra.mrb[0].mxu0 %v280
    %v349 = vpop.f32.mrb[0].mxu0
    %v350 = vadd.f32 0.0, %v349
    %v351 = vpop.f32.mrb[0].mxu0
    %352 = vmatprep.mubr.f32.mxu0 0.0
    %353 = vmatmul.mubr.f32.gmra.mrb[0].mxu0 %v281
    %v354 = vpop.f32.mrb[0].mxu0
    %v355 = vadd.f32 0.0, %v354
    %v356 = vpop.f32.mrb[0].mxu0
    %357 = vmatprep.mubr.f32.mxu0 0.0
    %358 = vmatmul.mubr.f32.gmra.mrb[0].mxu0 %v282
    %v359 = vpop.f32.mrb[0].mxu0
    %v360 = vadd.f32 0.0, %v359
    %v361 = vpop.f32.mrb[0].mxu0
    %362 = vdwg.mxu0
    %v363 = vld [vmem:[%s5] sm:$0xff]
    %v364 = vld [vmem:[%s5 + $0x8] sm:$0xff]
    %v365 = vld [vmem:[%s5 + $0x10] sm:$0xff]
    %v366 = vld [vmem:[%s5 + $0x18] sm:$0xff]
    %s367 = scalar_lea.vmem %s4, 24
    %v368 = vld [vmem:[%s367] sm:$0xff]
    %v369 = vld [vmem:[%s367 + $0x8] sm:$0xff]
    %v370 = vld [vmem:[%s367 + $0x10] sm:$0x3]
    %371 = vmatprep.subr.mxu0 0.0
    %372 = vmatpush1.msra.mxu0 %v264
    %373 = vmatprep.subr.mxu0 0.0
    %374 = vmatpush1.msra.mxu0 %v265
    %375 = vmatprep.subr.mxu0 0.0
    %376 = vmatpush1.msra.mxu0 %v266
    %377 = vmatprep.subr.mxu0 0.0
    %378 = vmatpush1.msra.mxu0 %v267
    %379 = vmatprep.subr.mxu0 0.0
    %380 = vmatpush1.msra.mxu0 %v268
    %381 = vmatprep.subr.mxu0 0.0
    %382 = vmatpush1.msra.mxu0 %v269
    %383 = vmatprep.subr.mxu0 0.0
    %384 = vmatpush1.msra.mxu0 %v270
    %385 = vmatprep.subr.mxu0 0.0
    %386 = vmatpush1.msra.mxu0 %v271
    %387 = vmatprep.subr.mxu0 0.0
    %388 = vmatpush1.msra.mxu0 %v272
    %389 = vmatprep.subr.mxu0 0.0
    %390 = vmatpush1.msra.mxu0 %v273
    %391 = vmatprep.subr.mxu0 0.0
    %392 = vmatpush1.msra.mxu0 %v274
    %393 = vmatprep.subr.mxu0 0.0
    %394 = vmatpush1.msra.mxu0 %v275
    %395 = vmatprep.subr.mxu0 0.0
    %396 = vmatpush1.msra.mxu0 %v276
    %397 = vmatprep.subr.mxu0 0.0
    %398 = vmatpush1.msra.mxu0 %v277
    %399 = vmatprep.subr.mxu0 0.0
    %400 = vmatpush1.msra.mxu0 %v278
    %401 = vmatprep.subr.mxu0 0.0
    %402 = vmatpush1.msra.mxu0 %v279
    %403 = vmatprep.subr.mxu0 0.0
    %404 = vmatpush1.msra.mxu0 0.0
    %405 = vmatprep.subr.mxu0 0.0
    %406 = vmatpush1.msra.mxu0 0.0
    %407 = vmatprep.subr.mxu0 0.0
    %408 = vmatpush1.msra.mxu0 0.0
    %409 = vmatprep.subr.mxu0 0.0
    %410 = vmatpush1.msra.mxu0 0.0
    %411 = vmatprep.subr.mxu0 0.0
    %412 = vmatpush1.msra.mxu0 0.0
    %413 = vmatprep.subr.mxu0 0.0
    %414 = vmatpush1.msra.mxu0 0.0
    %415 = vmatprep.subr.mxu0 0.0
    %416 = vmatpush1.msra.mxu0 0.0
    %417 = vmatprep.subr.mxu0 0.0
    %418 = vmatpush1.msra.mxu0 0.0
    %419 = vmatprep.subr.mxu0 0.0
    %420 = vmatpush1.msra.mxu0 0.0
    %421 = vmatprep.subr.mxu0 0.0
    %422 = vmatpush1.msra.mxu0 0.0
    %423 = vmatprep.subr.mxu0 0.0
    %424 = vmatpush1.msra.mxu0 0.0
    %425 = vmatprep.subr.mxu0 0.0
    %426 = vmatpush1.msra.mxu0 0.0
    %427 = vmatprep.subr.mxu0 0.0
    %428 = vmatpush1.msra.mxu0 0.0
    %429 = vmatprep.subr.mxu0 0.0
    %430 = vmatpush1.msra.mxu0 0.0
    %431 = vmatprep.subr.mxu0 0.0
    %432 = vmatpush1.msra.mxu0 0.0
    %433 = vmatprep.subr.mxu0 0.0
    %434 = vmatpush1.msra.mxu0 0.0
    %435 = vmatprep.mubr.f32.mxu0 0.0
    %436 = vmatmul.mubr.f32.gmra.mrb[0].mxu0 %v368
    %v437 = vpop.f32.mrb[0].mxu0
    %v438 = vadd.f32 0.0, %v437
    %v439 = vpop.f32.mrb[0].mxu0
    %440 = vmatprep.mubr.f32.mxu0 0.0
    %441 = vmatmul.mubr.f32.gmra.mrb[0].mxu0 %v369
    %v442 = vpop.f32.mrb[0].mxu0
    %v443 = vadd.f32 0.0, %v442
    %v444 = vpop.f32.mrb[0].mxu0
    %445 = vmatprep.mubr.f32.mxu0 0.0
    %446 = vmatmul.mubr.f32.gmra.mrb[0].mxu0 %v370
    %v447 = vpop.f32.mrb[0].mxu0
    %v448 = vadd.f32 0.0, %v447
    %v449 = vpop.f32.mrb[0].mxu0
    %450 = vdwg.mxu0
    %s451 = scalar_lea.vmem %s5, 32
    %v452 = vld [vmem:[%s451] sm:$0xff]
    %v453 = vld [vmem:[%s451 + $0x8] sm:$0xff]
    %v454 = vld [vmem:[%s451 + $0x10] sm:$0xff]
    %v455 = vld [vmem:[%s451 + $0x18] sm:$0xff]
    %vm456 = vcmask 261120
    %v458 = vsel %vm456, %v438, 0
    %v461 = vsel %vm456, %v443, 0
    %v464 = vsel %vm456, %v448, 0
    %466 = vmatprep.subr.mxu0 0.0
    %467 = vmatpush1.msra.mxu0 %v452
    %468 = vmatprep.subr.mxu0 0.0
    %469 = vmatpush1.msra.mxu0 %v453
    %470 = vmatprep.subr.mxu0 0.0
    %471 = vmatpush1.msra.mxu0 %v454
    %472 = vmatprep.subr.mxu0 0.0
    %473 = vmatpush1.msra.mxu0 %v455
    %474 = vmatprep.subr.mxu0 0.0
    %475 = vmatpush1.msra.mxu0 0.0
    %476 = vmatprep.subr.mxu0 0.0
    %477 = vmatpush1.msra.mxu0 0.0
    %478 = vmatprep.subr.mxu0 0.0
    %479 = vmatpush1.msra.mxu0 0.0
    %480 = vmatprep.subr.mxu0 0.0
    %481 = vmatpush1.msra.mxu0 0.0
    %482 = vmatprep.subr.mxu0 0.0
    %483 = vmatpush1.msra.mxu0 0.0
    %484 = vmatprep.subr.mxu0 0.0
    %485 = vmatpush1.msra.mxu0 0.0
    %486 = vmatprep.subr.mxu0 0.0
    %487 = vmatpush1.msra.mxu0 0.0
    %488 = vmatprep.subr.mxu0 0.0
    %489 = vmatpush1.msra.mxu0 0.0
    %490 = vmatprep.subr.mxu0 0.0
    %491 = vmatpush1.msra.mxu0 0.0
    %492 = vmatprep.subr.mxu0 0.0
    %493 = vmatpush1.msra.mxu0 0.0
    %494 = vmatprep.subr.mxu0 0.0
    %495 = vmatpush1.msra.mxu0 0.0
    %496 = vmatprep.subr.mxu0 0.0
    %497 = vmatpush1.msra.mxu0 0.0
    %498 = vmatprep.subr.mxu0 0.0
    %499 = vmatpush1.msra.mxu0 0.0
    %500 = vmatprep.subr.mxu0 0.0
    %501 = vmatpush1.msra.mxu0 0.0
    %502 = vmatprep.subr.mxu0 0.0
    %503 = vmatpush1.msra.mxu0 0.0
    %504 = vmatprep.subr.mxu0 0.0
    %505 = vmatpush1.msra.mxu0 0.0
    %506 = vmatprep.subr.mxu0 0.0
    %507 = vmatpush1.msra.mxu0 0.0
    %508 = vmatprep.subr.mxu0 0.0
    %509 = vmatpush1.msra.mxu0 0.0
    %510 = vmatprep.subr.mxu0 0.0
    %511 = vmatpush1.msra.mxu0 0.0
    %512 = vmatprep.subr.mxu0 0.0
    %513 = vmatpush1.msra.mxu0 0.0
    %514 = vmatprep.subr.mxu0 0.0
    %515 = vmatpush1.msra.mxu0 0.0
    %516 = vmatprep.subr.mxu0 0.0
    %517 = vmatpush1.msra.mxu0 0.0
    %518 = vmatprep.subr.mxu0 0.0
    %519 = vmatpush1.msra.mxu0 0.0
    %520 = vmatprep.subr.mxu0 0.0
    %521 = vmatpush1.msra.mxu0 0.0
    %522 = vmatprep.subr.mxu0 0.0
    %523 = vmatpush1.msra.mxu0 0.0
    %524 = vmatprep.subr.mxu0 0.0
    %525 = vmatpush1.msra.mxu0 0.0
    %526 = vmatprep.subr.mxu0 0.0
    %527 = vmatpush1.msra.mxu0 0.0
    %528 = vmatprep.subr.mxu0 0.0
    %529 = vmatpush1.msra.mxu0 0.0
    %530 = vmatprep.mubr.f32.mxu0 0.0
    %531 = vmatmul.mubr.f32.gmra.mrb[0].mxu0 %v458
    %v532 = vpop.f32.mrb[0].mxu0
    %v533 = vadd.f32 0.0, %v532
    %v534 = vpop.f32.mrb[0].mxu0
    %535 = vmatprep.mubr.f32.mxu0 0.0
    %536 = vmatmul.mubr.f32.gmra.mrb[0].mxu0 %v461
    %v537 = vpop.f32.mrb[0].mxu0
    %v538 = vadd.f32 0.0, %v537
    %v539 = vpop.f32.mrb[0].mxu0
    %540 = vmatprep.mubr.f32.mxu0 0.0
    %541 = vmatmul.mubr.f32.gmra.mrb[0].mxu0 %v464
    %v542 = vpop.f32.mrb[0].mxu0
    %v543 = vadd.f32 0.0, %v542
    %v544 = vpop.f32.mrb[0].mxu0
    %545 = vdwg.mxu0
    %v547 = vsel %vm456, %v350, 0
    %v550 = vsel %vm456, %v355, 0
    %v553 = vsel %vm456, %v360, 0
    %555 = vmatprep.subr.mxu0 0.0
    %556 = vmatpush1.msra.mxu0 %v363
    %557 = vmatprep.subr.mxu0 0.0
    %558 = vmatpush1.msra.mxu0 %v364
    %559 = vmatprep.subr.mxu0 0.0
    %560 = vmatpush1.msra.mxu0 %v365
    %561 = vmatprep.subr.mxu0 0.0
    %562 = vmatpush1.msra.mxu0 %v366
    %563 = vmatprep.subr.mxu0 0.0
    %564 = vmatpush1.msra.mxu0 0.0
    %565 = vmatprep.subr.mxu0 0.0
    %566 = vmatpush1.msra.mxu0 0.0
    %567 = vmatprep.subr.mxu0 0.0
    %568 = vmatpush1.msra.mxu0 0.0
    %569 = vmatprep.subr.mxu0 0.0
    %570 = vmatpush1.msra.mxu0 0.0
    %571 = vmatprep.subr.mxu0 0.0
    %572 = vmatpush1.msra.mxu0 0.0
    %573 = vmatprep.subr.mxu0 0.0
    %574 = vmatpush1.msra.mxu0 0.0
    %575 = vmatprep.subr.mxu0 0.0
    %576 = vmatpush1.msra.mxu0 0.0
    %577 = vmatprep.subr.mxu0 0.0
    %578 = vmatpush1.msra.mxu0 0.0
    %579 = vmatprep.subr.mxu0 0.0
    %580 = vmatpush1.msra.mxu0 0.0
    %581 = vmatprep.subr.mxu0 0.0
    %582 = vmatpush1.msra.mxu0 0.0
    %583 = vmatprep.subr.mxu0 0.0
    %584 = vmatpush1.msra.mxu0 0.0
    %585 = vmatprep.subr.mxu0 0.0
    %586 = vmatpush1.msra.mxu0 0.0
    %587 = vmatprep.subr.mxu0 0.0
    %588 = vmatpush1.msra.mxu0 0.0
    %589 = vmatprep.subr.mxu0 0.0
    %590 = vmatpush1.msra.mxu0 0.0
    %591 = vmatprep.subr.mxu0 0.0
    %592 = vmatpush1.msra.mxu0 0.0
    %593 = vmatprep.subr.mxu0 0.0
    %594 = vmatpush1.msra.mxu0 0.0
    %595 = vmatprep.subr.mxu0 0.0
    %596 = vmatpush1.msra.mxu0 0.0
    %597 = vmatprep.subr.mxu0 0.0
    %598 = vmatpush1.msra.mxu0 0.0
    %599 = vmatprep.subr.mxu0 0.0
    %600 = vmatpush1.msra.mxu0 0.0
    %601 = vmatprep.subr.mxu0 0.0
    %602 = vmatpush1.msra.mxu0 0.0
    %603 = vmatprep.subr.mxu0 0.0
    %604 = vmatpush1.msra.mxu0 0.0
    %605 = vmatprep.subr.mxu0 0.0
    %606 = vmatpush1.msra.mxu0 0.0
    %607 = vmatprep.subr.mxu0 0.0
    %608 = vmatpush1.msra.mxu0 0.0
    %609 = vmatprep.subr.mxu0 0.0
    %610 = vmatpush1.msra.mxu0 0.0
    %611 = vmatprep.subr.mxu0 0.0
    %612 = vmatpush1.msra.mxu0 0.0
    %613 = vmatprep.subr.mxu0 0.0
    %614 = vmatpush1.msra.mxu0 0.0
    %615 = vmatprep.subr.mxu0 0.0
    %616 = vmatpush1.msra.mxu0 0.0
    %617 = vmatprep.subr.mxu0 0.0
    %618 = vmatpush1.msra.mxu0 0.0
    %619 = vmatprep.mubr.f32.mxu0 0.0
    %620 = vmatmul.mubr.f32.gmra.mrb[0].mxu0 %v547
    %v621 = vpop.f32.mrb[0].mxu0
    %v622 = vadd.f32 %v533, %v621
    %v623 = vpop.f32.mrb[0].mxu0
    %624 = vmatprep.mubr.f32.mxu0 0.0
    %625 = vmatmul.mubr.f32.gmra.mrb[0].mxu0 %v550
    %v626 = vpop.f32.mrb[0].mxu0
    %v627 = vadd.f32 %v538, %v626
    %v628 = vpop.f32.mrb[0].mxu0
    %629 = vmatprep.mubr.f32.mxu0 0.0
    %630 = vmatmul.mubr.f32.gmra.mrb[0].mxu0 %v553
    %v631 = vpop.f32.mrb[0].mxu0
    %v632 = vadd.f32 %v543, %v631
    %v633 = vpop.f32.mrb[0].mxu0
    %634 = vdwg.mxu0
    %s635 = scalar_lea.vmem %s4, 48
    %v636 = vld [vmem:[%s635] sm:$0xff]
    %v637 = vld [vmem:[%s635 + $0x8] sm:$0xff]
    %v638 = vld [vmem:[%s635 + $0x10] sm:$0x3]
    %639 = vmatprep.subr.mxu0 0.0
    %640 = vmatpush1.msra.mxu0 %v264
    %641 = vmatprep.subr.mxu0 0.0
    %642 = vmatpush1.msra.mxu0 %v265
    %643 = vmatprep.subr.mxu0 0.0
    %644 = vmatpush1.msra.mxu0 %v266
    %645 = vmatprep.subr.mxu0 0.0
    %646 = vmatpush1.msra.mxu0 %v267
    %647 = vmatprep.subr.mxu0 0.0
    %648 = vmatpush1.msra.mxu0 %v268
    %649 = vmatprep.subr.mxu0 0.0
    %650 = vmatpush1.msra.mxu0 %v269
    %651 = vmatprep.subr.mxu0 0.0
    %652 = vmatpush1.msra.mxu0 %v270
    %653 = vmatprep.subr.mxu0 0.0
    %654 = vmatpush1.msra.mxu0 %v271
    %655 = vmatprep.subr.mxu0 0.0
    %656 = vmatpush1.msra.mxu0 %v272
    %657 = vmatprep.subr.mxu0 0.0
    %658 = vmatpush1.msra.mxu0 %v273
    %659 = vmatprep.subr.mxu0 0.0
    %660 = vmatpush1.msra.mxu0 %v274
    %661 = vmatprep.subr.mxu0 0.0
    %662 = vmatpush1.msra.mxu0 %v275
    %663 = vmatprep.subr.mxu0 0.0
    %664 = vmatpush1.msra.mxu0 %v276
    %665 = vmatprep.subr.mxu0 0.0
    %666 = vmatpush1.msra.mxu0 %v277
    %667 = vmatprep.subr.mxu0 0.0
    %668 = vmatpush1.msra.mxu0 %v278
    %669 = vmatprep.subr.mxu0 0.0
    %670 = vmatpush1.msra.mxu0 %v279
    %671 = vmatprep.subr.mxu0 0.0
    %672 = vmatpush1.msra.mxu0 0.0
    %673 = vmatprep.subr.mxu0 0.0
    %674 = vmatpush1.msra.mxu0 0.0
    %675 = vmatprep.subr.mxu0 0.0
    %676 = vmatpush1.msra.mxu0 0.0
    %677 = vmatprep.subr.mxu0 0.0
    %678 = vmatpush1.msra.mxu0 0.0
    %679 = vmatprep.subr.mxu0 0.0
    %680 = vmatpush1.msra.mxu0 0.0
    %681 = vmatprep.subr.mxu0 0.0
    %682 = vmatpush1.msra.mxu0 0.0
    %683 = vmatprep.subr.mxu0 0.0
    %684 = vmatpush1.msra.mxu0 0.0
    %685 = vmatprep.subr.mxu0 0.0
    %686 = vmatpush1.msra.mxu0 0.0
    %687 = vmatprep.subr.mxu0 0.0
    %688 = vmatpush1.msra.mxu0 0.0
    %689 = vmatprep.subr.mxu0 0.0
    %690 = vmatpush1.msra.mxu0 0.0
    %691 = vmatprep.subr.mxu0 0.0
    %692 = vmatpush1.msra.mxu0 0.0
    %693 = vmatprep.subr.mxu0 0.0
    %694 = vmatpush1.msra.mxu0 0.0
    %695 = vmatprep.subr.mxu0 0.0
    %696 = vmatpush1.msra.mxu0 0.0
    %697 = vmatprep.subr.mxu0 0.0
    %698 = vmatpush1.msra.mxu0 0.0
    %699 = vmatprep.subr.mxu0 0.0
    %700 = vmatpush1.msra.mxu0 0.0
    %701 = vmatprep.subr.mxu0 0.0
    %702 = vmatpush1.msra.mxu0 0.0
    %703 = vmatprep.mubr.f32.mxu0 0.0
    %704 = vmatmul.mubr.f32.gmra.mrb[0].mxu0 %v636
    %v705 = vpop.f32.mrb[0].mxu0
    %v706 = vadd.f32 0.0, %v705
    %v707 = vpop.f32.mrb[0].mxu0
    %708 = vmatprep.mubr.f32.mxu0 0.0
    %709 = vmatmul.mubr.f32.gmra.mrb[0].mxu0 %v637
    %v710 = vpop.f32.mrb[0].mxu0
    %v711 = vadd.f32 0.0, %v710
    %v712 = vpop.f32.mrb[0].mxu0
    %713 = vmatprep.mubr.f32.mxu0 0.0
    %714 = vmatmul.mubr.f32.gmra.mrb[0].mxu0 %v638
    %v715 = vpop.f32.mrb[0].mxu0
    %v716 = vadd.f32 0.0, %v715
    %v717 = vpop.f32.mrb[0].mxu0
    %718 = vdwg.mxu0
    %s719 = scalar_lea.vmem %s5, 64
    %v720 = vld [vmem:[%s719] sm:$0xff]
    %v721 = vld [vmem:[%s719 + $0x8] sm:$0xff]
    %v722 = vld [vmem:[%s719 + $0x10] sm:$0xff]
    %v723 = vld [vmem:[%s719 + $0x18] sm:$0xff]
    %v725 = vsel %vm456, %v706, 0
    %v728 = vsel %vm456, %v711, 0
    %v731 = vsel %vm456, %v716, 0
    %733 = vmatprep.subr.mxu0 0.0
    %734 = vmatpush1.msra.mxu0 %v720
    %735 = vmatprep.subr.mxu0 0.0
    %736 = vmatpush1.msra.mxu0 %v721
    %737 = vmatprep.subr.mxu0 0.0
    %738 = vmatpush1.msra.mxu0 %v722
    %739 = vmatprep.subr.mxu0 0.0
    %740 = vmatpush1.msra.mxu0 %v723
    %741 = vmatprep.subr.mxu0 0.0
    %742 = vmatpush1.msra.mxu0 0.0
    %743 = vmatprep.subr.mxu0 0.0
    %744 = vmatpush1.msra.mxu0 0.0
    %745 = vmatprep.subr.mxu0 0.0
    %746 = vmatpush1.msra.mxu0 0.0
    %747 = vmatprep.subr.mxu0 0.0
    %748 = vmatpush1.msra.mxu0 0.0
    %749 = vmatprep.subr.mxu0 0.0
    %750 = vmatpush1.msra.mxu0 0.0
    %751 = vmatprep.subr.mxu0 0.0
    %752 = vmatpush1.msra.mxu0 0.0
    %753 = vmatprep.subr.mxu0 0.0
    %754 = vmatpush1.msra.mxu0 0.0
    %755 = vmatprep.subr.mxu0 0.0
    %756 = vmatpush1.msra.mxu0 0.0
    %757 = vmatprep.subr.mxu0 0.0
    %758 = vmatpush1.msra.mxu0 0.0
    %759 = vmatprep.subr.mxu0 0.0
    %760 = vmatpush1.msra.mxu0 0.0
    %761 = vmatprep.subr.mxu0 0.0
    %762 = vmatpush1.msra.mxu0 0.0
    %763 = vmatprep.subr.mxu0 0.0
    %764 = vmatpush1.msra.mxu0 0.0
    %765 = vmatprep.subr.mxu0 0.0
    %766 = vmatpush1.msra.mxu0 0.0
    %767 = vmatprep.subr.mxu0 0.0
    %768 = vmatpush1.msra.mxu0 0.0
    %769 = vmatprep.subr.mxu0 0.0
    %770 = vmatpush1.msra.mxu0 0.0
    %771 = vmatprep.subr.mxu0 0.0
    %772 = vmatpush1.msra.mxu0 0.0
    %773 = vmatprep.subr.mxu0 0.0
    %774 = vmatpush1.msra.mxu0 0.0
    %775 = vmatprep.subr.mxu0 0.0
    %776 = vmatpush1.msra.mxu0 0.0
    %777 = vmatprep.subr.mxu0 0.0
    %778 = vmatpush1.msra.mxu0 0.0
    %779 = vmatprep.subr.mxu0 0.0
    %780 = vmatpush1.msra.mxu0 0.0
    %781 = vmatprep.subr.mxu0 0.0
    %782 = vmatpush1.msra.mxu0 0.0
    %783 = vmatprep.subr.mxu0 0.0
    %784 = vmatpush1.msra.mxu0 0.0
    %785 = vmatprep.subr.mxu0 0.0
    %786 = vmatpush1.msra.mxu0 0.0
    %787 = vmatprep.subr.mxu0 0.0
    %788 = vmatpush1.msra.mxu0 0.0
    %789 = vmatprep.subr.mxu0 0.0
    %790 = vmatpush1.msra.mxu0 0.0
    %791 = vmatprep.subr.mxu0 0.0
    %792 = vmatpush1.msra.mxu0 0.0
    %793 = vmatprep.subr.mxu0 0.0
    %794 = vmatpush1.msra.mxu0 0.0
    %795 = vmatprep.subr.mxu0 0.0
    %796 = vmatpush1.msra.mxu0 0.0
    %797 = vmatprep.mubr.f32.mxu0 0.0
    %798 = vmatmul.mubr.f32.gmra.mrb[0].mxu0 %v725
    %v799 = vpop.f32.mrb[0].mxu0
    %v800 = vadd.f32 0.0, %v799
    %v801 = vpop.f32.mrb[0].mxu0
    %802 = vmatprep.mubr.f32.mxu0 0.0
    %803 = vmatmul.mubr.f32.gmra.mrb[0].mxu0 %v728
    %v804 = vpop.f32.mrb[0].mxu0
    %v805 = vadd.f32 0.0, %v804
    %v806 = vpop.f32.mrb[0].mxu0
    %807 = vmatprep.mubr.f32.mxu0 0.0
    %808 = vmatmul.mubr.f32.gmra.mrb[0].mxu0 %v731
    %v809 = vpop.f32.mrb[0].mxu0
    %v810 = vadd.f32 0.0, %v809
    %v811 = vpop.f32.mrb[0].mxu0
    %812 = vdwg.mxu0
    %v813 = vadd.f32 %v622, %v800
    %v814 = vadd.f32 %v627, %v805
    %v815 = vadd.f32 %v632, %v810
    %s816 = scalar_lea.vmem %s4, 72
    %v817 = vld [vmem:[%s816] sm:$0xff]
    %v818 = vld [vmem:[%s816 + $0x8] sm:$0xff]
    %v819 = vld [vmem:[%s816 + $0x10] sm:$0x3]
    %820 = vmatprep.subr.mxu0 0.0
    %821 = vmatpush1.msra.mxu0 %v264
    %822 = vmatprep.subr.mxu0 0.0
    %823 = vmatpush1.msra.mxu0 %v265
    %824 = vmatprep.subr.mxu0 0.0
    %825 = vmatpush1.msra.mxu0 %v266
    %826 = vmatprep.subr.mxu0 0.0
    %827 = vmatpush1.msra.mxu0 %v267
    %828 = vmatprep.subr.mxu0 0.0
    %829 = vmatpush1.msra.mxu0 %v268
    %830 = vmatprep.subr.mxu0 0.0
    %831 = vmatpush1.msra.mxu0 %v269
    %832 = vmatprep.subr.mxu0 0.0
    %833 = vmatpush1.msra.mxu0 %v270
    %834 = vmatprep.subr.mxu0 0.0
    %835 = vmatpush1.msra.mxu0 %v271
    %836 = vmatprep.subr.mxu0 0.0
    %837 = vmatpush1.msra.mxu0 %v272
    %838 = vmatprep.subr.mxu0 0.0
    %839 = vmatpush1.msra.mxu0 %v273
    %840 = vmatprep.subr.mxu0 0.0
    %841 = vmatpush1.msra.mxu0 %v274
    %842 = vmatprep.subr.mxu0 0.0
    %843 = vmatpush1.msra.mxu0 %v275
    %844 = vmatprep.subr.mxu0 0.0
    %845 = vmatpush1.msra.mxu0 %v276
    %846 = vmatprep.subr.mxu0 0.0
    %847 = vmatpush1.msra.mxu0 %v277
    %848 = vmatprep.subr.mxu0 0.0
    %849 = vmatpush1.msra.mxu0 %v278
    %850 = vmatprep.subr.mxu0 0.0
    %851 = vmatpush1.msra.mxu0 %v279
    %852 = vmatprep.subr.mxu0 0.0
    %853 = vmatpush1.msra.mxu0 0.0
    %854 = vmatprep.subr.mxu0 0.0
    %855 = vmatpush1.msra.mxu0 0.0
    %856 = vmatprep.subr.mxu0 0.0
    %857 = vmatpush1.msra.mxu0 0.0
    %858 = vmatprep.subr.mxu0 0.0
    %859 = vmatpush1.msra.mxu0 0.0
    %860 = vmatprep.subr.mxu0 0.0
    %861 = vmatpush1.msra.mxu0 0.0
    %862 = vmatprep.subr.mxu0 0.0
    %863 = vmatpush1.msra.mxu0 0.0
    %864 = vmatprep.subr.mxu0 0.0
    %865 = vmatpush1.msra.mxu0 0.0
    %866 = vmatprep.subr.mxu0 0.0
    %867 = vmatpush1.msra.mxu0 0.0
    %868 = vmatprep.subr.mxu0 0.0
    %869 = vmatpush1.msra.mxu0 0.0
    %870 = vmatprep.subr.mxu0 0.0
    %871 = vmatpush1.msra.mxu0 0.0
    %872 = vmatprep.subr.mxu0 0.0
    %873 = vmatpush1.msra.mxu0 0.0
    %874 = vmatprep.subr.mxu0 0.0
    %875 = vmatpush1.msra.mxu0 0.0
    %876 = vmatprep.subr.mxu0 0.0
    %877 = vmatpush1.msra.mxu0 0.0
    %878 = vmatprep.subr.mxu0 0.0
    %879 = vmatpush1.msra.mxu0 0.0
    %880 = vmatprep.subr.mxu0 0.0
    %881 = vmatpush1.msra.mxu0 0.0
    %882 = vmatprep.subr.mxu0 0.0
    %883 = vmatpush1.msra.mxu0 0.0
    %884 = vmatprep.mubr.f32.mxu0 0.0
    %885 = vmatmul.mubr.f32.gmra.mrb[0].mxu0 %v817
    %v886 = vpop.f32.mrb[0].mxu0
    %v887 = vadd.f32 0.0, %v886
    %v888 = vpop.f32.mrb[0].mxu0
    %889 = vmatprep.mubr.f32.mxu0 0.0
    %890 = vmatmul.mubr.f32.gmra.mrb[0].mxu0 %v818
    %v891 = vpop.f32.mrb[0].mxu0
    %v892 = vadd.f32 0.0, %v891
    %v893 = vpop.f32.mrb[0].mxu0
    %894 = vmatprep.mubr.f32.mxu0 0.0
    %895 = vmatmul.mubr.f32.gmra.mrb[0].mxu0 %v819
    %v896 = vpop.f32.mrb[0].mxu0
    %v897 = vadd.f32 0.0, %v896
    %v898 = vpop.f32.mrb[0].mxu0
    %899 = vdwg.mxu0
    %s900 = scalar_lea.vmem %s5, 96
    %v901 = vld [vmem:[%s900] sm:$0xff]
    %v902 = vld [vmem:[%s900 + $0x8] sm:$0xff]
    %v903 = vld [vmem:[%s900 + $0x10] sm:$0xff]
    %v904 = vld [vmem:[%s900 + $0x18] sm:$0xff]
    %v906 = vsel %vm456, %v887, 0
    %v909 = vsel %vm456, %v892, 0
    %v912 = vsel %vm456, %v897, 0
    %914 = vmatprep.subr.mxu0 0.0
    %915 = vmatpush1.msra.mxu0 %v901
    %916 = vmatprep.subr.mxu0 0.0
    %917 = vmatpush1.msra.mxu0 %v902
    %918 = vmatprep.subr.mxu0 0.0
    %919 = vmatpush1.msra.mxu0 %v903
    %920 = vmatprep.subr.mxu0 0.0
    %921 = vmatpush1.msra.mxu0 %v904
    %922 = vmatprep.subr.mxu0 0.0
    %923 = vmatpush1.msra.mxu0 0.0
    %924 = vmatprep.subr.mxu0 0.0
    %925 = vmatpush1.msra.mxu0 0.0
    %926 = vmatprep.subr.mxu0 0.0
    %927 = vmatpush1.msra.mxu0 0.0
    %928 = vmatprep.subr.mxu0 0.0
    %929 = vmatpush1.msra.mxu0 0.0
    %930 = vmatprep.subr.mxu0 0.0
    %931 = vmatpush1.msra.mxu0 0.0
    %932 = vmatprep.subr.mxu0 0.0
    %933 = vmatpush1.msra.mxu0 0.0
    %934 = vmatprep.subr.mxu0 0.0
    %935 = vmatpush1.msra.mxu0 0.0
    %936 = vmatprep.subr.mxu0 0.0
    %937 = vmatpush1.msra.mxu0 0.0
    %938 = vmatprep.subr.mxu0 0.0
    %939 = vmatpush1.msra.mxu0 0.0
    %940 = vmatprep.subr.mxu0 0.0
    %941 = vmatpush1.msra.mxu0 0.0
    %942 = vmatprep.subr.mxu0 0.0
    %943 = vmatpush1.msra.mxu0 0.0
    %944 = vmatprep.subr.mxu0 0.0
    %945 = vmatpush1.msra.mxu0 0.0
    %946 = vmatprep.subr.mxu0 0.0
    %947 = vmatpush1.msra.mxu0 0.0
    %948 = vmatprep.subr.mxu0 0.0
    %949 = vmatpush1.msra.mxu0 0.0
    %950 = vmatprep.subr.mxu0 0.0
    %951 = vmatpush1.msra.mxu0 0.0
    %952 = vmatprep.subr.mxu0 0.0
    %953 = vmatpush1.msra.mxu0 0.0
    %954 = vmatprep.subr.mxu0 0.0
    %955 = vmatpush1.msra.mxu0 0.0
    %956 = vmatprep.subr.mxu0 0.0
    %957 = vmatpush1.msra.mxu0 0.0
    %958 = vmatprep.subr.mxu0 0.0
    %959 = vmatpush1.msra.mxu0 0.0
    %960 = vmatprep.subr.mxu0 0.0
    %961 = vmatpush1.msra.mxu0 0.0
    %962 = vmatprep.subr.mxu0 0.0
    %963 = vmatpush1.msra.mxu0 0.0
    %964 = vmatprep.subr.mxu0 0.0
    %965 = vmatpush1.msra.mxu0 0.0
    %966 = vmatprep.subr.mxu0 0.0
    %967 = vmatpush1.msra.mxu0 0.0
    %968 = vmatprep.subr.mxu0 0.0
    %969 = vmatpush1.msra.mxu0 0.0
    %970 = vmatprep.subr.mxu0 0.0
    %971 = vmatpush1.msra.mxu0 0.0
    %972 = vmatprep.subr.mxu0 0.0
    %973 = vmatpush1.msra.mxu0 0.0
    %974 = vmatprep.subr.mxu0 0.0
    %975 = vmatpush1.msra.mxu0 0.0
    %976 = vmatprep.subr.mxu0 0.0
    %977 = vmatpush1.msra.mxu0 0.0
    %978 = vmatprep.mubr.f32.mxu0 0.0
    %979 = vmatmul.mubr.f32.gmra.mrb[0].mxu0 %v906
    %v980 = vpop.f32.mrb[0].mxu0
    %v981 = vadd.f32 0.0, %v980
    %v982 = vpop.f32.mrb[0].mxu0
    %983 = vmatprep.mubr.f32.mxu0 0.0
    %984 = vmatmul.mubr.f32.gmra.mrb[0].mxu0 %v909
    %v985 = vpop.f32.mrb[0].mxu0
    %v986 = vadd.f32 0.0, %v985
    %v987 = vpop.f32.mrb[0].mxu0
    %988 = vmatprep.mubr.f32.mxu0 0.0
    %989 = vmatmul.mubr.f32.gmra.mrb[0].mxu0 %v912
    %v990 = vpop.f32.mrb[0].mxu0
    %v991 = vadd.f32 0.0, %v990
    %v992 = vpop.f32.mrb[0].mxu0
    %993 = vdwg.mxu0
    %v994 = vadd.f32 %v813, %v981
    %v995 = vadd.f32 %v814, %v986
    %v996 = vadd.f32 %v815, %v991
    %s997 = scalar_lea.vmem %s4, 96
    %v998 = vld [vmem:[%s997] sm:$0xff]
    %v999 = vld [vmem:[%s997 + $0x8] sm:$0xff]
    %v1000 = vld [vmem:[%s997 + $0x10] sm:$0x3]
    %1001 = vmatprep.subr.mxu0 0.0
    %1002 = vmatpush1.msra.mxu0 %v264
    %1003 = vmatprep.subr.mxu0 0.0
    %1004 = vmatpush1.msra.mxu0 %v265
    %1005 = vmatprep.subr.mxu0 0.0
    %1006 = vmatpush1.msra.mxu0 %v266
    %1007 = vmatprep.subr.mxu0 0.0
    %1008 = vmatpush1.msra.mxu0 %v267
    %1009 = vmatprep.subr.mxu0 0.0
    %1010 = vmatpush1.msra.mxu0 %v268
    %1011 = vmatprep.subr.mxu0 0.0
    %1012 = vmatpush1.msra.mxu0 %v269
    %1013 = vmatprep.subr.mxu0 0.0
    %1014 = vmatpush1.msra.mxu0 %v270
    %1015 = vmatprep.subr.mxu0 0.0
    %1016 = vmatpush1.msra.mxu0 %v271
    %1017 = vmatprep.subr.mxu0 0.0
    %1018 = vmatpush1.msra.mxu0 %v272
    %1019 = vmatprep.subr.mxu0 0.0
    %1020 = vmatpush1.msra.mxu0 %v273
    %1021 = vmatprep.subr.mxu0 0.0
    %1022 = vmatpush1.msra.mxu0 %v274
    %1023 = vmatprep.subr.mxu0 0.0
    %1024 = vmatpush1.msra.mxu0 %v275
    %1025 = vmatprep.subr.mxu0 0.0
    %1026 = vmatpush1.msra.mxu0 %v276
    %1027 = vmatprep.subr.mxu0 0.0
    %1028 = vmatpush1.msra.mxu0 %v277
    %1029 = vmatprep.subr.mxu0 0.0
    %1030 = vmatpush1.msra.mxu0 %v278
    %1031 = vmatprep.subr.mxu0 0.0
    %1032 = vmatpush1.msra.mxu0 %v279
    %1033 = vmatprep.subr.mxu0 0.0
    %1034 = vmatpush1.msra.mxu0 0.0
    %1035 = vmatprep.subr.mxu0 0.0
    %1036 = vmatpush1.msra.mxu0 0.0
    %1037 = vmatprep.subr.mxu0 0.0
    %1038 = vmatpush1.msra.mxu0 0.0
    %1039 = vmatprep.subr.mxu0 0.0
    %1040 = vmatpush1.msra.mxu0 0.0
    %1041 = vmatprep.subr.mxu0 0.0
    %1042 = vmatpush1.msra.mxu0 0.0
    %1043 = vmatprep.subr.mxu0 0.0
    %1044 = vmatpush1.msra.mxu0 0.0
    %1045 = vmatprep.subr.mxu0 0.0
    %1046 = vmatpush1.msra.mxu0 0.0
    %1047 = vmatprep.subr.mxu0 0.0
    %1048 = vmatpush1.msra.mxu0 0.0
    %1049 = vmatprep.subr.mxu0 0.0
    %1050 = vmatpush1.msra.mxu0 0.0
    %1051 = vmatprep.subr.mxu0 0.0
    %1052 = vmatpush1.msra.mxu0 0.0
    %1053 = vmatprep.subr.mxu0 0.0
    %1054 = vmatpush1.msra.mxu0 0.0
    %1055 = vmatprep.subr.mxu0 0.0
    %1056 = vmatpush1.msra.mxu0 0.0
    %1057 = vmatprep.subr.mxu0 0.0
    %1058 = vmatpush1.msra.mxu0 0.0
    %1059 = vmatprep.subr.mxu0 0.0
    %1060 = vmatpush1.msra.mxu0 0.0
    %1061 = vmatprep.subr.mxu0 0.0
    %1062 = vmatpush1.msra.mxu0 0.0
    %1063 = vmatprep.subr.mxu0 0.0
    %1064 = vmatpush1.msra.mxu0 0.0
    %1065 = vmatprep.mubr.f32.mxu0 0.0
    %1066 = vmatmul.mubr.f32.gmra.mrb[0].mxu0 %v998
    %v1067 = vpop.f32.mrb[0].mxu0
    %v1068 = vadd.f32 0.0, %v1067
    %v1069 = vpop.f32.mrb[0].mxu0
    %1070 = vmatprep.mubr.f32.mxu0 0.0
    %1071 = vmatmul.mubr.f32.gmra.mrb[0].mxu0 %v999
    %v1072 = vpop.f32.mrb[0].mxu0
    %v1073 = vadd.f32 0.0, %v1072
    %v1074 = vpop.f32.mrb[0].mxu0
    %1075 = vmatprep.mubr.f32.mxu0 0.0
    %1076 = vmatmul.mubr.f32.gmra.mrb[0].mxu0 %v1000
    %v1077 = vpop.f32.mrb[0].mxu0
    %v1078 = vadd.f32 0.0, %v1077
    %v1079 = vpop.f32.mrb[0].mxu0
    %1080 = vdwg.mxu0
    %s1081 = scalar_lea.vmem %s5, 128
    %v1082 = vld [vmem:[%s1081] sm:$0xff]
    %v1083 = vld [vmem:[%s1081 + $0x8] sm:$0xff]
    %v1084 = vld [vmem:[%s1081 + $0x10] sm:$0xff]
    %v1085 = vld [vmem:[%s1081 + $0x18] sm:$0xff]
    %v1087 = vsel %vm456, %v1068, 0
    %v1090 = vsel %vm456, %v1073, 0
    %v1093 = vsel %vm456, %v1078, 0
    %1095 = vmatprep.subr.mxu0 0.0
    %1096 = vmatpush1.msra.mxu0 %v1082
    %1097 = vmatprep.subr.mxu0 0.0
    %1098 = vmatpush1.msra.mxu0 %v1083
    %1099 = vmatprep.subr.mxu0 0.0
    %1100 = vmatpush1.msra.mxu0 %v1084
    %1101 = vmatprep.subr.mxu0 0.0
    %1102 = vmatpush1.msra.mxu0 %v1085
    %1103 = vmatprep.subr.mxu0 0.0
    %1104 = vmatpush1.msra.mxu0 0.0
    %1105 = vmatprep.subr.mxu0 0.0
    %1106 = vmatpush1.msra.mxu0 0.0
    %1107 = vmatprep.subr.mxu0 0.0
    %1108 = vmatpush1.msra.mxu0 0.0
    %1109 = vmatprep.subr.mxu0 0.0
    %1110 = vmatpush1.msra.mxu0 0.0
    %1111 = vmatprep.subr.mxu0 0.0
    %1112 = vmatpush1.msra.mxu0 0.0
    %1113 = vmatprep.subr.mxu0 0.0
    %1114 = vmatpush1.msra.mxu0 0.0
    %1115 = vmatprep.subr.mxu0 0.0
    %1116 = vmatpush1.msra.mxu0 0.0
    %1117 = vmatprep.subr.mxu0 0.0
    %1118 = vmatpush1.msra.mxu0 0.0
    %1119 = vmatprep.subr.mxu0 0.0
    %1120 = vmatpush1.msra.mxu0 0.0
    %1121 = vmatprep.subr.mxu0 0.0
    %1122 = vmatpush1.msra.mxu0 0.0
    %1123 = vmatprep.subr.mxu0 0.0
    %1124 = vmatpush1.msra.mxu0 0.0
    %1125 = vmatprep.subr.mxu0 0.0
    %1126 = vmatpush1.msra.mxu0 0.0
    %1127 = vmatprep.subr.mxu0 0.0
    %1128 = vmatpush1.msra.mxu0 0.0
    %1129 = vmatprep.subr.mxu0 0.0
    %1130 = vmatpush1.msra.mxu0 0.0
    %1131 = vmatprep.subr.mxu0 0.0
    %1132 = vmatpush1.msra.mxu0 0.0
    %1133 = vmatprep.subr.mxu0 0.0
    %1134 = vmatpush1.msra.mxu0 0.0
    %1135 = vmatprep.subr.mxu0 0.0
    %1136 = vmatpush1.msra.mxu0 0.0
    %1137 = vmatprep.subr.mxu0 0.0
    %1138 = vmatpush1.msra.mxu0 0.0
    %1139 = vmatprep.subr.mxu0 0.0
    %1140 = vmatpush1.msra.mxu0 0.0
    %1141 = vmatprep.subr.mxu0 0.0
    %1142 = vmatpush1.msra.mxu0 0.0
    %1143 = vmatprep.subr.mxu0 0.0
    %1144 = vmatpush1.msra.mxu0 0.0
    %1145 = vmatprep.subr.mxu0 0.0
    %1146 = vmatpush1.msra.mxu0 0.0
    %1147 = vmatprep.subr.mxu0 0.0
    %1148 = vmatpush1.msra.mxu0 0.0
    %1149 = vmatprep.subr.mxu0 0.0
    %1150 = vmatpush1.msra.mxu0 0.0
    %1151 = vmatprep.subr.mxu0 0.0
    %1152 = vmatpush1.msra.mxu0 0.0
    %1153 = vmatprep.subr.mxu0 0.0
    %1154 = vmatpush1.msra.mxu0 0.0
    %1155 = vmatprep.subr.mxu0 0.0
    %1156 = vmatpush1.msra.mxu0 0.0
    %1157 = vmatprep.subr.mxu0 0.0
    %1158 = vmatpush1.msra.mxu0 0.0
    %1159 = vmatprep.mubr.f32.mxu0 0.0
    %1160 = vmatmul.mubr.f32.gmra.mrb[0].mxu0 %v1087
    %v1161 = vpop.f32.mrb[0].mxu0
    %v1162 = vadd.f32 0.0, %v1161
    %v1163 = vpop.f32.mrb[0].mxu0
    %1164 = vmatprep.mubr.f32.mxu0 0.0
    %1165 = vmatmul.mubr.f32.gmra.mrb[0].mxu0 %v1090
    %v1166 = vpop.f32.mrb[0].mxu0
    %v1167 = vadd.f32 0.0, %v1166
    %v1168 = vpop.f32.mrb[0].mxu0
    %1169 = vmatprep.mubr.f32.mxu0 0.0
    %1170 = vmatmul.mubr.f32.gmra.mrb[0].mxu0 %v1093
    %v1171 = vpop.f32.mrb[0].mxu0
    %v1172 = vadd.f32 0.0, %v1171
    %v1173 = vpop.f32.mrb[0].mxu0
    %1174 = vdwg.mxu0
    %v1175 = vadd.f32 %v994, %v1162
    %v1176 = vadd.f32 %v995, %v1167
    %v1177 = vadd.f32 %v996, %v1172
    %s1178 = scalar_lea.vmem %s4, 120
    %v1179 = vld [vmem:[%s1178] sm:$0xff]
    %v1180 = vld [vmem:[%s1178 + $0x8] sm:$0xff]
    %v1181 = vld [vmem:[%s1178 + $0x10] sm:$0x3]
    %1182 = vmatprep.subr.mxu0 0.0
    %1183 = vmatpush1.msra.mxu0 %v264
    %1184 = vmatprep.subr.mxu0 0.0
    %1185 = vmatpush1.msra.mxu0 %v265
    %1186 = vmatprep.subr.mxu0 0.0
    %1187 = vmatpush1.msra.mxu0 %v266
    %1188 = vmatprep.subr.mxu0 0.0
    %1189 = vmatpush1.msra.mxu0 %v267
    %1190 = vmatprep.subr.mxu0 0.0
    %1191 = vmatpush1.msra.mxu0 %v268
    %1192 = vmatprep.subr.mxu0 0.0
    %1193 = vmatpush1.msra.mxu0 %v269
    %1194 = vmatprep.subr.mxu0 0.0
    %1195 = vmatpush1.msra.mxu0 %v270
    %1196 = vmatprep.subr.mxu0 0.0
    %1197 = vmatpush1.msra.mxu0 %v271
    %1198 = vmatprep.subr.mxu0 0.0
    %1199 = vmatpush1.msra.mxu0 %v272
    %1200 = vmatprep.subr.mxu0 0.0
    %1201 = vmatpush1.msra.mxu0 %v273
    %1202 = vmatprep.subr.mxu0 0.0
    %1203 = vmatpush1.msra.mxu0 %v274
    %1204 = vmatprep.subr.mxu0 0.0
    %1205 = vmatpush1.msra.mxu0 %v275
    %1206 = vmatprep.subr.mxu0 0.0
    %1207 = vmatpush1.msra.mxu0 %v276
    %1208 = vmatprep.subr.mxu0 0.0
    %1209 = vmatpush1.msra.mxu0 %v277
    %1210 = vmatprep.subr.mxu0 0.0
    %1211 = vmatpush1.msra.mxu0 %v278
    %1212 = vmatprep.subr.mxu0 0.0
    %1213 = vmatpush1.msra.mxu0 %v279
    %1214 = vmatprep.subr.mxu0 0.0
    %1215 = vmatpush1.msra.mxu0 0.0
    %1216 = vmatprep.subr.mxu0 0.0
    %1217 = vmatpush1.msra.mxu0 0.0
    %1218 = vmatprep.subr.mxu0 0.0
    %1219 = vmatpush1.msra.mxu0 0.0
    %1220 = vmatprep.subr.mxu0 0.0
    %1221 = vmatpush1.msra.mxu0 0.0
    %1222 = vmatprep.subr.mxu0 0.0
    %1223 = vmatpush1.msra.mxu0 0.0
    %1224 = vmatprep.subr.mxu0 0.0
    %1225 = vmatpush1.msra.mxu0 0.0
    %1226 = vmatprep.subr.mxu0 0.0
    %1227 = vmatpush1.msra.mxu0 0.0
    %1228 = vmatprep.subr.mxu0 0.0
    %1229 = vmatpush1.msra.mxu0 0.0
    %1230 = vmatprep.subr.mxu0 0.0
    %1231 = vmatpush1.msra.mxu0 0.0
    %1232 = vmatprep.subr.mxu0 0.0
    %1233 = vmatpush1.msra.mxu0 0.0
    %1234 = vmatprep.subr.mxu0 0.0
    %1235 = vmatpush1.msra.mxu0 0.0
    %1236 = vmatprep.subr.mxu0 0.0
    %1237 = vmatpush1.msra.mxu0 0.0
    %1238 = vmatprep.subr.mxu0 0.0
    %1239 = vmatpush1.msra.mxu0 0.0
    %1240 = vmatprep.subr.mxu0 0.0
    %1241 = vmatpush1.msra.mxu0 0.0
    %1242 = vmatprep.subr.mxu0 0.0
    %1243 = vmatpush1.msra.mxu0 0.0
    %1244 = vmatprep.subr.mxu0 0.0
    %1245 = vmatpush1.msra.mxu0 0.0
    %1246 = vmatprep.mubr.f32.mxu0 0.0
    %1247 = vmatmul.mubr.f32.gmra.mrb[0].mxu0 %v1179
    %v1248 = vpop.f32.mrb[0].mxu0
    %v1249 = vadd.f32 0.0, %v1248
    %v1250 = vpop.f32.mrb[0].mxu0
    %1251 = vmatprep.mubr.f32.mxu0 0.0
    %1252 = vmatmul.mubr.f32.gmra.mrb[0].mxu0 %v1180
    %v1253 = vpop.f32.mrb[0].mxu0
    %v1254 = vadd.f32 0.0, %v1253
    %v1255 = vpop.f32.mrb[0].mxu0
    %1256 = vmatprep.mubr.f32.mxu0 0.0
    %1257 = vmatmul.mubr.f32.gmra.mrb[0].mxu0 %v1181
    %v1258 = vpop.f32.mrb[0].mxu0
    %v1259 = vadd.f32 0.0, %v1258
    %v1260 = vpop.f32.mrb[0].mxu0
    %1261 = vdwg.mxu0
    %s1262 = scalar_lea.vmem %s5, 160
    %v1263 = vld [vmem:[%s1262] sm:$0xff]
    %v1264 = vld [vmem:[%s1262 + $0x8] sm:$0xff]
    %v1265 = vld [vmem:[%s1262 + $0x10] sm:$0xff]
    %v1266 = vld [vmem:[%s1262 + $0x18] sm:$0xff]
    %v1268 = vsel %vm456, %v1249, 0
    %v1271 = vsel %vm456, %v1254, 0
    %v1274 = vsel %vm456, %v1259, 0
    %1276 = vmatprep.subr.mxu0 0.0
    %1277 = vmatpush1.msra.mxu0 %v1263
    %1278 = vmatprep.subr.mxu0 0.0
    %1279 = vmatpush1.msra.mxu0 %v1264
    %1280 = vmatprep.subr.mxu0 0.0
    %1281 = vmatpush1.msra.mxu0 %v1265
    %1282 = vmatprep.subr.mxu0 0.0
    %1283 = vmatpush1.msra.mxu0 %v1266
    %1284 = vmatprep.subr.mxu0 0.0
    %1285 = vmatpush1.msra.mxu0 0.0
    %1286 = vmatprep.subr.mxu0 0.0
    %1287 = vmatpush1.msra.mxu0 0.0
    %1288 = vmatprep.subr.mxu0 0.0
    %1289 = vmatpush1.msra.mxu0 0.0
    %1290 = vmatprep.subr.mxu0 0.0
    %1291 = vmatpush1.msra.mxu0 0.0
    %1292 = vmatprep.subr.mxu0 0.0
    %1293 = vmatpush1.msra.mxu0 0.0
    %1294 = vmatprep.subr.mxu0 0.0
    %1295 = vmatpush1.msra.mxu0 0.0
    %1296 = vmatprep.subr.mxu0 0.0
    %1297 = vmatpush1.msra.mxu0 0.0
    %1298 = vmatprep.subr.mxu0 0.0
    %1299 = vmatpush1.msra.mxu0 0.0
    %1300 = vmatprep.subr.mxu0 0.0
    %1301 = vmatpush1.msra.mxu0 0.0
    %1302 = vmatprep.subr.mxu0 0.0
    %1303 = vmatpush1.msra.mxu0 0.0
    %1304 = vmatprep.subr.mxu0 0.0
    %1305 = vmatpush1.msra.mxu0 0.0
    %1306 = vmatprep.subr.mxu0 0.0
    %1307 = vmatpush1.msra.mxu0 0.0
    %1308 = vmatprep.subr.mxu0 0.0
    %1309 = vmatpush1.msra.mxu0 0.0
    %1310 = vmatprep.subr.mxu0 0.0
    %1311 = vmatpush1.msra.mxu0 0.0
    %1312 = vmatprep.subr.mxu0 0.0
    %1313 = vmatpush1.msra.mxu0 0.0
    %1314 = vmatprep.subr.mxu0 0.0
    %1315 = vmatpush1.msra.mxu0 0.0
    %1316 = vmatprep.subr.mxu0 0.0
    %1317 = vmatpush1.msra.mxu0 0.0
    %1318 = vmatprep.subr.mxu0 0.0
    %1319 = vmatpush1.msra.mxu0 0.0
    %1320 = vmatprep.subr.mxu0 0.0
    %1321 = vmatpush1.msra.mxu0 0.0
    %1322 = vmatprep.subr.mxu0 0.0
    %1323 = vmatpush1.msra.mxu0 0.0
    %1324 = vmatprep.subr.mxu0 0.0
    %1325 = vmatpush1.msra.mxu0 0.0
    %1326 = vmatprep.subr.mxu0 0.0
    %1327 = vmatpush1.msra.mxu0 0.0
    %1328 = vmatprep.subr.mxu0 0.0
    %1329 = vmatpush1.msra.mxu0 0.0
    %1330 = vmatprep.subr.mxu0 0.0
    %1331 = vmatpush1.msra.mxu0 0.0
    %1332 = vmatprep.subr.mxu0 0.0
    %1333 = vmatpush1.msra.mxu0 0.0
    %1334 = vmatprep.subr.mxu0 0.0
    %1335 = vmatpush1.msra.mxu0 0.0
    %1336 = vmatprep.subr.mxu0 0.0
    %1337 = vmatpush1.msra.mxu0 0.0
    %1338 = vmatprep.subr.mxu0 0.0
    %1339 = vmatpush1.msra.mxu0 0.0
    %1340 = vmatprep.mubr.f32.mxu0 0.0
    %1341 = vmatmul.mubr.f32.gmra.mrb[0].mxu0 %v1268
    %v1342 = vpop.f32.mrb[0].mxu0
    %v1343 = vadd.f32 0.0, %v1342
    %v1344 = vpop.f32.mrb[0].mxu0
    %1345 = vmatprep.mubr.f32.mxu0 0.0
    %1346 = vmatmul.mubr.f32.gmra.mrb[0].mxu0 %v1271
    %v1347 = vpop.f32.mrb[0].mxu0
    %v1348 = vadd.f32 0.0, %v1347
    %v1349 = vpop.f32.mrb[0].mxu0
    %1350 = vmatprep.mubr.f32.mxu0 0.0
    %1351 = vmatmul.mubr.f32.gmra.mrb[0].mxu0 %v1274
    %v1352 = vpop.f32.mrb[0].mxu0
    %v1353 = vadd.f32 0.0, %v1352
    %v1354 = vpop.f32.mrb[0].mxu0
    %1355 = vdwg.mxu0
    %v1356 = vadd.f32 %v1175, %v1343
    %v1357 = vadd.f32 %v1176, %v1348
    %v1358 = vadd.f32 %v1177, %v1353
    %s1359 = scalar_lea.vmem %s4, 144
    %v1360 = vld [vmem:[%s1359] sm:$0xff]
    %v1361 = vld [vmem:[%s1359 + $0x8] sm:$0xff]
    %v1362 = vld [vmem:[%s1359 + $0x10] sm:$0x3]
    %1363 = vmatprep.subr.mxu0 0.0
    %1364 = vmatpush1.msra.mxu0 %v264
    %1365 = vmatprep.subr.mxu0 0.0
    %1366 = vmatpush1.msra.mxu0 %v265
    %1367 = vmatprep.subr.mxu0 0.0
    %1368 = vmatpush1.msra.mxu0 %v266
    %1369 = vmatprep.subr.mxu0 0.0
    %1370 = vmatpush1.msra.mxu0 %v267
    %1371 = vmatprep.subr.mxu0 0.0
    %1372 = vmatpush1.msra.mxu0 %v268
    %1373 = vmatprep.subr.mxu0 0.0
    %1374 = vmatpush1.msra.mxu0 %v269
    %1375 = vmatprep.subr.mxu0 0.0
    %1376 = vmatpush1.msra.mxu0 %v270
    %1377 = vmatprep.subr.mxu0 0.0
    %1378 = vmatpush1.msra.mxu0 %v271
    %1379 = vmatprep.subr.mxu0 0.0
    %1380 = vmatpush1.msra.mxu0 %v272
    %1381 = vmatprep.subr.mxu0 0.0
    %1382 = vmatpush1.msra.mxu0 %v273
    %1383 = vmatprep.subr.mxu0 0.0
    %1384 = vmatpush1.msra.mxu0 %v274
    %1385 = vmatprep.subr.mxu0 0.0
    %1386 = vmatpush1.msra.mxu0 %v275
    %1387 = vmatprep.subr.mxu0 0.0
    %1388 = vmatpush1.msra.mxu0 %v276
    %1389 = vmatprep.subr.mxu0 0.0
    %1390 = vmatpush1.msra.mxu0 %v277
    %1391 = vmatprep.subr.mxu0 0.0
    %1392 = vmatpush1.msra.mxu0 %v278
    %1393 = vmatprep.subr.mxu0 0.0
    %1394 = vmatpush1.msra.mxu0 %v279
    %1395 = vmatprep.subr.mxu0 0.0
    %1396 = vmatpush1.msra.mxu0 0.0
    %1397 = vmatprep.subr.mxu0 0.0
    %1398 = vmatpush1.msra.mxu0 0.0
    %1399 = vmatprep.subr.mxu0 0.0
    %1400 = vmatpush1.msra.mxu0 0.0
    %1401 = vmatprep.subr.mxu0 0.0
    %1402 = vmatpush1.msra.mxu0 0.0
    %1403 = vmatprep.subr.mxu0 0.0
    %1404 = vmatpush1.msra.mxu0 0.0
    %1405 = vmatprep.subr.mxu0 0.0
    %1406 = vmatpush1.msra.mxu0 0.0
    %1407 = vmatprep.subr.mxu0 0.0
    %1408 = vmatpush1.msra.mxu0 0.0
    %1409 = vmatprep.subr.mxu0 0.0
    %1410 = vmatpush1.msra.mxu0 0.0
    %1411 = vmatprep.subr.mxu0 0.0
    %1412 = vmatpush1.msra.mxu0 0.0
    %1413 = vmatprep.subr.mxu0 0.0
    %1414 = vmatpush1.msra.mxu0 0.0
    %1415 = vmatprep.subr.mxu0 0.0
    %1416 = vmatpush1.msra.mxu0 0.0
    %1417 = vmatprep.subr.mxu0 0.0
    %1418 = vmatpush1.msra.mxu0 0.0
    %1419 = vmatprep.subr.mxu0 0.0
    %1420 = vmatpush1.msra.mxu0 0.0
    %1421 = vmatprep.subr.mxu0 0.0
    %1422 = vmatpush1.msra.mxu0 0.0
    %1423 = vmatprep.subr.mxu0 0.0
    %1424 = vmatpush1.msra.mxu0 0.0
    %1425 = vmatprep.subr.mxu0 0.0
    %1426 = vmatpush1.msra.mxu0 0.0
    %1427 = vmatprep.mubr.f32.mxu0 0.0
    %1428 = vmatmul.mubr.f32.gmra.mrb[0].mxu0 %v1360
    %v1429 = vpop.f32.mrb[0].mxu0
    %v1430 = vadd.f32 0.0, %v1429
    %v1431 = vpop.f32.mrb[0].mxu0
    %1432 = vmatprep.mubr.f32.mxu0 0.0
    %1433 = vmatmul.mubr.f32.gmra.mrb[0].mxu0 %v1361
    %v1434 = vpop.f32.mrb[0].mxu0
    %v1435 = vadd.f32 0.0, %v1434
    %v1436 = vpop.f32.mrb[0].mxu0
    %1437 = vmatprep.mubr.f32.mxu0 0.0
    %1438 = vmatmul.mubr.f32.gmra.mrb[0].mxu0 %v1362
    %v1439 = vpop.f32.mrb[0].mxu0
    %v1440 = vadd.f32 0.0, %v1439
    %v1441 = vpop.f32.mrb[0].mxu0
    %1442 = vdwg.mxu0
    %s1443 = scalar_lea.vmem %s5, 192
    %v1444 = vld [vmem:[%s1443] sm:$0xff]
    %v1445 = vld [vmem:[%s1443 + $0x8] sm:$0xff]
    %v1446 = vld [vmem:[%s1443 + $0x10] sm:$0xff]
    %v1447 = vld [vmem:[%s1443 + $0x18] sm:$0xff]
    %v1449 = vsel %vm456, %v1430, 0
    %v1452 = vsel %vm456, %v1435, 0
    %v1455 = vsel %vm456, %v1440, 0
    %1457 = vmatprep.subr.mxu0 0.0
    %1458 = vmatpush1.msra.mxu0 %v1444
    %1459 = vmatprep.subr.mxu0 0.0
    %1460 = vmatpush1.msra.mxu0 %v1445
    %1461 = vmatprep.subr.mxu0 0.0
    %1462 = vmatpush1.msra.mxu0 %v1446
    %1463 = vmatprep.subr.mxu0 0.0
    %1464 = vmatpush1.msra.mxu0 %v1447
    %1465 = vmatprep.subr.mxu0 0.0
    %1466 = vmatpush1.msra.mxu0 0.0
    %1467 = vmatprep.subr.mxu0 0.0
    %1468 = vmatpush1.msra.mxu0 0.0
    %1469 = vmatprep.subr.mxu0 0.0
    %1470 = vmatpush1.msra.mxu0 0.0
    %1471 = vmatprep.subr.mxu0 0.0
    %1472 = vmatpush1.msra.mxu0 0.0
    %1473 = vmatprep.subr.mxu0 0.0
    %1474 = vmatpush1.msra.mxu0 0.0
    %1475 = vmatprep.subr.mxu0 0.0
    %1476 = vmatpush1.msra.mxu0 0.0
    %1477 = vmatprep.subr.mxu0 0.0
    %1478 = vmatpush1.msra.mxu0 0.0
    %1479 = vmatprep.subr.mxu0 0.0
    %1480 = vmatpush1.msra.mxu0 0.0
    %1481 = vmatprep.subr.mxu0 0.0
    %1482 = vmatpush1.msra.mxu0 0.0
    %1483 = vmatprep.subr.mxu0 0.0
    %1484 = vmatpush1.msra.mxu0 0.0
    %1485 = vmatprep.subr.mxu0 0.0
    %1486 = vmatpush1.msra.mxu0 0.0
    %1487 = vmatprep.subr.mxu0 0.0
    %1488 = vmatpush1.msra.mxu0 0.0
    %1489 = vmatprep.subr.mxu0 0.0
    %1490 = vmatpush1.msra.mxu0 0.0
    %1491 = vmatprep.subr.mxu0 0.0
    %1492 = vmatpush1.msra.mxu0 0.0
    %1493 = vmatprep.subr.mxu0 0.0
    %1494 = vmatpush1.msra.mxu0 0.0
    %1495 = vmatprep.subr.mxu0 0.0
    %1496 = vmatpush1.msra.mxu0 0.0
    %1497 = vmatprep.subr.mxu0 0.0
    %1498 = vmatpush1.msra.mxu0 0.0
    %1499 = vmatprep.subr.mxu0 0.0
    %1500 = vmatpush1.msra.mxu0 0.0
    %1501 = vmatprep.subr.mxu0 0.0
    %1502 = vmatpush1.msra.mxu0 0.0
    %1503 = vmatprep.subr.mxu0 0.0
    %1504 = vmatpush1.msra.mxu0 0.0
    %1505 = vmatprep.subr.mxu0 0.0
    %1506 = vmatpush1.msra.mxu0 0.0
    %1507 = vmatprep.subr.mxu0 0.0
    %1508 = vmatpush1.msra.mxu0 0.0
    %1509 = vmatprep.subr.mxu0 0.0
    %1510 = vmatpush1.msra.mxu0 0.0
    %1511 = vmatprep.subr.mxu0 0.0
    %1512 = vmatpush1.msra.mxu0 0.0
    %1513 = vmatprep.subr.mxu0 0.0
    %1514 = vmatpush1.msra.mxu0 0.0
    %1515 = vmatprep.subr.mxu0 0.0
    %1516 = vmatpush1.msra.mxu0 0.0
    %1517 = vmatprep.subr.mxu0 0.0
    %1518 = vmatpush1.msra.mxu0 0.0
    %1519 = vmatprep.subr.mxu0 0.0
    %1520 = vmatpush1.msra.mxu0 0.0
    %1521 = vmatprep.mubr.f32.mxu0 0.0
    %1522 = vmatmul.mubr.f32.gmra.mrb[0].mxu0 %v1449
    %v1523 = vpop.f32.mrb[0].mxu0
    %v1524 = vadd.f32 0.0, %v1523
    %v1525 = vpop.f32.mrb[0].mxu0
    %1526 = vmatprep.mubr.f32.mxu0 0.0
    %1527 = vmatmul.mubr.f32.gmra.mrb[0].mxu0 %v1452
    %v1528 = vpop.f32.mrb[0].mxu0
    %v1529 = vadd.f32 0.0, %v1528
    %v1530 = vpop.f32.mrb[0].mxu0
    %1531 = vmatprep.mubr.f32.mxu0 0.0
    %1532 = vmatmul.mubr.f32.gmra.mrb[0].mxu0 %v1455
    %v1533 = vpop.f32.mrb[0].mxu0
    %v1534 = vadd.f32 0.0, %v1533
    %v1535 = vpop.f32.mrb[0].mxu0
    %1536 = vdwg.mxu0
    %v1537 = vadd.f32 %v1356, %v1524
    %v1538 = vadd.f32 %v1357, %v1529
    %v1539 = vadd.f32 %v1358, %v1534
    %s1540 = scalar_lea.vmem %s4, 168
    %v1541 = vld [vmem:[%s1540] sm:$0xff]
    %v1542 = vld [vmem:[%s1540 + $0x8] sm:$0xff]
    %v1543 = vld [vmem:[%s1540 + $0x10] sm:$0x3]
    %1544 = vmatprep.subr.mxu0 0.0
    %1545 = vmatpush1.msra.mxu0 %v264
    %1546 = vmatprep.subr.mxu0 0.0
    %1547 = vmatpush1.msra.mxu0 %v265
    %1548 = vmatprep.subr.mxu0 0.0
    %1549 = vmatpush1.msra.mxu0 %v266
    %1550 = vmatprep.subr.mxu0 0.0
    %1551 = vmatpush1.msra.mxu0 %v267
    %1552 = vmatprep.subr.mxu0 0.0
    %1553 = vmatpush1.msra.mxu0 %v268
    %1554 = vmatprep.subr.mxu0 0.0
    %1555 = vmatpush1.msra.mxu0 %v269
    %1556 = vmatprep.subr.mxu0 0.0
    %1557 = vmatpush1.msra.mxu0 %v270
    %1558 = vmatprep.subr.mxu0 0.0
    %1559 = vmatpush1.msra.mxu0 %v271
    %1560 = vmatprep.subr.mxu0 0.0
    %1561 = vmatpush1.msra.mxu0 %v272
    %1562 = vmatprep.subr.mxu0 0.0
    %1563 = vmatpush1.msra.mxu0 %v273
    %1564 = vmatprep.subr.mxu0 0.0
    %1565 = vmatpush1.msra.mxu0 %v274
    %1566 = vmatprep.subr.mxu0 0.0
    %1567 = vmatpush1.msra.mxu0 %v275
    %1568 = vmatprep.subr.mxu0 0.0
    %1569 = vmatpush1.msra.mxu0 %v276
    %1570 = vmatprep.subr.mxu0 0.0
    %1571 = vmatpush1.msra.mxu0 %v277
    %1572 = vmatprep.subr.mxu0 0.0
    %1573 = vmatpush1.msra.mxu0 %v278
    %1574 = vmatprep.subr.mxu0 0.0
    %1575 = vmatpush1.msra.mxu0 %v279
    %1576 = vmatprep.subr.mxu0 0.0
    %1577 = vmatpush1.msra.mxu0 0.0
    %1578 = vmatprep.subr.mxu0 0.0
    %1579 = vmatpush1.msra.mxu0 0.0
    %1580 = vmatprep.subr.mxu0 0.0
    %1581 = vmatpush1.msra.mxu0 0.0
    %1582 = vmatprep.subr.mxu0 0.0
    %1583 = vmatpush1.msra.mxu0 0.0
    %1584 = vmatprep.subr.mxu0 0.0
    %1585 = vmatpush1.msra.mxu0 0.0
    %1586 = vmatprep.subr.mxu0 0.0
    %1587 = vmatpush1.msra.mxu0 0.0
    %1588 = vmatprep.subr.mxu0 0.0
    %1589 = vmatpush1.msra.mxu0 0.0
    %1590 = vmatprep.subr.mxu0 0.0
    %1591 = vmatpush1.msra.mxu0 0.0
    %1592 = vmatprep.subr.mxu0 0.0
    %1593 = vmatpush1.msra.mxu0 0.0
    %1594 = vmatprep.subr.mxu0 0.0
    %1595 = vmatpush1.msra.mxu0 0.0
    %1596 = vmatprep.subr.mxu0 0.0
    %1597 = vmatpush1.msra.mxu0 0.0
    %1598 = vmatprep.subr.mxu0 0.0
    %1599 = vmatpush1.msra.mxu0 0.0
    %1600 = vmatprep.subr.mxu0 0.0
    %1601 = vmatpush1.msra.mxu0 0.0
    %1602 = vmatprep.subr.mxu0 0.0
    %1603 = vmatpush1.msra.mxu0 0.0
    %1604 = vmatprep.subr.mxu0 0.0
    %1605 = vmatpush1.msra.mxu0 0.0
    %1606 = vmatprep.subr.mxu0 0.0
    %1607 = vmatpush1.msra.mxu0 0.0
    %1608 = vmatprep.mubr.f32.mxu0 0.0
    %1609 = vmatmul.mubr.f32.gmra.mrb[0].mxu0 %v1541
    %v1610 = vpop.f32.mrb[0].mxu0
    %v1611 = vadd.f32 0.0, %v1610
    %v1612 = vpop.f32.mrb[0].mxu0
    %1613 = vmatprep.mubr.f32.mxu0 0.0
    %1614 = vmatmul.mubr.f32.gmra.mrb[0].mxu0 %v1542
    %v1615 = vpop.f32.mrb[0].mxu0
    %v1616 = vadd.f32 0.0, %v1615
    %v1617 = vpop.f32.mrb[0].mxu0
    %1618 = vmatprep.mubr.f32.mxu0 0.0
    %1619 = vmatmul.mubr.f32.gmra.mrb[0].mxu0 %v1543
    %v1620 = vpop.f32.mrb[0].mxu0
    %v1621 = vadd.f32 0.0, %v1620
    %v1622 = vpop.f32.mrb[0].mxu0
    %1623 = vdwg.mxu0
    %s1624 = scalar_lea.vmem %s5, 224
    %v1625 = vld [vmem:[%s1624] sm:$0xff]
    %v1626 = vld [vmem:[%s1624 + $0x8] sm:$0xff]
    %v1627 = vld [vmem:[%s1624 + $0x10] sm:$0xff]
    %v1628 = vld [vmem:[%s1624 + $0x18] sm:$0xff]
    %v1630 = vsel %vm456, %v1611, 0
    %v1633 = vsel %vm456, %v1616, 0
    %v1636 = vsel %vm456, %v1621, 0
    %1638 = vmatprep.subr.mxu0 0.0
    %1639 = vmatpush1.msra.mxu0 %v1625
    %1640 = vmatprep.subr.mxu0 0.0
    %1641 = vmatpush1.msra.mxu0 %v1626
    %1642 = vmatprep.subr.mxu0 0.0
    %1643 = vmatpush1.msra.mxu0 %v1627
    %1644 = vmatprep.subr.mxu0 0.0
    %1645 = vmatpush1.msra.mxu0 %v1628
    %1646 = vmatprep.subr.mxu0 0.0
    %1647 = vmatpush1.msra.mxu0 0.0
    %1648 = vmatprep.subr.mxu0 0.0
    %1649 = vmatpush1.msra.mxu0 0.0
    %1650 = vmatprep.subr.mxu0 0.0
    %1651 = vmatpush1.msra.mxu0 0.0
    %1652 = vmatprep.subr.mxu0 0.0
    %1653 = vmatpush1.msra.mxu0 0.0
    %1654 = vmatprep.subr.mxu0 0.0
    %1655 = vmatpush1.msra.mxu0 0.0
    %1656 = vmatprep.subr.mxu0 0.0
    %1657 = vmatpush1.msra.mxu0 0.0
    %1658 = vmatprep.subr.mxu0 0.0
    %1659 = vmatpush1.msra.mxu0 0.0
    %1660 = vmatprep.subr.mxu0 0.0
    %1661 = vmatpush1.msra.mxu0 0.0
    %1662 = vmatprep.subr.mxu0 0.0
    %1663 = vmatpush1.msra.mxu0 0.0
    %1664 = vmatprep.subr.mxu0 0.0
    %1665 = vmatpush1.msra.mxu0 0.0
    %1666 = vmatprep.subr.mxu0 0.0
    %1667 = vmatpush1.msra.mxu0 0.0
    %1668 = vmatprep.subr.mxu0 0.0
    %1669 = vmatpush1.msra.mxu0 0.0
    %1670 = vmatprep.subr.mxu0 0.0
    %1671 = vmatpush1.msra.mxu0 0.0
    %1672 = vmatprep.subr.mxu0 0.0
    %1673 = vmatpush1.msra.mxu0 0.0
    %1674 = vmatprep.subr.mxu0 0.0
    %1675 = vmatpush1.msra.mxu0 0.0
    %1676 = vmatprep.subr.mxu0 0.0
    %1677 = vmatpush1.msra.mxu0 0.0
    %1678 = vmatprep.subr.mxu0 0.0
    %1679 = vmatpush1.msra.mxu0 0.0
    %1680 = vmatprep.subr.mxu0 0.0
    %1681 = vmatpush1.msra.mxu0 0.0
    %1682 = vmatprep.subr.mxu0 0.0
    %1683 = vmatpush1.msra.mxu0 0.0
    %1684 = vmatprep.subr.mxu0 0.0
    %1685 = vmatpush1.msra.mxu0 0.0
    %1686 = vmatprep.subr.mxu0 0.0
    %1687 = vmatpush1.msra.mxu0 0.0
    %1688 = vmatprep.subr.mxu0 0.0
    %1689 = vmatpush1.msra.mxu0 0.0
    %1690 = vmatprep.subr.mxu0 0.0
    %1691 = vmatpush1.msra.mxu0 0.0
    %1692 = vmatprep.subr.mxu0 0.0
    %1693 = vmatpush1.msra.mxu0 0.0
    %1694 = vmatprep.subr.mxu0 0.0
    %1695 = vmatpush1.msra.mxu0 0.0
    %1696 = vmatprep.subr.mxu0 0.0
    %1697 = vmatpush1.msra.mxu0 0.0
    %1698 = vmatprep.subr.mxu0 0.0
    %1699 = vmatpush1.msra.mxu0 0.0
    %1700 = vmatprep.subr.mxu0 0.0
    %1701 = vmatpush1.msra.mxu0 0.0
    %1702 = vmatprep.mubr.f32.mxu0 0.0
    %1703 = vmatmul.mubr.f32.gmra.mrb[0].mxu0 %v1630
    %v1704 = vpop.f32.mrb[0].mxu0
    %v1705 = vadd.f32 0.0, %v1704
    %v1706 = vpop.f32.mrb[0].mxu0
    %1707 = vmatprep.mubr.f32.mxu0 0.0
    %1708 = vmatmul.mubr.f32.gmra.mrb[0].mxu0 %v1633
    %v1709 = vpop.f32.mrb[0].mxu0
    %v1710 = vadd.f32 0.0, %v1709
    %v1711 = vpop.f32.mrb[0].mxu0
    %1712 = vmatprep.mubr.f32.mxu0 0.0
    %1713 = vmatmul.mubr.f32.gmra.mrb[0].mxu0 %v1636
    %v1714 = vpop.f32.mrb[0].mxu0
    %v1715 = vadd.f32 0.0, %v1714
    %v1716 = vpop.f32.mrb[0].mxu0
    %1717 = vdwg.mxu0
    %v1718 = vadd.f32 %v1537, %v1705
    %v1719 = vadd.f32 %v1538, %v1710
    %v1720 = vadd.f32 %v1539, %v1715
    %s1721 = scalar_lea.vmem %s4, 192
    %v1722 = vld [vmem:[%s1721] sm:$0xff]
    %v1723 = vld [vmem:[%s1721 + $0x8] sm:$0xff]
    %v1724 = vld [vmem:[%s1721 + $0x10] sm:$0x3]
    %1725 = vmatprep.subr.mxu0 0.0
    %1726 = vmatpush1.msra.mxu0 %v264
    %1727 = vmatprep.subr.mxu0 0.0
    %1728 = vmatpush1.msra.mxu0 %v265
    %1729 = vmatprep.subr.mxu0 0.0
    %1730 = vmatpush1.msra.mxu0 %v266
    %1731 = vmatprep.subr.mxu0 0.0
    %1732 = vmatpush1.msra.mxu0 %v267
    %1733 = vmatprep.subr.mxu0 0.0
    %1734 = vmatpush1.msra.mxu0 %v268
    %1735 = vmatprep.subr.mxu0 0.0
    %1736 = vmatpush1.msra.mxu0 %v269
    %1737 = vmatprep.subr.mxu0 0.0
    %1738 = vmatpush1.msra.mxu0 %v270
    %1739 = vmatprep.subr.mxu0 0.0
    %1740 = vmatpush1.msra.mxu0 %v271
    %1741 = vmatprep.subr.mxu0 0.0
    %1742 = vmatpush1.msra.mxu0 %v272
    %1743 = vmatprep.subr.mxu0 0.0
    %1744 = vmatpush1.msra.mxu0 %v273
    %1745 = vmatprep.subr.mxu0 0.0
    %1746 = vmatpush1.msra.mxu0 %v274
    %1747 = vmatprep.subr.mxu0 0.0
    %1748 = vmatpush1.msra.mxu0 %v275
    %1749 = vmatprep.subr.mxu0 0.0
    %1750 = vmatpush1.msra.mxu0 %v276
    %1751 = vmatprep.subr.mxu0 0.0
    %1752 = vmatpush1.msra.mxu0 %v277
    %1753 = vmatprep.subr.mxu0 0.0
    %1754 = vmatpush1.msra.mxu0 %v278
    %1755 = vmatprep.subr.mxu0 0.0
    %1756 = vmatpush1.msra.mxu0 %v279
    %1757 = vmatprep.subr.mxu0 0.0
    %1758 = vmatpush1.msra.mxu0 0.0
    %1759 = vmatprep.subr.mxu0 0.0
    %1760 = vmatpush1.msra.mxu0 0.0
    %1761 = vmatprep.subr.mxu0 0.0
    %1762 = vmatpush1.msra.mxu0 0.0
    %1763 = vmatprep.subr.mxu0 0.0
    %1764 = vmatpush1.msra.mxu0 0.0
    %1765 = vmatprep.subr.mxu0 0.0
    %1766 = vmatpush1.msra.mxu0 0.0
    %1767 = vmatprep.subr.mxu0 0.0
    %1768 = vmatpush1.msra.mxu0 0.0
    %1769 = vmatprep.subr.mxu0 0.0
    %1770 = vmatpush1.msra.mxu0 0.0
    %1771 = vmatprep.subr.mxu0 0.0
    %1772 = vmatpush1.msra.mxu0 0.0
    %1773 = vmatprep.subr.mxu0 0.0
    %1774 = vmatpush1.msra.mxu0 0.0
    %1775 = vmatprep.subr.mxu0 0.0
    %1776 = vmatpush1.msra.mxu0 0.0
    %1777 = vmatprep.subr.mxu0 0.0
    %1778 = vmatpush1.msra.mxu0 0.0
    %1779 = vmatprep.subr.mxu0 0.0
    %1780 = vmatpush1.msra.mxu0 0.0
    %1781 = vmatprep.subr.mxu0 0.0
    %1782 = vmatpush1.msra.mxu0 0.0
    %1783 = vmatprep.subr.mxu0 0.0
    %1784 = vmatpush1.msra.mxu0 0.0
    %1785 = vmatprep.subr.mxu0 0.0
    %1786 = vmatpush1.msra.mxu0 0.0
    %1787 = vmatprep.subr.mxu0 0.0
    %1788 = vmatpush1.msra.mxu0 0.0
    %1789 = vmatprep.mubr.f32.mxu0 0.0
    %1790 = vmatmul.mubr.f32.gmra.mrb[0].mxu0 %v1722
    %v1791 = vpop.f32.mrb[0].mxu0
    %v1792 = vadd.f32 0.0, %v1791
    %v1793 = vpop.f32.mrb[0].mxu0
    %1794 = vmatprep.mubr.f32.mxu0 0.0
    %1795 = vmatmul.mubr.f32.gmra.mrb[0].mxu0 %v1723
    %v1796 = vpop.f32.mrb[0].mxu0
    %v1797 = vadd.f32 0.0, %v1796
    %v1798 = vpop.f32.mrb[0].mxu0
    %1799 = vmatprep.mubr.f32.mxu0 0.0
    %1800 = vmatmul.mubr.f32.gmra.mrb[0].mxu0 %v1724
    %v1801 = vpop.f32.mrb[0].mxu0
    %v1802 = vadd.f32 0.0, %v1801
    %v1803 = vpop.f32.mrb[0].mxu0
    %1804 = vdwg.mxu0
    %s1805 = scalar_lea.vmem %s5, 256
    %v1806 = vld [vmem:[%s1805] sm:$0xff]
    %v1807 = vld [vmem:[%s1805 + $0x8] sm:$0xff]
    %v1808 = vld [vmem:[%s1805 + $0x10] sm:$0xff]
    %v1809 = vld [vmem:[%s1805 + $0x18] sm:$0xff]
    %v1811 = vsel %vm456, %v1792, 0
    %v1814 = vsel %vm456, %v1797, 0
    %v1817 = vsel %vm456, %v1802, 0
    %1819 = vmatprep.subr.mxu0 0.0
    %1820 = vmatpush1.msra.mxu0 %v1806
    %1821 = vmatprep.subr.mxu0 0.0
    %1822 = vmatpush1.msra.mxu0 %v1807
    %1823 = vmatprep.subr.mxu0 0.0
    %1824 = vmatpush1.msra.mxu0 %v1808
    %1825 = vmatprep.subr.mxu0 0.0
    %1826 = vmatpush1.msra.mxu0 %v1809
    %1827 = vmatprep.subr.mxu0 0.0
    %1828 = vmatpush1.msra.mxu0 0.0
    %1829 = vmatprep.subr.mxu0 0.0
    %1830 = vmatpush1.msra.mxu0 0.0
    %1831 = vmatprep.subr.mxu0 0.0
    %1832 = vmatpush1.msra.mxu0 0.0
    %1833 = vmatprep.subr.mxu0 0.0
    %1834 = vmatpush1.msra.mxu0 0.0
    %1835 = vmatprep.subr.mxu0 0.0
    %1836 = vmatpush1.msra.mxu0 0.0
    %1837 = vmatprep.subr.mxu0 0.0
    %1838 = vmatpush1.msra.mxu0 0.0
    %1839 = vmatprep.subr.mxu0 0.0
    %1840 = vmatpush1.msra.mxu0 0.0
    %1841 = vmatprep.subr.mxu0 0.0
    %1842 = vmatpush1.msra.mxu0 0.0
    %1843 = vmatprep.subr.mxu0 0.0
    %1844 = vmatpush1.msra.mxu0 0.0
    %1845 = vmatprep.subr.mxu0 0.0
    %1846 = vmatpush1.msra.mxu0 0.0
    %1847 = vmatprep.subr.mxu0 0.0
    %1848 = vmatpush1.msra.mxu0 0.0
    %1849 = vmatprep.subr.mxu0 0.0
    %1850 = vmatpush1.msra.mxu0 0.0
    %1851 = vmatprep.subr.mxu0 0.0
    %1852 = vmatpush1.msra.mxu0 0.0
    %1853 = vmatprep.subr.mxu0 0.0
    %1854 = vmatpush1.msra.mxu0 0.0
    %1855 = vmatprep.subr.mxu0 0.0
    %1856 = vmatpush1.msra.mxu0 0.0
    %1857 = vmatprep.subr.mxu0 0.0
    %1858 = vmatpush1.msra.mxu0 0.0
    %1859 = vmatprep.subr.mxu0 0.0
    %1860 = vmatpush1.msra.mxu0 0.0
    %1861 = vmatprep.subr.mxu0 0.0
    %1862 = vmatpush1.msra.mxu0 0.0
    %1863 = vmatprep.subr.mxu0 0.0
    %1864 = vmatpush1.msra.mxu0 0.0
    %1865 = vmatprep.subr.mxu0 0.0
    %1866 = vmatpush1.msra.mxu0 0.0
    %1867 = vmatprep.subr.mxu0 0.0
    %1868 = vmatpush1.msra.mxu0 0.0
    %1869 = vmatprep.subr.mxu0 0.0
    %1870 = vmatpush1.msra.mxu0 0.0
    %1871 = vmatprep.subr.mxu0 0.0
    %1872 = vmatpush1.msra.mxu0 0.0
    %1873 = vmatprep.subr.mxu0 0.0
    %1874 = vmatpush1.msra.mxu0 0.0
    %1875 = vmatprep.subr.mxu0 0.0
    %1876 = vmatpush1.msra.mxu0 0.0
    %1877 = vmatprep.subr.mxu0 0.0
    %1878 = vmatpush1.msra.mxu0 0.0
    %1879 = vmatprep.subr.mxu0 0.0
    %1880 = vmatpush1.msra.mxu0 0.0
    %1881 = vmatprep.subr.mxu0 0.0
    %1882 = vmatpush1.msra.mxu0 0.0
    %1883 = vmatprep.mubr.f32.mxu0 0.0
    %1884 = vmatmul.mubr.f32.gmra.mrb[0].mxu0 %v1811
    %v1885 = vpop.f32.mrb[0].mxu0
    %v1886 = vadd.f32 0.0, %v1885
    %v1887 = vpop.f32.mrb[0].mxu0
    %1888 = vmatprep.mubr.f32.mxu0 0.0
    %1889 = vmatmul.mubr.f32.gmra.mrb[0].mxu0 %v1814
    %v1890 = vpop.f32.mrb[0].mxu0
    %v1891 = vadd.f32 0.0, %v1890
    %v1892 = vpop.f32.mrb[0].mxu0
    %1893 = vmatprep.mubr.f32.mxu0 0.0
    %1894 = vmatmul.mubr.f32.gmra.mrb[0].mxu0 %v1817
    %v1895 = vpop.f32.mrb[0].mxu0
    %v1896 = vadd.f32 0.0, %v1895
    %v1897 = vpop.f32.mrb[0].mxu0
    %1898 = vdwg.mxu0
    %v1899 = vadd.f32 %v1718, %v1886
    %v1900 = vadd.f32 %v1719, %v1891
    %v1901 = vadd.f32 %v1720, %v1896
    %s1902 = scalar_lea.vmem %s4, 216
    %v1903 = vld [vmem:[%s1902] sm:$0xff]
    %v1904 = vld [vmem:[%s1902 + $0x8] sm:$0xff]
    %v1905 = vld [vmem:[%s1902 + $0x10] sm:$0x3]
    %1906 = vmatprep.subr.mxu0 0.0
    %1907 = vmatpush1.msra.mxu0 %v264
    %1908 = vmatprep.subr.mxu0 0.0
    %1909 = vmatpush1.msra.mxu0 %v265
    %1910 = vmatprep.subr.mxu0 0.0
    %1911 = vmatpush1.msra.mxu0 %v266
    %1912 = vmatprep.subr.mxu0 0.0
    %1913 = vmatpush1.msra.mxu0 %v267
    %1914 = vmatprep.subr.mxu0 0.0
    %1915 = vmatpush1.msra.mxu0 %v268
    %1916 = vmatprep.subr.mxu0 0.0
    %1917 = vmatpush1.msra.mxu0 %v269
    %1918 = vmatprep.subr.mxu0 0.0
    %1919 = vmatpush1.msra.mxu0 %v270
    %1920 = vmatprep.subr.mxu0 0.0
    %1921 = vmatpush1.msra.mxu0 %v271
    %1922 = vmatprep.subr.mxu0 0.0
    %1923 = vmatpush1.msra.mxu0 %v272
    %1924 = vmatprep.subr.mxu0 0.0
    %1925 = vmatpush1.msra.mxu0 %v273
    %1926 = vmatprep.subr.mxu0 0.0
    %1927 = vmatpush1.msra.mxu0 %v274
    %1928 = vmatprep.subr.mxu0 0.0
    %1929 = vmatpush1.msra.mxu0 %v275
    %1930 = vmatprep.subr.mxu0 0.0
    %1931 = vmatpush1.msra.mxu0 %v276
    %1932 = vmatprep.subr.mxu0 0.0
    %1933 = vmatpush1.msra.mxu0 %v277
    %1934 = vmatprep.subr.mxu0 0.0
    %1935 = vmatpush1.msra.mxu0 %v278
    %1936 = vmatprep.subr.mxu0 0.0
    %1937 = vmatpush1.msra.mxu0 %v279
    %1938 = vmatprep.subr.mxu0 0.0
    %1939 = vmatpush1.msra.mxu0 0.0
    %1940 = vmatprep.subr.mxu0 0.0
    %1941 = vmatpush1.msra.mxu0 0.0
    %1942 = vmatprep.subr.mxu0 0.0
    %1943 = vmatpush1.msra.mxu0 0.0
    %1944 = vmatprep.subr.mxu0 0.0
    %1945 = vmatpush1.msra.mxu0 0.0
    %1946 = vmatprep.subr.mxu0 0.0
    %1947 = vmatpush1.msra.mxu0 0.0
    %1948 = vmatprep.subr.mxu0 0.0
    %1949 = vmatpush1.msra.mxu0 0.0
    %1950 = vmatprep.subr.mxu0 0.0
    %1951 = vmatpush1.msra.mxu0 0.0
    %1952 = vmatprep.subr.mxu0 0.0
    %1953 = vmatpush1.msra.mxu0 0.0
    %1954 = vmatprep.subr.mxu0 0.0
    %1955 = vmatpush1.msra.mxu0 0.0
    %1956 = vmatprep.subr.mxu0 0.0
    %1957 = vmatpush1.msra.mxu0 0.0
    %1958 = vmatprep.subr.mxu0 0.0
    %1959 = vmatpush1.msra.mxu0 0.0
    %1960 = vmatprep.subr.mxu0 0.0
    %1961 = vmatpush1.msra.mxu0 0.0
    %1962 = vmatprep.subr.mxu0 0.0
    %1963 = vmatpush1.msra.mxu0 0.0
    %1964 = vmatprep.subr.mxu0 0.0
    %1965 = vmatpush1.msra.mxu0 0.0
    %1966 = vmatprep.subr.mxu0 0.0
    %1967 = vmatpush1.msra.mxu0 0.0
    %1968 = vmatprep.subr.mxu0 0.0
    %1969 = vmatpush1.msra.mxu0 0.0
    %1970 = vmatprep.mubr.f32.mxu0 0.0
    %1971 = vmatmul.mubr.f32.gmra.mrb[0].mxu0 %v1903
    %v1972 = vpop.f32.mrb[0].mxu0
    %v1973 = vadd.f32 0.0, %v1972
    %v1974 = vpop.f32.mrb[0].mxu0
    %1975 = vmatprep.mubr.f32.mxu0 0.0
    %1976 = vmatmul.mubr.f32.gmra.mrb[0].mxu0 %v1904
    %v1977 = vpop.f32.mrb[0].mxu0
    %v1978 = vadd.f32 0.0, %v1977
    %v1979 = vpop.f32.mrb[0].mxu0
    %1980 = vmatprep.mubr.f32.mxu0 0.0
    %1981 = vmatmul.mubr.f32.gmra.mrb[0].mxu0 %v1905
    %v1982 = vpop.f32.mrb[0].mxu0
    %v1983 = vadd.f32 0.0, %v1982
    %v1984 = vpop.f32.mrb[0].mxu0
    %1985 = vdwg.mxu0
    %s1986 = scalar_lea.vmem %s5, 288
    %v1987 = vld [vmem:[%s1986] sm:$0xff]
    %v1988 = vld [vmem:[%s1986 + $0x8] sm:$0xff]
    %v1989 = vld [vmem:[%s1986 + $0x10] sm:$0xff]
    %v1990 = vld [vmem:[%s1986 + $0x18] sm:$0xff]
    %v1992 = vsel %vm456, %v1973, 0
    %v1995 = vsel %vm456, %v1978, 0
    %v1998 = vsel %vm456, %v1983, 0
    %2000 = vmatprep.subr.mxu0 0.0
    %2001 = vmatpush1.msra.mxu0 %v1987
    %2002 = vmatprep.subr.mxu0 0.0
    %2003 = vmatpush1.msra.mxu0 %v1988
    %2004 = vmatprep.subr.mxu0 0.0
    %2005 = vmatpush1.msra.mxu0 %v1989
    %2006 = vmatprep.subr.mxu0 0.0
    %2007 = vmatpush1.msra.mxu0 %v1990
    %2008 = vmatprep.subr.mxu0 0.0
    %2009 = vmatpush1.msra.mxu0 0.0
    %2010 = vmatprep.subr.mxu0 0.0
    %2011 = vmatpush1.msra.mxu0 0.0
    %2012 = vmatprep.subr.mxu0 0.0
    %2013 = vmatpush1.msra.mxu0 0.0
    %2014 = vmatprep.subr.mxu0 0.0
    %2015 = vmatpush1.msra.mxu0 0.0
    %2016 = vmatprep.subr.mxu0 0.0
    %2017 = vmatpush1.msra.mxu0 0.0
    %2018 = vmatprep.subr.mxu0 0.0
    %2019 = vmatpush1.msra.mxu0 0.0
    %2020 = vmatprep.subr.mxu0 0.0
    %2021 = vmatpush1.msra.mxu0 0.0
    %2022 = vmatprep.subr.mxu0 0.0
    %2023 = vmatpush1.msra.mxu0 0.0
    %2024 = vmatprep.subr.mxu0 0.0
    %2025 = vmatpush1.msra.mxu0 0.0
    %2026 = vmatprep.subr.mxu0 0.0
    %2027 = vmatpush1.msra.mxu0 0.0
    %2028 = vmatprep.subr.mxu0 0.0
    %2029 = vmatpush1.msra.mxu0 0.0
    %2030 = vmatprep.subr.mxu0 0.0
    %2031 = vmatpush1.msra.mxu0 0.0
    %2032 = vmatprep.subr.mxu0 0.0
    %2033 = vmatpush1.msra.mxu0 0.0
    %2034 = vmatprep.subr.mxu0 0.0
    %2035 = vmatpush1.msra.mxu0 0.0
    %2036 = vmatprep.subr.mxu0 0.0
    %2037 = vmatpush1.msra.mxu0 0.0
    %2038 = vmatprep.subr.mxu0 0.0
    %2039 = vmatpush1.msra.mxu0 0.0
    %2040 = vmatprep.subr.mxu0 0.0
    %2041 = vmatpush1.msra.mxu0 0.0
    %2042 = vmatprep.subr.mxu0 0.0
    %2043 = vmatpush1.msra.mxu0 0.0
    %2044 = vmatprep.subr.mxu0 0.0
    %2045 = vmatpush1.msra.mxu0 0.0
    %2046 = vmatprep.subr.mxu0 0.0
    %2047 = vmatpush1.msra.mxu0 0.0
    %2048 = vmatprep.subr.mxu0 0.0
    %2049 = vmatpush1.msra.mxu0 0.0
    %2050 = vmatprep.subr.mxu0 0.0
    %2051 = vmatpush1.msra.mxu0 0.0
    %2052 = vmatprep.subr.mxu0 0.0
    %2053 = vmatpush1.msra.mxu0 0.0
    %2054 = vmatprep.subr.mxu0 0.0
    %2055 = vmatpush1.msra.mxu0 0.0
    %2056 = vmatprep.subr.mxu0 0.0
    %2057 = vmatpush1.msra.mxu0 0.0
    %2058 = vmatprep.subr.mxu0 0.0
    %2059 = vmatpush1.msra.mxu0 0.0
    %2060 = vmatprep.subr.mxu0 0.0
    %2061 = vmatpush1.msra.mxu0 0.0
    %2062 = vmatprep.subr.mxu0 0.0
    %2063 = vmatpush1.msra.mxu0 0.0
    %2064 = vmatprep.mubr.f32.mxu0 0.0
    %2065 = vmatmul.mubr.f32.gmra.mrb[0].mxu0 %v1992
    %v2066 = vpop.f32.mrb[0].mxu0
    %v2067 = vadd.f32 0.0, %v2066
    %v2068 = vpop.f32.mrb[0].mxu0
    %2069 = vmatprep.mubr.f32.mxu0 0.0
    %2070 = vmatmul.mubr.f32.gmra.mrb[0].mxu0 %v1995
    %v2071 = vpop.f32.mrb[0].mxu0
    %v2072 = vadd.f32 0.0, %v2071
    %v2073 = vpop.f32.mrb[0].mxu0
    %2074 = vmatprep.mubr.f32.mxu0 0.0
    %2075 = vmatmul.mubr.f32.gmra.mrb[0].mxu0 %v1998
    %v2076 = vpop.f32.mrb[0].mxu0
    %v2077 = vadd.f32 0.0, %v2076
    %v2078 = vpop.f32.mrb[0].mxu0
    %2079 = vdwg.mxu0
    %v2080 = vadd.f32 %v1899, %v2067
    %v2081 = vadd.f32 %v1900, %v2072
    %v2082 = vadd.f32 %v1901, %v2077
    %s2083 = scalar_lea.vmem %s4, 240
    %v2084 = vld [vmem:[%s2083] sm:$0xff]
    %v2085 = vld [vmem:[%s2083 + $0x8] sm:$0xff]
    %v2086 = vld [vmem:[%s2083 + $0x10] sm:$0x3]
    %2087 = vmatprep.subr.mxu0 0.0
    %2088 = vmatpush1.msra.mxu0 %v264
    %2089 = vmatprep.subr.mxu0 0.0
    %2090 = vmatpush1.msra.mxu0 %v265
    %2091 = vmatprep.subr.mxu0 0.0
    %2092 = vmatpush1.msra.mxu0 %v266
    %2093 = vmatprep.subr.mxu0 0.0
    %2094 = vmatpush1.msra.mxu0 %v267
    %2095 = vmatprep.subr.mxu0 0.0
    %2096 = vmatpush1.msra.mxu0 %v268
    %2097 = vmatprep.subr.mxu0 0.0
    %2098 = vmatpush1.msra.mxu0 %v269
    %2099 = vmatprep.subr.mxu0 0.0
    %2100 = vmatpush1.msra.mxu0 %v270
    %2101 = vmatprep.subr.mxu0 0.0
    %2102 = vmatpush1.msra.mxu0 %v271
    %2103 = vmatprep.subr.mxu0 0.0
    %2104 = vmatpush1.msra.mxu0 %v272
    %2105 = vmatprep.subr.mxu0 0.0
    %2106 = vmatpush1.msra.mxu0 %v273
    %2107 = vmatprep.subr.mxu0 0.0
    %2108 = vmatpush1.msra.mxu0 %v274
    %2109 = vmatprep.subr.mxu0 0.0
    %2110 = vmatpush1.msra.mxu0 %v275
    %2111 = vmatprep.subr.mxu0 0.0
    %2112 = vmatpush1.msra.mxu0 %v276
    %2113 = vmatprep.subr.mxu0 0.0
    %2114 = vmatpush1.msra.mxu0 %v277
    %2115 = vmatprep.subr.mxu0 0.0
    %2116 = vmatpush1.msra.mxu0 %v278
    %2117 = vmatprep.subr.mxu0 0.0
    %2118 = vmatpush1.msra.mxu0 %v279
    %2119 = vmatprep.subr.mxu0 0.0
    %2120 = vmatpush1.msra.mxu0 0.0
    %2121 = vmatprep.subr.mxu0 0.0
    %2122 = vmatpush1.msra.mxu0 0.0
    %2123 = vmatprep.subr.mxu0 0.0
    %2124 = vmatpush1.msra.mxu0 0.0
    %2125 = vmatprep.subr.mxu0 0.0
    %2126 = vmatpush1.msra.mxu0 0.0
    %2127 = vmatprep.subr.mxu0 0.0
    %2128 = vmatpush1.msra.mxu0 0.0
    %2129 = vmatprep.subr.mxu0 0.0
    %2130 = vmatpush1.msra.mxu0 0.0
    %2131 = vmatprep.subr.mxu0 0.0
    %2132 = vmatpush1.msra.mxu0 0.0
    %2133 = vmatprep.subr.mxu0 0.0
    %2134 = vmatpush1.msra.mxu0 0.0
    %2135 = vmatprep.subr.mxu0 0.0
    %2136 = vmatpush1.msra.mxu0 0.0
    %2137 = vmatprep.subr.mxu0 0.0
    %2138 = vmatpush1.msra.mxu0 0.0
    %2139 = vmatprep.subr.mxu0 0.0
    %2140 = vmatpush1.msra.mxu0 0.0
    %2141 = vmatprep.subr.mxu0 0.0
    %2142 = vmatpush1.msra.mxu0 0.0
    %2143 = vmatprep.subr.mxu0 0.0
    %2144 = vmatpush1.msra.mxu0 0.0
    %2145 = vmatprep.subr.mxu0 0.0
    %2146 = vmatpush1.msra.mxu0 0.0
    %2147 = vmatprep.subr.mxu0 0.0
    %2148 = vmatpush1.msra.mxu0 0.0
    %2149 = vmatprep.subr.mxu0 0.0
    %2150 = vmatpush1.msra.mxu0 0.0
    %2151 = vmatprep.mubr.f32.mxu0 0.0
    %2152 = vmatmul.mubr.f32.gmra.mrb[0].mxu0 %v2084
    %v2153 = vpop.f32.mrb[0].mxu0
    %v2154 = vadd.f32 0.0, %v2153
    %v2155 = vpop.f32.mrb[0].mxu0
    %2156 = vmatprep.mubr.f32.mxu0 0.0
    %2157 = vmatmul.mubr.f32.gmra.mrb[0].mxu0 %v2085
    %v2158 = vpop.f32.mrb[0].mxu0
    %v2159 = vadd.f32 0.0, %v2158
    %v2160 = vpop.f32.mrb[0].mxu0
    %2161 = vmatprep.mubr.f32.mxu0 0.0
    %2162 = vmatmul.mubr.f32.gmra.mrb[0].mxu0 %v2086
    %v2163 = vpop.f32.mrb[0].mxu0
    %v2164 = vadd.f32 0.0, %v2163
    %v2165 = vpop.f32.mrb[0].mxu0
    %2166 = vdwg.mxu0
    %s2167 = scalar_lea.vmem %s5, 320
    %v2168 = vld [vmem:[%s2167] sm:$0xff]
    %v2169 = vld [vmem:[%s2167 + $0x8] sm:$0xff]
    %v2170 = vld [vmem:[%s2167 + $0x10] sm:$0xff]
    %v2171 = vld [vmem:[%s2167 + $0x18] sm:$0xff]
    %v2173 = vsel %vm456, %v2154, 0
    %v2176 = vsel %vm456, %v2159, 0
    %v2179 = vsel %vm456, %v2164, 0
    %2181 = vmatprep.subr.mxu0 0.0
    %2182 = vmatpush1.msra.mxu0 %v2168
    %2183 = vmatprep.subr.mxu0 0.0
    %2184 = vmatpush1.msra.mxu0 %v2169
    %2185 = vmatprep.subr.mxu0 0.0
    %2186 = vmatpush1.msra.mxu0 %v2170
    %2187 = vmatprep.subr.mxu0 0.0
    %2188 = vmatpush1.msra.mxu0 %v2171
    %2189 = vmatprep.subr.mxu0 0.0
    %2190 = vmatpush1.msra.mxu0 0.0
    %2191 = vmatprep.subr.mxu0 0.0
    %2192 = vmatpush1.msra.mxu0 0.0
    %2193 = vmatprep.subr.mxu0 0.0
    %2194 = vmatpush1.msra.mxu0 0.0
    %2195 = vmatprep.subr.mxu0 0.0
    %2196 = vmatpush1.msra.mxu0 0.0
    %2197 = vmatprep.subr.mxu0 0.0
    %2198 = vmatpush1.msra.mxu0 0.0
    %2199 = vmatprep.subr.mxu0 0.0
    %2200 = vmatpush1.msra.mxu0 0.0
    %2201 = vmatprep.subr.mxu0 0.0
    %2202 = vmatpush1.msra.mxu0 0.0
    %2203 = vmatprep.subr.mxu0 0.0
    %2204 = vmatpush1.msra.mxu0 0.0
    %2205 = vmatprep.subr.mxu0 0.0
    %2206 = vmatpush1.msra.mxu0 0.0
    %2207 = vmatprep.subr.mxu0 0.0
    %2208 = vmatpush1.msra.mxu0 0.0
    %2209 = vmatprep.subr.mxu0 0.0
    %2210 = vmatpush1.msra.mxu0 0.0
    %2211 = vmatprep.subr.mxu0 0.0
    %2212 = vmatpush1.msra.mxu0 0.0
    %2213 = vmatprep.subr.mxu0 0.0
    %2214 = vmatpush1.msra.mxu0 0.0
    %2215 = vmatprep.subr.mxu0 0.0
    %2216 = vmatpush1.msra.mxu0 0.0
    %2217 = vmatprep.subr.mxu0 0.0
    %2218 = vmatpush1.msra.mxu0 0.0
    %2219 = vmatprep.subr.mxu0 0.0
    %2220 = vmatpush1.msra.mxu0 0.0
    %2221 = vmatprep.subr.mxu0 0.0
    %2222 = vmatpush1.msra.mxu0 0.0
    %2223 = vmatprep.subr.mxu0 0.0
    %2224 = vmatpush1.msra.mxu0 0.0
    %2225 = vmatprep.subr.mxu0 0.0
    %2226 = vmatpush1.msra.mxu0 0.0
    %2227 = vmatprep.subr.mxu0 0.0
    %2228 = vmatpush1.msra.mxu0 0.0
    %2229 = vmatprep.subr.mxu0 0.0
    %2230 = vmatpush1.msra.mxu0 0.0
    %2231 = vmatprep.subr.mxu0 0.0
    %2232 = vmatpush1.msra.mxu0 0.0
    %2233 = vmatprep.subr.mxu0 0.0
    %2234 = vmatpush1.msra.mxu0 0.0
    %2235 = vmatprep.subr.mxu0 0.0
    %2236 = vmatpush1.msra.mxu0 0.0
    %2237 = vmatprep.subr.mxu0 0.0
    %2238 = vmatpush1.msra.mxu0 0.0
    %2239 = vmatprep.subr.mxu0 0.0
    %2240 = vmatpush1.msra.mxu0 0.0
    %2241 = vmatprep.subr.mxu0 0.0
    %2242 = vmatpush1.msra.mxu0 0.0
    %2243 = vmatprep.subr.mxu0 0.0
    %2244 = vmatpush1.msra.mxu0 0.0
    %2245 = vmatprep.mubr.f32.mxu0 0.0
    %2246 = vmatmul.mubr.f32.gmra.mrb[0].mxu0 %v2173
    %v2247 = vpop.f32.mrb[0].mxu0
    %v2248 = vadd.f32 0.0, %v2247
    %v2249 = vpop.f32.mrb[0].mxu0
    %2250 = vmatprep.mubr.f32.mxu0 0.0
    %2251 = vmatmul.mubr.f32.gmra.mrb[0].mxu0 %v2176
    %v2252 = vpop.f32.mrb[0].mxu0
    %v2253 = vadd.f32 0.0, %v2252
    %v2254 = vpop.f32.mrb[0].mxu0
    %2255 = vmatprep.mubr.f32.mxu0 0.0
    %2256 = vmatmul.mubr.f32.gmra.mrb[0].mxu0 %v2179
    %v2257 = vpop.f32.mrb[0].mxu0
    %v2258 = vadd.f32 0.0, %v2257
    %v2259 = vpop.f32.mrb[0].mxu0
    %2260 = vdwg.mxu0
    %v2261 = vadd.f32 %v2080, %v2248
    %v2262 = vadd.f32 %v2081, %v2253
    %v2263 = vadd.f32 %v2082, %v2258
    %s2264 = scalar_lea.vmem %s4, 264
    %v2265 = vld [vmem:[%s2264] sm:$0xff]
    %v2266 = vld [vmem:[%s2264 + $0x8] sm:$0xff]
    %v2267 = vld [vmem:[%s2264 + $0x10] sm:$0x3]
    %2268 = vmatprep.subr.mxu0 0.0
    %2269 = vmatpush1.msra.mxu0 %v264
    %2270 = vmatprep.subr.mxu0 0.0
    %2271 = vmatpush1.msra.mxu0 %v265
    %2272 = vmatprep.subr.mxu0 0.0
    %2273 = vmatpush1.msra.mxu0 %v266
    %2274 = vmatprep.subr.mxu0 0.0
    %2275 = vmatpush1.msra.mxu0 %v267
    %2276 = vmatprep.subr.mxu0 0.0
    %2277 = vmatpush1.msra.mxu0 %v268
    %2278 = vmatprep.subr.mxu0 0.0
    %2279 = vmatpush1.msra.mxu0 %v269
    %2280 = vmatprep.subr.mxu0 0.0
    %2281 = vmatpush1.msra.mxu0 %v270
    %2282 = vmatprep.subr.mxu0 0.0
    %2283 = vmatpush1.msra.mxu0 %v271
    %2284 = vmatprep.subr.mxu0 0.0
    %2285 = vmatpush1.msra.mxu0 %v272
    %2286 = vmatprep.subr.mxu0 0.0
    %2287 = vmatpush1.msra.mxu0 %v273
    %2288 = vmatprep.subr.mxu0 0.0
    %2289 = vmatpush1.msra.mxu0 %v274
    %2290 = vmatprep.subr.mxu0 0.0
    %2291 = vmatpush1.msra.mxu0 %v275
    %2292 = vmatprep.subr.mxu0 0.0
    %2293 = vmatpush1.msra.mxu0 %v276
    %2294 = vmatprep.subr.mxu0 0.0
    %2295 = vmatpush1.msra.mxu0 %v277
    %2296 = vmatprep.subr.mxu0 0.0
    %2297 = vmatpush1.msra.mxu0 %v278
    %2298 = vmatprep.subr.mxu0 0.0
    %2299 = vmatpush1.msra.mxu0 %v279
    %2300 = vmatprep.subr.mxu0 0.0
    %2301 = vmatpush1.msra.mxu0 0.0
    %2302 = vmatprep.subr.mxu0 0.0
    %2303 = vmatpush1.msra.mxu0 0.0
    %2304 = vmatprep.subr.mxu0 0.0
    %2305 = vmatpush1.msra.mxu0 0.0
    %2306 = vmatprep.subr.mxu0 0.0
    %2307 = vmatpush1.msra.mxu0 0.0
    %2308 = vmatprep.subr.mxu0 0.0
    %2309 = vmatpush1.msra.mxu0 0.0
    %2310 = vmatprep.subr.mxu0 0.0
    %2311 = vmatpush1.msra.mxu0 0.0
    %2312 = vmatprep.subr.mxu0 0.0
    %2313 = vmatpush1.msra.mxu0 0.0
    %2314 = vmatprep.subr.mxu0 0.0
    %2315 = vmatpush1.msra.mxu0 0.0
    %2316 = vmatprep.subr.mxu0 0.0
    %2317 = vmatpush1.msra.mxu0 0.0
    %2318 = vmatprep.subr.mxu0 0.0
    %2319 = vmatpush1.msra.mxu0 0.0
    %2320 = vmatprep.subr.mxu0 0.0
    %2321 = vmatpush1.msra.mxu0 0.0
    %2322 = vmatprep.subr.mxu0 0.0
    %2323 = vmatpush1.msra.mxu0 0.0
    %2324 = vmatprep.subr.mxu0 0.0
    %2325 = vmatpush1.msra.mxu0 0.0
    %2326 = vmatprep.subr.mxu0 0.0
    %2327 = vmatpush1.msra.mxu0 0.0
    %2328 = vmatprep.subr.mxu0 0.0
    %2329 = vmatpush1.msra.mxu0 0.0
    %2330 = vmatprep.subr.mxu0 0.0
    %2331 = vmatpush1.msra.mxu0 0.0
    %2332 = vmatprep.mubr.f32.mxu0 0.0
    %2333 = vmatmul.mubr.f32.gmra.mrb[0].mxu0 %v2265
    %v2334 = vpop.f32.mrb[0].mxu0
    %v2335 = vadd.f32 0.0, %v2334
    %v2336 = vpop.f32.mrb[0].mxu0
    %2337 = vmatprep.mubr.f32.mxu0 0.0
    %2338 = vmatmul.mubr.f32.gmra.mrb[0].mxu0 %v2266
    %v2339 = vpop.f32.mrb[0].mxu0
    %v2340 = vadd.f32 0.0, %v2339
    %v2341 = vpop.f32.mrb[0].mxu0
    %2342 = vmatprep.mubr.f32.mxu0 0.0
    %2343 = vmatmul.mubr.f32.gmra.mrb[0].mxu0 %v2267
    %v2344 = vpop.f32.mrb[0].mxu0
    %v2345 = vadd.f32 0.0, %v2344
    %v2346 = vpop.f32.mrb[0].mxu0
    %2347 = vdwg.mxu0
    %s2348 = scalar_lea.vmem %s5, 352
    %v2349 = vld [vmem:[%s2348] sm:$0xff]
    %v2350 = vld [vmem:[%s2348 + $0x8] sm:$0xff]
    %v2351 = vld [vmem:[%s2348 + $0x10] sm:$0xff]
    %v2352 = vld [vmem:[%s2348 + $0x18] sm:$0xff]
    %v2354 = vsel %vm456, %v2335, 0
    %v2357 = vsel %vm456, %v2340, 0
    %v2360 = vsel %vm456, %v2345, 0
    %2362 = vmatprep.subr.mxu0 0.0
    %2363 = vmatpush1.msra.mxu0 %v2349
    %2364 = vmatprep.subr.mxu0 0.0
    %2365 = vmatpush1.msra.mxu0 %v2350
    %2366 = vmatprep.subr.mxu0 0.0
    %2367 = vmatpush1.msra.mxu0 %v2351
    %2368 = vmatprep.subr.mxu0 0.0
    %2369 = vmatpush1.msra.mxu0 %v2352
    %2370 = vmatprep.subr.mxu0 0.0
    %2371 = vmatpush1.msra.mxu0 0.0
    %2372 = vmatprep.subr.mxu0 0.0
    %2373 = vmatpush1.msra.mxu0 0.0
    %2374 = vmatprep.subr.mxu0 0.0
    %2375 = vmatpush1.msra.mxu0 0.0
    %2376 = vmatprep.subr.mxu0 0.0
    %2377 = vmatpush1.msra.mxu0 0.0
    %2378 = vmatprep.subr.mxu0 0.0
    %2379 = vmatpush1.msra.mxu0 0.0
    %2380 = vmatprep.subr.mxu0 0.0
    %2381 = vmatpush1.msra.mxu0 0.0
    %2382 = vmatprep.subr.mxu0 0.0
    %2383 = vmatpush1.msra.mxu0 0.0
    %2384 = vmatprep.subr.mxu0 0.0
    %2385 = vmatpush1.msra.mxu0 0.0
    %2386 = vmatprep.subr.mxu0 0.0
    %2387 = vmatpush1.msra.mxu0 0.0
    %2388 = vmatprep.subr.mxu0 0.0
    %2389 = vmatpush1.msra.mxu0 0.0
    %2390 = vmatprep.subr.mxu0 0.0
    %2391 = vmatpush1.msra.mxu0 0.0
    %2392 = vmatprep.subr.mxu0 0.0
    %2393 = vmatpush1.msra.mxu0 0.0
    %2394 = vmatprep.subr.mxu0 0.0
    %2395 = vmatpush1.msra.mxu0 0.0
    %2396 = vmatprep.subr.mxu0 0.0
    %2397 = vmatpush1.msra.mxu0 0.0
    %2398 = vmatprep.subr.mxu0 0.0
    %2399 = vmatpush1.msra.mxu0 0.0
    %2400 = vmatprep.subr.mxu0 0.0
    %2401 = vmatpush1.msra.mxu0 0.0
    %2402 = vmatprep.subr.mxu0 0.0
    %2403 = vmatpush1.msra.mxu0 0.0
    %2404 = vmatprep.subr.mxu0 0.0
    %2405 = vmatpush1.msra.mxu0 0.0
    %2406 = vmatprep.subr.mxu0 0.0
    %2407 = vmatpush1.msra.mxu0 0.0
    %2408 = vmatprep.subr.mxu0 0.0
    %2409 = vmatpush1.msra.mxu0 0.0
    %2410 = vmatprep.subr.mxu0 0.0
    %2411 = vmatpush1.msra.mxu0 0.0
    %2412 = vmatprep.subr.mxu0 0.0
    %2413 = vmatpush1.msra.mxu0 0.0
    %2414 = vmatprep.subr.mxu0 0.0
    %2415 = vmatpush1.msra.mxu0 0.0
    %2416 = vmatprep.subr.mxu0 0.0
    %2417 = vmatpush1.msra.mxu0 0.0
    %2418 = vmatprep.subr.mxu0 0.0
    %2419 = vmatpush1.msra.mxu0 0.0
    %2420 = vmatprep.subr.mxu0 0.0
    %2421 = vmatpush1.msra.mxu0 0.0
    %2422 = vmatprep.subr.mxu0 0.0
    %2423 = vmatpush1.msra.mxu0 0.0
    %2424 = vmatprep.subr.mxu0 0.0
    %2425 = vmatpush1.msra.mxu0 0.0
    %2426 = vmatprep.mubr.f32.mxu0 0.0
    %2427 = vmatmul.mubr.f32.gmra.mrb[0].mxu0 %v2354
    %v2428 = vpop.f32.mrb[0].mxu0
    %v2429 = vadd.f32 0.0, %v2428
    %v2430 = vpop.f32.mrb[0].mxu0
    %2431 = vmatprep.mubr.f32.mxu0 0.0
    %2432 = vmatmul.mubr.f32.gmra.mrb[0].mxu0 %v2357
    %v2433 = vpop.f32.mrb[0].mxu0
    %v2434 = vadd.f32 0.0, %v2433
    %v2435 = vpop.f32.mrb[0].mxu0
    %2436 = vmatprep.mubr.f32.mxu0 0.0
    %2437 = vmatmul.mubr.f32.gmra.mrb[0].mxu0 %v2360
    %v2438 = vpop.f32.mrb[0].mxu0
    %v2439 = vadd.f32 0.0, %v2438
    %v2440 = vpop.f32.mrb[0].mxu0
    %2441 = vdwg.mxu0
    %v2442 = vadd.f32 %v2261, %v2429
    %v2443 = vadd.f32 %v2262, %v2434
    %v2444 = vadd.f32 %v2263, %v2439
    %s2445 = scalar_lea.vmem %s4, 288
    %v2446 = vld [vmem:[%s2445] sm:$0xff]
    %v2447 = vld [vmem:[%s2445 + $0x8] sm:$0xff]
    %v2448 = vld [vmem:[%s2445 + $0x10] sm:$0x3]
    %2449 = vmatprep.subr.mxu0 0.0
    %2450 = vmatpush1.msra.mxu0 %v264
    %2451 = vmatprep.subr.mxu0 0.0
    %2452 = vmatpush1.msra.mxu0 %v265
    %2453 = vmatprep.subr.mxu0 0.0
    %2454 = vmatpush1.msra.mxu0 %v266
    %2455 = vmatprep.subr.mxu0 0.0
    %2456 = vmatpush1.msra.mxu0 %v267
    %2457 = vmatprep.subr.mxu0 0.0
    %2458 = vmatpush1.msra.mxu0 %v268
    %2459 = vmatprep.subr.mxu0 0.0
    %2460 = vmatpush1.msra.mxu0 %v269
    %2461 = vmatprep.subr.mxu0 0.0
    %2462 = vmatpush1.msra.mxu0 %v270
    %2463 = vmatprep.subr.mxu0 0.0
    %2464 = vmatpush1.msra.mxu0 %v271
    %2465 = vmatprep.subr.mxu0 0.0
    %2466 = vmatpush1.msra.mxu0 %v272
    %2467 = vmatprep.subr.mxu0 0.0
    %2468 = vmatpush1.msra.mxu0 %v273
    %2469 = vmatprep.subr.mxu0 0.0
    %2470 = vmatpush1.msra.mxu0 %v274
    %2471 = vmatprep.subr.mxu0 0.0
    %2472 = vmatpush1.msra.mxu0 %v275
    %2473 = vmatprep.subr.mxu0 0.0
    %2474 = vmatpush1.msra.mxu0 %v276
    %2475 = vmatprep.subr.mxu0 0.0
    %2476 = vmatpush1.msra.mxu0 %v277
    %2477 = vmatprep.subr.mxu0 0.0
    %2478 = vmatpush1.msra.mxu0 %v278
    %2479 = vmatprep.subr.mxu0 0.0
    %2480 = vmatpush1.msra.mxu0 %v279
    %2481 = vmatprep.subr.mxu0 0.0
    %2482 = vmatpush1.msra.mxu0 0.0
    %2483 = vmatprep.subr.mxu0 0.0
    %2484 = vmatpush1.msra.mxu0 0.0
    %2485 = vmatprep.subr.mxu0 0.0
    %2486 = vmatpush1.msra.mxu0 0.0
    %2487 = vmatprep.subr.mxu0 0.0
    %2488 = vmatpush1.msra.mxu0 0.0
    %2489 = vmatprep.subr.mxu0 0.0
    %2490 = vmatpush1.msra.mxu0 0.0
    %2491 = vmatprep.subr.mxu0 0.0
    %2492 = vmatpush1.msra.mxu0 0.0
    %2493 = vmatprep.subr.mxu0 0.0
    %2494 = vmatpush1.msra.mxu0 0.0
    %2495 = vmatprep.subr.mxu0 0.0
    %2496 = vmatpush1.msra.mxu0 0.0
    %2497 = vmatprep.subr.mxu0 0.0
    %2498 = vmatpush1.msra.mxu0 0.0
    %2499 = vmatprep.subr.mxu0 0.0
    %2500 = vmatpush1.msra.mxu0 0.0
    %2501 = vmatprep.subr.mxu0 0.0
    %2502 = vmatpush1.msra.mxu0 0.0
    %2503 = vmatprep.subr.mxu0 0.0
    %2504 = vmatpush1.msra.mxu0 0.0
    %2505 = vmatprep.subr.mxu0 0.0
    %2506 = vmatpush1.msra.mxu0 0.0
    %2507 = vmatprep.subr.mxu0 0.0
    %2508 = vmatpush1.msra.mxu0 0.0
    %2509 = vmatprep.subr.mxu0 0.0
    %2510 = vmatpush1.msra.mxu0 0.0
    %2511 = vmatprep.subr.mxu0 0.0
    %2512 = vmatpush1.msra.mxu0 0.0
    %2513 = vmatprep.mubr.f32.mxu0 0.0
    %2514 = vmatmul.mubr.f32.gmra.mrb[0].mxu0 %v2446
    %v2515 = vpop.f32.mrb[0].mxu0
    %v2516 = vadd.f32 0.0, %v2515
    %v2517 = vpop.f32.mrb[0].mxu0
    %2518 = vmatprep.mubr.f32.mxu0 0.0
    %2519 = vmatmul.mubr.f32.gmra.mrb[0].mxu0 %v2447
    %v2520 = vpop.f32.mrb[0].mxu0
    %v2521 = vadd.f32 0.0, %v2520
    %v2522 = vpop.f32.mrb[0].mxu0
    %2523 = vmatprep.mubr.f32.mxu0 0.0
    %2524 = vmatmul.mubr.f32.gmra.mrb[0].mxu0 %v2448
    %v2525 = vpop.f32.mrb[0].mxu0
    %v2526 = vadd.f32 0.0, %v2525
    %v2527 = vpop.f32.mrb[0].mxu0
    %2528 = vdwg.mxu0
    %s2529 = scalar_lea.vmem %s5, 384
    %v2530 = vld [vmem:[%s2529] sm:$0xff]
    %v2531 = vld [vmem:[%s2529 + $0x8] sm:$0xff]
    %v2532 = vld [vmem:[%s2529 + $0x10] sm:$0xff]
    %v2533 = vld [vmem:[%s2529 + $0x18] sm:$0xff]
    %v2535 = vsel %vm456, %v2516, 0
    %v2538 = vsel %vm456, %v2521, 0
    %v2541 = vsel %vm456, %v2526, 0
    %2543 = vmatprep.subr.mxu0 0.0
    %2544 = vmatpush1.msra.mxu0 %v2530
    %2545 = vmatprep.subr.mxu0 0.0
    %2546 = vmatpush1.msra.mxu0 %v2531
    %2547 = vmatprep.subr.mxu0 0.0
    %2548 = vmatpush1.msra.mxu0 %v2532
    %2549 = vmatprep.subr.mxu0 0.0
    %2550 = vmatpush1.msra.mxu0 %v2533
    %2551 = vmatprep.subr.mxu0 0.0
    %2552 = vmatpush1.msra.mxu0 0.0
    %2553 = vmatprep.subr.mxu0 0.0
    %2554 = vmatpush1.msra.mxu0 0.0
    %2555 = vmatprep.subr.mxu0 0.0
    %2556 = vmatpush1.msra.mxu0 0.0
    %2557 = vmatprep.subr.mxu0 0.0
    %2558 = vmatpush1.msra.mxu0 0.0
    %2559 = vmatprep.subr.mxu0 0.0
    %2560 = vmatpush1.msra.mxu0 0.0
    %2561 = vmatprep.subr.mxu0 0.0
    %2562 = vmatpush1.msra.mxu0 0.0
    %2563 = vmatprep.subr.mxu0 0.0
    %2564 = vmatpush1.msra.mxu0 0.0
    %2565 = vmatprep.subr.mxu0 0.0
    %2566 = vmatpush1.msra.mxu0 0.0
    %2567 = vmatprep.subr.mxu0 0.0
    %2568 = vmatpush1.msra.mxu0 0.0
    %2569 = vmatprep.subr.mxu0 0.0
    %2570 = vmatpush1.msra.mxu0 0.0
    %2571 = vmatprep.subr.mxu0 0.0
    %2572 = vmatpush1.msra.mxu0 0.0
    %2573 = vmatprep.subr.mxu0 0.0
    %2574 = vmatpush1.msra.mxu0 0.0
    %2575 = vmatprep.subr.mxu0 0.0
    %2576 = vmatpush1.msra.mxu0 0.0
    %2577 = vmatprep.subr.mxu0 0.0
    %2578 = vmatpush1.msra.mxu0 0.0
    %2579 = vmatprep.subr.mxu0 0.0
    %2580 = vmatpush1.msra.mxu0 0.0
    %2581 = vmatprep.subr.mxu0 0.0
    %2582 = vmatpush1.msra.mxu0 0.0
    %2583 = vmatprep.subr.mxu0 0.0
    %2584 = vmatpush1.msra.mxu0 0.0
    %2585 = vmatprep.subr.mxu0 0.0
    %2586 = vmatpush1.msra.mxu0 0.0
    %2587 = vmatprep.subr.mxu0 0.0
    %2588 = vmatpush1.msra.mxu0 0.0
    %2589 = vmatprep.subr.mxu0 0.0
    %2590 = vmatpush1.msra.mxu0 0.0
    %2591 = vmatprep.subr.mxu0 0.0
    %2592 = vmatpush1.msra.mxu0 0.0
    %2593 = vmatprep.subr.mxu0 0.0
    %2594 = vmatpush1.msra.mxu0 0.0
    %2595 = vmatprep.subr.mxu0 0.0
    %2596 = vmatpush1.msra.mxu0 0.0
    %2597 = vmatprep.subr.mxu0 0.0
    %2598 = vmatpush1.msra.mxu0 0.0
    %2599 = vmatprep.subr.mxu0 0.0
    %2600 = vmatpush1.msra.mxu0 0.0
    %2601 = vmatprep.subr.mxu0 0.0
    %2602 = vmatpush1.msra.mxu0 0.0
    %2603 = vmatprep.subr.mxu0 0.0
    %2604 = vmatpush1.msra.mxu0 0.0
    %2605 = vmatprep.subr.mxu0 0.0
    %2606 = vmatpush1.msra.mxu0 0.0
    %2607 = vmatprep.mubr.f32.mxu0 0.0
    %2608 = vmatmul.mubr.f32.gmra.mrb[0].mxu0 %v2535
    %v2609 = vpop.f32.mrb[0].mxu0
    %v2610 = vadd.f32 0.0, %v2609
    %v2611 = vpop.f32.mrb[0].mxu0
    %2612 = vmatprep.mubr.f32.mxu0 0.0
    %2613 = vmatmul.mubr.f32.gmra.mrb[0].mxu0 %v2538
    %v2614 = vpop.f32.mrb[0].mxu0
    %v2615 = vadd.f32 0.0, %v2614
    %v2616 = vpop.f32.mrb[0].mxu0
    %2617 = vmatprep.mubr.f32.mxu0 0.0
    %2618 = vmatmul.mubr.f32.gmra.mrb[0].mxu0 %v2541
    %v2619 = vpop.f32.mrb[0].mxu0
    %v2620 = vadd.f32 0.0, %v2619
    %v2621 = vpop.f32.mrb[0].mxu0
    %2622 = vdwg.mxu0
    %v2623 = vadd.f32 %v2442, %v2610
    %v2624 = vadd.f32 %v2443, %v2615
    %v2625 = vadd.f32 %v2444, %v2620
    %s2626 = scalar_lea.vmem %s4, 312
    %v2627 = vld [vmem:[%s2626] sm:$0xff]
    %v2628 = vld [vmem:[%s2626 + $0x8] sm:$0xff]
    %v2629 = vld [vmem:[%s2626 + $0x10] sm:$0x3]
    %2630 = vmatprep.subr.mxu0 0.0
    %2631 = vmatpush1.msra.mxu0 %v264
    %2632 = vmatprep.subr.mxu0 0.0
    %2633 = vmatpush1.msra.mxu0 %v265
    %2634 = vmatprep.subr.mxu0 0.0
    %2635 = vmatpush1.msra.mxu0 %v266
    %2636 = vmatprep.subr.mxu0 0.0
    %2637 = vmatpush1.msra.mxu0 %v267
    %2638 = vmatprep.subr.mxu0 0.0
    %2639 = vmatpush1.msra.mxu0 %v268
    %2640 = vmatprep.subr.mxu0 0.0
    %2641 = vmatpush1.msra.mxu0 %v269
    %2642 = vmatprep.subr.mxu0 0.0
    %2643 = vmatpush1.msra.mxu0 %v270
    %2644 = vmatprep.subr.mxu0 0.0
    %2645 = vmatpush1.msra.mxu0 %v271
    %2646 = vmatprep.subr.mxu0 0.0
    %2647 = vmatpush1.msra.mxu0 %v272
    %2648 = vmatprep.subr.mxu0 0.0
    %2649 = vmatpush1.msra.mxu0 %v273
    %2650 = vmatprep.subr.mxu0 0.0
    %2651 = vmatpush1.msra.mxu0 %v274
    %2652 = vmatprep.subr.mxu0 0.0
    %2653 = vmatpush1.msra.mxu0 %v275
    %2654 = vmatprep.subr.mxu0 0.0
    %2655 = vmatpush1.msra.mxu0 %v276
    %2656 = vmatprep.subr.mxu0 0.0
    %2657 = vmatpush1.msra.mxu0 %v277
    %2658 = vmatprep.subr.mxu0 0.0
    %2659 = vmatpush1.msra.mxu0 %v278
    %2660 = vmatprep.subr.mxu0 0.0
    %2661 = vmatpush1.msra.mxu0 %v279
    %2662 = vmatprep.subr.mxu0 0.0
    %2663 = vmatpush1.msra.mxu0 0.0
    %2664 = vmatprep.subr.mxu0 0.0
    %2665 = vmatpush1.msra.mxu0 0.0
    %2666 = vmatprep.subr.mxu0 0.0
    %2667 = vmatpush1.msra.mxu0 0.0
    %2668 = vmatprep.subr.mxu0 0.0
    %2669 = vmatpush1.msra.mxu0 0.0
    %2670 = vmatprep.subr.mxu0 0.0
    %2671 = vmatpush1.msra.mxu0 0.0
    %2672 = vmatprep.subr.mxu0 0.0
    %2673 = vmatpush1.msra.mxu0 0.0
    %2674 = vmatprep.subr.mxu0 0.0
    %2675 = vmatpush1.msra.mxu0 0.0
    %2676 = vmatprep.subr.mxu0 0.0
    %2677 = vmatpush1.msra.mxu0 0.0
    %2678 = vmatprep.subr.mxu0 0.0
    %2679 = vmatpush1.msra.mxu0 0.0
    %2680 = vmatprep.subr.mxu0 0.0
    %2681 = vmatpush1.msra.mxu0 0.0
    %2682 = vmatprep.subr.mxu0 0.0
    %2683 = vmatpush1.msra.mxu0 0.0
    %2684 = vmatprep.subr.mxu0 0.0
    %2685 = vmatpush1.msra.mxu0 0.0
    %2686 = vmatprep.subr.mxu0 0.0
    %2687 = vmatpush1.msra.mxu0 0.0
    %2688 = vmatprep.subr.mxu0 0.0
    %2689 = vmatpush1.msra.mxu0 0.0
    %2690 = vmatprep.subr.mxu0 0.0
    %2691 = vmatpush1.msra.mxu0 0.0
    %2692 = vmatprep.subr.mxu0 0.0
    %2693 = vmatpush1.msra.mxu0 0.0
    %2694 = vmatprep.mubr.f32.mxu0 0.0
    %2695 = vmatmul.mubr.f32.gmra.mrb[0].mxu0 %v2627
    %v2696 = vpop.f32.mrb[0].mxu0
    %v2697 = vadd.f32 0.0, %v2696
    %v2698 = vpop.f32.mrb[0].mxu0
    %2699 = vmatprep.mubr.f32.mxu0 0.0
    %2700 = vmatmul.mubr.f32.gmra.mrb[0].mxu0 %v2628
    %v2701 = vpop.f32.mrb[0].mxu0
    %v2702 = vadd.f32 0.0, %v2701
    %v2703 = vpop.f32.mrb[0].mxu0
    %2704 = vmatprep.mubr.f32.mxu0 0.0
    %2705 = vmatmul.mubr.f32.gmra.mrb[0].mxu0 %v2629
    %v2706 = vpop.f32.mrb[0].mxu0
    %v2707 = vadd.f32 0.0, %v2706
    %v2708 = vpop.f32.mrb[0].mxu0
    %2709 = vdwg.mxu0
    %s2710 = scalar_lea.vmem %s5, 416
    %v2711 = vld [vmem:[%s2710] sm:$0xff]
    %v2712 = vld [vmem:[%s2710 + $0x8] sm:$0xff]
    %v2713 = vld [vmem:[%s2710 + $0x10] sm:$0xff]
    %v2714 = vld [vmem:[%s2710 + $0x18] sm:$0xff]
    %v2716 = vsel %vm456, %v2697, 0
    %v2719 = vsel %vm456, %v2702, 0
    %v2722 = vsel %vm456, %v2707, 0
    %2724 = vmatprep.subr.mxu0 0.0
    %2725 = vmatpush1.msra.mxu0 %v2711
    %2726 = vmatprep.subr.mxu0 0.0
    %2727 = vmatpush1.msra.mxu0 %v2712
    %2728 = vmatprep.subr.mxu0 0.0
    %2729 = vmatpush1.msra.mxu0 %v2713
    %2730 = vmatprep.subr.mxu0 0.0
    %2731 = vmatpush1.msra.mxu0 %v2714
    %2732 = vmatprep.subr.mxu0 0.0
    %2733 = vmatpush1.msra.mxu0 0.0
    %2734 = vmatprep.subr.mxu0 0.0
    %2735 = vmatpush1.msra.mxu0 0.0
    %2736 = vmatprep.subr.mxu0 0.0
    %2737 = vmatpush1.msra.mxu0 0.0
    %2738 = vmatprep.subr.mxu0 0.0
    %2739 = vmatpush1.msra.mxu0 0.0
    %2740 = vmatprep.subr.mxu0 0.0
    %2741 = vmatpush1.msra.mxu0 0.0
    %2742 = vmatprep.subr.mxu0 0.0
    %2743 = vmatpush1.msra.mxu0 0.0
    %2744 = vmatprep.subr.mxu0 0.0
    %2745 = vmatpush1.msra.mxu0 0.0
    %2746 = vmatprep.subr.mxu0 0.0
    %2747 = vmatpush1.msra.mxu0 0.0
    %2748 = vmatprep.subr.mxu0 0.0
    %2749 = vmatpush1.msra.mxu0 0.0
    %2750 = vmatprep.subr.mxu0 0.0
    %2751 = vmatpush1.msra.mxu0 0.0
    %2752 = vmatprep.subr.mxu0 0.0
    %2753 = vmatpush1.msra.mxu0 0.0
    %2754 = vmatprep.subr.mxu0 0.0
    %2755 = vmatpush1.msra.mxu0 0.0
    %2756 = vmatprep.subr.mxu0 0.0
    %2757 = vmatpush1.msra.mxu0 0.0
    %2758 = vmatprep.subr.mxu0 0.0
    %2759 = vmatpush1.msra.mxu0 0.0
    %2760 = vmatprep.subr.mxu0 0.0
    %2761 = vmatpush1.msra.mxu0 0.0
    %2762 = vmatprep.subr.mxu0 0.0
    %2763 = vmatpush1.msra.mxu0 0.0
    %2764 = vmatprep.subr.mxu0 0.0
    %2765 = vmatpush1.msra.mxu0 0.0
    %2766 = vmatprep.subr.mxu0 0.0
    %2767 = vmatpush1.msra.mxu0 0.0
    %2768 = vmatprep.subr.mxu0 0.0
    %2769 = vmatpush1.msra.mxu0 0.0
    %2770 = vmatprep.subr.mxu0 0.0
    %2771 = vmatpush1.msra.mxu0 0.0
    %2772 = vmatprep.subr.mxu0 0.0
    %2773 = vmatpush1.msra.mxu0 0.0
    %2774 = vmatprep.subr.mxu0 0.0
    %2775 = vmatpush1.msra.mxu0 0.0
    %2776 = vmatprep.subr.mxu0 0.0
    %2777 = vmatpush1.msra.mxu0 0.0
    %2778 = vmatprep.subr.mxu0 0.0
    %2779 = vmatpush1.msra.mxu0 0.0
    %2780 = vmatprep.subr.mxu0 0.0
    %2781 = vmatpush1.msra.mxu0 0.0
    %2782 = vmatprep.subr.mxu0 0.0
    %2783 = vmatpush1.msra.mxu0 0.0
    %2784 = vmatprep.subr.mxu0 0.0
    %2785 = vmatpush1.msra.mxu0 0.0
    %2786 = vmatprep.subr.mxu0 0.0
    %2787 = vmatpush1.msra.mxu0 0.0
    %2788 = vmatprep.mubr.f32.mxu0 0.0
    %2789 = vmatmul.mubr.f32.gmra.mrb[0].mxu0 %v2716
    %v2790 = vpop.f32.mrb[0].mxu0
    %v2791 = vadd.f32 0.0, %v2790
    %v2792 = vpop.f32.mrb[0].mxu0
    %2793 = vmatprep.mubr.f32.mxu0 0.0
    %2794 = vmatmul.mubr.f32.gmra.mrb[0].mxu0 %v2719
    %v2795 = vpop.f32.mrb[0].mxu0
    %v2796 = vadd.f32 0.0, %v2795
    %v2797 = vpop.f32.mrb[0].mxu0
    %2798 = vmatprep.mubr.f32.mxu0 0.0
    %2799 = vmatmul.mubr.f32.gmra.mrb[0].mxu0 %v2722
    %v2800 = vpop.f32.mrb[0].mxu0
    %v2801 = vadd.f32 0.0, %v2800
    %v2802 = vpop.f32.mrb[0].mxu0
    %2803 = vdwg.mxu0
    %v2804 = vadd.f32 %v2623, %v2791
    %v2805 = vadd.f32 %v2624, %v2796
    %v2806 = vadd.f32 %v2625, %v2801
    %s2807 = scalar_lea.vmem %s4, 336
    %v2808 = vld [vmem:[%s2807] sm:$0xff]
    %v2809 = vld [vmem:[%s2807 + $0x8] sm:$0xff]
    %v2810 = vld [vmem:[%s2807 + $0x10] sm:$0x3]
    %2811 = vmatprep.subr.mxu0 0.0
    %2812 = vmatpush1.msra.mxu0 %v264
    %2813 = vmatprep.subr.mxu0 0.0
    %2814 = vmatpush1.msra.mxu0 %v265
    %2815 = vmatprep.subr.mxu0 0.0
    %2816 = vmatpush1.msra.mxu0 %v266
    %2817 = vmatprep.subr.mxu0 0.0
    %2818 = vmatpush1.msra.mxu0 %v267
    %2819 = vmatprep.subr.mxu0 0.0
    %2820 = vmatpush1.msra.mxu0 %v268
    %2821 = vmatprep.subr.mxu0 0.0
    %2822 = vmatpush1.msra.mxu0 %v269
    %2823 = vmatprep.subr.mxu0 0.0
    %2824 = vmatpush1.msra.mxu0 %v270
    %2825 = vmatprep.subr.mxu0 0.0
    %2826 = vmatpush1.msra.mxu0 %v271
    %2827 = vmatprep.subr.mxu0 0.0
    %2828 = vmatpush1.msra.mxu0 %v272
    %2829 = vmatprep.subr.mxu0 0.0
    %2830 = vmatpush1.msra.mxu0 %v273
    %2831 = vmatprep.subr.mxu0 0.0
    %2832 = vmatpush1.msra.mxu0 %v274
    %2833 = vmatprep.subr.mxu0 0.0
    %2834 = vmatpush1.msra.mxu0 %v275
    %2835 = vmatprep.subr.mxu0 0.0
    %2836 = vmatpush1.msra.mxu0 %v276
    %2837 = vmatprep.subr.mxu0 0.0
    %2838 = vmatpush1.msra.mxu0 %v277
    %2839 = vmatprep.subr.mxu0 0.0
    %2840 = vmatpush1.msra.mxu0 %v278
    %2841 = vmatprep.subr.mxu0 0.0
    %2842 = vmatpush1.msra.mxu0 %v279
    %2843 = vmatprep.subr.mxu0 0.0
    %2844 = vmatpush1.msra.mxu0 0.0
    %2845 = vmatprep.subr.mxu0 0.0
    %2846 = vmatpush1.msra.mxu0 0.0
    %2847 = vmatprep.subr.mxu0 0.0
    %2848 = vmatpush1.msra.mxu0 0.0
    %2849 = vmatprep.subr.mxu0 0.0
    %2850 = vmatpush1.msra.mxu0 0.0
    %2851 = vmatprep.subr.mxu0 0.0
    %2852 = vmatpush1.msra.mxu0 0.0
    %2853 = vmatprep.subr.mxu0 0.0
    %2854 = vmatpush1.msra.mxu0 0.0
    %2855 = vmatprep.subr.mxu0 0.0
    %2856 = vmatpush1.msra.mxu0 0.0
    %2857 = vmatprep.subr.mxu0 0.0
    %2858 = vmatpush1.msra.mxu0 0.0
    %2859 = vmatprep.subr.mxu0 0.0
    %2860 = vmatpush1.msra.mxu0 0.0
    %2861 = vmatprep.subr.mxu0 0.0
    %2862 = vmatpush1.msra.mxu0 0.0
    %2863 = vmatprep.subr.mxu0 0.0
    %2864 = vmatpush1.msra.mxu0 0.0
    %2865 = vmatprep.subr.mxu0 0.0
    %2866 = vmatpush1.msra.mxu0 0.0
    %2867 = vmatprep.subr.mxu0 0.0
    %2868 = vmatpush1.msra.mxu0 0.0
    %2869 = vmatprep.subr.mxu0 0.0
    %2870 = vmatpush1.msra.mxu0 0.0
    %2871 = vmatprep.subr.mxu0 0.0
    %2872 = vmatpush1.msra.mxu0 0.0
    %2873 = vmatprep.subr.mxu0 0.0
    %2874 = vmatpush1.msra.mxu0 0.0
    %2875 = vmatprep.mubr.f32.mxu0 0.0
    %2876 = vmatmul.mubr.f32.gmra.mrb[0].mxu0 %v2808
    %v2877 = vpop.f32.mrb[0].mxu0
    %v2878 = vadd.f32 0.0, %v2877
    %v2879 = vpop.f32.mrb[0].mxu0
    %2880 = vmatprep.mubr.f32.mxu0 0.0
    %2881 = vmatmul.mubr.f32.gmra.mrb[0].mxu0 %v2809
    %v2882 = vpop.f32.mrb[0].mxu0
    %v2883 = vadd.f32 0.0, %v2882
    %v2884 = vpop.f32.mrb[0].mxu0
    %2885 = vmatprep.mubr.f32.mxu0 0.0
    %2886 = vmatmul.mubr.f32.gmra.mrb[0].mxu0 %v2810
    %v2887 = vpop.f32.mrb[0].mxu0
    %v2888 = vadd.f32 0.0, %v2887
    %v2889 = vpop.f32.mrb[0].mxu0
    %2890 = vdwg.mxu0
    %s2891 = scalar_lea.vmem %s5, 448
    %v2892 = vld [vmem:[%s2891] sm:$0xff]
    %v2893 = vld [vmem:[%s2891 + $0x8] sm:$0xff]
    %v2894 = vld [vmem:[%s2891 + $0x10] sm:$0xff]
    %v2895 = vld [vmem:[%s2891 + $0x18] sm:$0xff]
    %v2897 = vsel %vm456, %v2878, 0
    %v2900 = vsel %vm456, %v2883, 0
    %v2903 = vsel %vm456, %v2888, 0
    %2905 = vmatprep.subr.mxu0 0.0
    %2906 = vmatpush1.msra.mxu0 %v2892
    %2907 = vmatprep.subr.mxu0 0.0
    %2908 = vmatpush1.msra.mxu0 %v2893
    %2909 = vmatprep.subr.mxu0 0.0
    %2910 = vmatpush1.msra.mxu0 %v2894
    %2911 = vmatprep.subr.mxu0 0.0
    %2912 = vmatpush1.msra.mxu0 %v2895
    %2913 = vmatprep.subr.mxu0 0.0
    %2914 = vmatpush1.msra.mxu0 0.0
    %2915 = vmatprep.subr.mxu0 0.0
    %2916 = vmatpush1.msra.mxu0 0.0
    %2917 = vmatprep.subr.mxu0 0.0
    %2918 = vmatpush1.msra.mxu0 0.0
    %2919 = vmatprep.subr.mxu0 0.0
    %2920 = vmatpush1.msra.mxu0 0.0
    %2921 = vmatprep.subr.mxu0 0.0
    %2922 = vmatpush1.msra.mxu0 0.0
    %2923 = vmatprep.subr.mxu0 0.0
    %2924 = vmatpush1.msra.mxu0 0.0
    %2925 = vmatprep.subr.mxu0 0.0
    %2926 = vmatpush1.msra.mxu0 0.0
    %2927 = vmatprep.subr.mxu0 0.0
    %2928 = vmatpush1.msra.mxu0 0.0
    %2929 = vmatprep.subr.mxu0 0.0
    %2930 = vmatpush1.msra.mxu0 0.0
    %2931 = vmatprep.subr.mxu0 0.0
    %2932 = vmatpush1.msra.mxu0 0.0
    %2933 = vmatprep.subr.mxu0 0.0
    %2934 = vmatpush1.msra.mxu0 0.0
    %2935 = vmatprep.subr.mxu0 0.0
    %2936 = vmatpush1.msra.mxu0 0.0
    %2937 = vmatprep.subr.mxu0 0.0
    %2938 = vmatpush1.msra.mxu0 0.0
    %2939 = vmatprep.subr.mxu0 0.0
    %2940 = vmatpush1.msra.mxu0 0.0
    %2941 = vmatprep.subr.mxu0 0.0
    %2942 = vmatpush1.msra.mxu0 0.0
    %2943 = vmatprep.subr.mxu0 0.0
    %2944 = vmatpush1.msra.mxu0 0.0
    %2945 = vmatprep.subr.mxu0 0.0
    %2946 = vmatpush1.msra.mxu0 0.0
    %2947 = vmatprep.subr.mxu0 0.0
    %2948 = vmatpush1.msra.mxu0 0.0
    %2949 = vmatprep.subr.mxu0 0.0
    %2950 = vmatpush1.msra.mxu0 0.0
    %2951 = vmatprep.subr.mxu0 0.0
    %2952 = vmatpush1.msra.mxu0 0.0
    %2953 = vmatprep.subr.mxu0 0.0
    %2954 = vmatpush1.msra.mxu0 0.0
    %2955 = vmatprep.subr.mxu0 0.0
    %2956 = vmatpush1.msra.mxu0 0.0
    %2957 = vmatprep.subr.mxu0 0.0
    %2958 = vmatpush1.msra.mxu0 0.0
    %2959 = vmatprep.subr.mxu0 0.0
    %2960 = vmatpush1.msra.mxu0 0.0
    %2961 = vmatprep.subr.mxu0 0.0
    %2962 = vmatpush1.msra.mxu0 0.0
    %2963 = vmatprep.subr.mxu0 0.0
    %2964 = vmatpush1.msra.mxu0 0.0
    %2965 = vmatprep.subr.mxu0 0.0
    %2966 = vmatpush1.msra.mxu0 0.0
    %2967 = vmatprep.subr.mxu0 0.0
    %2968 = vmatpush1.msra.mxu0 0.0
    %2969 = vmatprep.mubr.f32.mxu0 0.0
    %2970 = vmatmul.mubr.f32.gmra.mrb[0].mxu0 %v2897
    %v2971 = vpop.f32.mrb[0].mxu0
    %v2972 = vadd.f32 0.0, %v2971
    %v2973 = vpop.f32.mrb[0].mxu0
    %2974 = vmatprep.mubr.f32.mxu0 0.0
    %2975 = vmatmul.mubr.f32.gmra.mrb[0].mxu0 %v2900
    %v2976 = vpop.f32.mrb[0].mxu0
    %v2977 = vadd.f32 0.0, %v2976
    %v2978 = vpop.f32.mrb[0].mxu0
    %2979 = vmatprep.mubr.f32.mxu0 0.0
    %2980 = vmatmul.mubr.f32.gmra.mrb[0].mxu0 %v2903
    %v2981 = vpop.f32.mrb[0].mxu0
    %v2982 = vadd.f32 0.0, %v2981
    %v2983 = vpop.f32.mrb[0].mxu0
    %2984 = vdwg.mxu0
    %v2985 = vadd.f32 %v2804, %v2972
    %v2986 = vadd.f32 %v2805, %v2977
    %v2987 = vadd.f32 %v2806, %v2982
    %s2988 = scalar_lea.vmem %s4, 360
    %v2989 = vld [vmem:[%s2988] sm:$0xff]
    %v2990 = vld [vmem:[%s2988 + $0x8] sm:$0xff]
    %v2991 = vld [vmem:[%s2988 + $0x10] sm:$0x3]
    %2992 = vmatprep.subr.mxu0 0.0
    %2993 = vmatpush1.msra.mxu0 %v264
    %2994 = vmatprep.subr.mxu0 0.0
    %2995 = vmatpush1.msra.mxu0 %v265
    %2996 = vmatprep.subr.mxu0 0.0
    %2997 = vmatpush1.msra.mxu0 %v266
    %2998 = vmatprep.subr.mxu0 0.0
    %2999 = vmatpush1.msra.mxu0 %v267
    %3000 = vmatprep.subr.mxu0 0.0
    %3001 = vmatpush1.msra.mxu0 %v268
    %3002 = vmatprep.subr.mxu0 0.0
    %3003 = vmatpush1.msra.mxu0 %v269
    %3004 = vmatprep.subr.mxu0 0.0
    %3005 = vmatpush1.msra.mxu0 %v270
    %3006 = vmatprep.subr.mxu0 0.0
    %3007 = vmatpush1.msra.mxu0 %v271
    %3008 = vmatprep.subr.mxu0 0.0
    %3009 = vmatpush1.msra.mxu0 %v272
    %3010 = vmatprep.subr.mxu0 0.0
    %3011 = vmatpush1.msra.mxu0 %v273
    %3012 = vmatprep.subr.mxu0 0.0
    %3013 = vmatpush1.msra.mxu0 %v274
    %3014 = vmatprep.subr.mxu0 0.0
    %3015 = vmatpush1.msra.mxu0 %v275
    %3016 = vmatprep.subr.mxu0 0.0
    %3017 = vmatpush1.msra.mxu0 %v276
    %3018 = vmatprep.subr.mxu0 0.0
    %3019 = vmatpush1.msra.mxu0 %v277
    %3020 = vmatprep.subr.mxu0 0.0
    %3021 = vmatpush1.msra.mxu0 %v278
    %3022 = vmatprep.subr.mxu0 0.0
    %3023 = vmatpush1.msra.mxu0 %v279
    %3024 = vmatprep.subr.mxu0 0.0
    %3025 = vmatpush1.msra.mxu0 0.0
    %3026 = vmatprep.subr.mxu0 0.0
    %3027 = vmatpush1.msra.mxu0 0.0
    %3028 = vmatprep.subr.mxu0 0.0
    %3029 = vmatpush1.msra.mxu0 0.0
    %3030 = vmatprep.subr.mxu0 0.0
    %3031 = vmatpush1.msra.mxu0 0.0
    %3032 = vmatprep.subr.mxu0 0.0
    %3033 = vmatpush1.msra.mxu0 0.0
    %3034 = vmatprep.subr.mxu0 0.0
    %3035 = vmatpush1.msra.mxu0 0.0
    %3036 = vmatprep.subr.mxu0 0.0
    %3037 = vmatpush1.msra.mxu0 0.0
    %3038 = vmatprep.subr.mxu0 0.0
    %3039 = vmatpush1.msra.mxu0 0.0
    %3040 = vmatprep.subr.mxu0 0.0
    %3041 = vmatpush1.msra.mxu0 0.0
    %3042 = vmatprep.subr.mxu0 0.0
    %3043 = vmatpush1.msra.mxu0 0.0
    %3044 = vmatprep.subr.mxu0 0.0
    %3045 = vmatpush1.msra.mxu0 0.0
    %3046 = vmatprep.subr.mxu0 0.0
    %3047 = vmatpush1.msra.mxu0 0.0
    %3048 = vmatprep.subr.mxu0 0.0
    %3049 = vmatpush1.msra.mxu0 0.0
    %3050 = vmatprep.subr.mxu0 0.0
    %3051 = vmatpush1.msra.mxu0 0.0
    %3052 = vmatprep.subr.mxu0 0.0
    %3053 = vmatpush1.msra.mxu0 0.0
    %3054 = vmatprep.subr.mxu0 0.0
    %3055 = vmatpush1.msra.mxu0 0.0
    %3056 = vmatprep.mubr.f32.mxu0 0.0
    %3057 = vmatmul.mubr.f32.gmra.mrb[0].mxu0 %v2989
    %v3058 = vpop.f32.mrb[0].mxu0
    %v3059 = vadd.f32 0.0, %v3058
    %v3060 = vpop.f32.mrb[0].mxu0
    %3061 = vmatprep.mubr.f32.mxu0 0.0
    %3062 = vmatmul.mubr.f32.gmra.mrb[0].mxu0 %v2990
    %v3063 = vpop.f32.mrb[0].mxu0
    %v3064 = vadd.f32 0.0, %v3063
    %v3065 = vpop.f32.mrb[0].mxu0
    %3066 = vmatprep.mubr.f32.mxu0 0.0
    %3067 = vmatmul.mubr.f32.gmra.mrb[0].mxu0 %v2991
    %v3068 = vpop.f32.mrb[0].mxu0
    %v3069 = vadd.f32 0.0, %v3068
    %v3070 = vpop.f32.mrb[0].mxu0
    %3071 = vdwg.mxu0
    %s3072 = scalar_lea.vmem %s5, 480
    %v3073 = vld [vmem:[%s3072] sm:$0xff]
    %v3074 = vld [vmem:[%s3072 + $0x8] sm:$0xff]
    %v3075 = vld [vmem:[%s3072 + $0x10] sm:$0xff]
    %v3076 = vld [vmem:[%s3072 + $0x18] sm:$0xff]
    %v3078 = vsel %vm456, %v3059, 0
    %v3081 = vsel %vm456, %v3064, 0
    %v3084 = vsel %vm456, %v3069, 0
    %3086 = vmatprep.subr.mxu0 0.0
    %3087 = vmatpush1.msra.mxu0 %v3073
    %3088 = vmatprep.subr.mxu0 0.0
    %3089 = vmatpush1.msra.mxu0 %v3074
    %3090 = vmatprep.subr.mxu0 0.0
    %3091 = vmatpush1.msra.mxu0 %v3075
    %3092 = vmatprep.subr.mxu0 0.0
    %3093 = vmatpush1.msra.mxu0 %v3076
    %3094 = vmatprep.subr.mxu0 0.0
    %3095 = vmatpush1.msra.mxu0 0.0
    %3096 = vmatprep.subr.mxu0 0.0
    %3097 = vmatpush1.msra.mxu0 0.0
    %3098 = vmatprep.subr.mxu0 0.0
    %3099 = vmatpush1.msra.mxu0 0.0
    %3100 = vmatprep.subr.mxu0 0.0
    %3101 = vmatpush1.msra.mxu0 0.0
    %3102 = vmatprep.subr.mxu0 0.0
    %3103 = vmatpush1.msra.mxu0 0.0
    %3104 = vmatprep.subr.mxu0 0.0
    %3105 = vmatpush1.msra.mxu0 0.0
    %3106 = vmatprep.subr.mxu0 0.0
    %3107 = vmatpush1.msra.mxu0 0.0
    %3108 = vmatprep.subr.mxu0 0.0
    %3109 = vmatpush1.msra.mxu0 0.0
    %3110 = vmatprep.subr.mxu0 0.0
    %3111 = vmatpush1.msra.mxu0 0.0
    %3112 = vmatprep.subr.mxu0 0.0
    %3113 = vmatpush1.msra.mxu0 0.0
    %3114 = vmatprep.subr.mxu0 0.0
    %3115 = vmatpush1.msra.mxu0 0.0
    %3116 = vmatprep.subr.mxu0 0.0
    %3117 = vmatpush1.msra.mxu0 0.0
    %3118 = vmatprep.subr.mxu0 0.0
    %3119 = vmatpush1.msra.mxu0 0.0
    %3120 = vmatprep.subr.mxu0 0.0
    %3121 = vmatpush1.msra.mxu0 0.0
    %3122 = vmatprep.subr.mxu0 0.0
    %3123 = vmatpush1.msra.mxu0 0.0
    %3124 = vmatprep.subr.mxu0 0.0
    %3125 = vmatpush1.msra.mxu0 0.0
    %3126 = vmatprep.subr.mxu0 0.0
    %3127 = vmatpush1.msra.mxu0 0.0
    %3128 = vmatprep.subr.mxu0 0.0
    %3129 = vmatpush1.msra.mxu0 0.0
    %3130 = vmatprep.subr.mxu0 0.0
    %3131 = vmatpush1.msra.mxu0 0.0
    %3132 = vmatprep.subr.mxu0 0.0
    %3133 = vmatpush1.msra.mxu0 0.0
    %3134 = vmatprep.subr.mxu0 0.0
    %3135 = vmatpush1.msra.mxu0 0.0
    %3136 = vmatprep.subr.mxu0 0.0
    %3137 = vmatpush1.msra.mxu0 0.0
    %3138 = vmatprep.subr.mxu0 0.0
    %3139 = vmatpush1.msra.mxu0 0.0
    %3140 = vmatprep.subr.mxu0 0.0
    %3141 = vmatpush1.msra.mxu0 0.0
    %3142 = vmatprep.subr.mxu0 0.0
    %3143 = vmatpush1.msra.mxu0 0.0
    %3144 = vmatprep.subr.mxu0 0.0
    %3145 = vmatpush1.msra.mxu0 0.0
    %3146 = vmatprep.subr.mxu0 0.0
    %3147 = vmatpush1.msra.mxu0 0.0
    %3148 = vmatprep.subr.mxu0 0.0
    %3149 = vmatpush1.msra.mxu0 0.0
    %3150 = vmatprep.mubr.f32.mxu0 0.0
    %3151 = vmatmul.mubr.f32.gmra.mrb[0].mxu0 %v3078
    %v3152 = vpop.f32.mrb[0].mxu0
    %v3153 = vadd.f32 0.0, %v3152
    %v3154 = vpop.f32.mrb[0].mxu0
    %3155 = vmatprep.mubr.f32.mxu0 0.0
    %3156 = vmatmul.mubr.f32.gmra.mrb[0].mxu0 %v3081
    %v3157 = vpop.f32.mrb[0].mxu0
    %v3158 = vadd.f32 0.0, %v3157
    %v3159 = vpop.f32.mrb[0].mxu0
    %3160 = vmatprep.mubr.f32.mxu0 0.0
    %3161 = vmatmul.mubr.f32.gmra.mrb[0].mxu0 %v3084
    %v3162 = vpop.f32.mrb[0].mxu0
    %v3163 = vadd.f32 0.0, %v3162
    %v3164 = vpop.f32.mrb[0].mxu0
    %3165 = vdwg.mxu0
    %v3166 = vadd.f32 %v2985, %v3153
    %v3167 = vadd.f32 %v2986, %v3158
    %v3168 = vadd.f32 %v2987, %v3163
    %v3169 = vld [vmem:[%s6] sm:$0x1]
    %v3171 = vlaneseq
    %v3172 = vshrl.u32 %v3171, 7
    %v3173 = vsub.s32 0, %v3172
    %v3174 = vrot.slane %v3169, %v3173
    %v3176 = vadd.f32 %v3166, %v3174
    %v3177 = vadd.f32 %v3167, %v3174
    %v3178 = vadd.f32 %v3168, %v3174
    %v3179 = vmax.f32 %v3176, 0.0
    %v3180 = vmax.f32 %v3177, 0.0
    %v3181 = vmax.f32 %v3178, 0.0
    %v3182 = vld [vmem:[%s7] sm:$0x3]
    %vm3183 = vcmask 146432
    %v3185 = vsel %vm3183, %v3182, 0
    %vm3187 = vcmask 1041408
    %v3189 = vsel %vm3187, %v3181, 0
    %3191 = vmatprep.subr.mxu0 0.0
    %3192 = vmatpush1.msra.mxu0 %v3179
    %3193 = vmatprep.subr.mxu0 0.0
    %3194 = vmatpush1.msra.mxu0 %v3180
    %3195 = vmatprep.subr.mxu0 0.0
    %3196 = vmatpush1.msra.mxu0 %v3189
    %3197 = vmatprep.subr.mxu0 0.0
    %3198 = vmatpush1.msra.mxu0 0.0
    %3199 = vmatprep.subr.mxu0 0.0
    %3200 = vmatpush1.msra.mxu0 0.0
    %3201 = vmatprep.subr.mxu0 0.0
    %3202 = vmatpush1.msra.mxu0 0.0
    %3203 = vmatprep.subr.mxu0 0.0
    %3204 = vmatpush1.msra.mxu0 0.0
    %3205 = vmatprep.subr.mxu0 0.0
    %3206 = vmatpush1.msra.mxu0 0.0
    %3207 = vmatprep.subr.mxu0 0.0
    %3208 = vmatpush1.msra.mxu0 0.0
    %3209 = vmatprep.subr.mxu0 0.0
    %3210 = vmatpush1.msra.mxu0 0.0
    %3211 = vmatprep.subr.mxu0 0.0
    %3212 = vmatpush1.msra.mxu0 0.0
    %3213 = vmatprep.subr.mxu0 0.0
    %3214 = vmatpush1.msra.mxu0 0.0
    %3215 = vmatprep.subr.mxu0 0.0
    %3216 = vmatpush1.msra.mxu0 0.0
    %3217 = vmatprep.subr.mxu0 0.0
    %3218 = vmatpush1.msra.mxu0 0.0
    %3219 = vmatprep.subr.mxu0 0.0
    %3220 = vmatpush1.msra.mxu0 0.0
    %3221 = vmatprep.subr.mxu0 0.0
    %3222 = vmatpush1.msra.mxu0 0.0
    %3223 = vmatprep.subr.mxu0 0.0
    %3224 = vmatpush1.msra.mxu0 0.0
    %3225 = vmatprep.subr.mxu0 0.0
    %3226 = vmatpush1.msra.mxu0 0.0
    %3227 = vmatprep.subr.mxu0 0.0
    %3228 = vmatpush1.msra.mxu0 0.0
    %3229 = vmatprep.subr.mxu0 0.0
    %3230 = vmatpush1.msra.mxu0 0.0
    %3231 = vmatprep.subr.mxu0 0.0
    %3232 = vmatpush1.msra.mxu0 0.0
    %3233 = vmatprep.subr.mxu0 0.0
    %3234 = vmatpush1.msra.mxu0 0.0
    %3235 = vmatprep.subr.mxu0 0.0
    %3236 = vmatpush1.msra.mxu0 0.0
    %3237 = vmatprep.subr.mxu0 0.0
    %3238 = vmatpush1.msra.mxu0 0.0
    %3239 = vmatprep.subr.mxu0 0.0
    %3240 = vmatpush1.msra.mxu0 0.0
    %3241 = vmatprep.subr.mxu0 0.0
    %3242 = vmatpush1.msra.mxu0 0.0
    %3243 = vmatprep.subr.mxu0 0.0
    %3244 = vmatpush1.msra.mxu0 0.0
    %3245 = vmatprep.subr.mxu0 0.0
    %3246 = vmatpush1.msra.mxu0 0.0
    %3247 = vmatprep.subr.mxu0 0.0
    %3248 = vmatpush1.msra.mxu0 0.0
    %3249 = vmatprep.subr.mxu0 0.0
    %3250 = vmatpush1.msra.mxu0 0.0
    %3251 = vmatprep.subr.mxu0 0.0
    %3252 = vmatpush1.msra.mxu0 0.0
    %3253 = vmatprep.subr.mxu0 0.0
    %3254 = vmatpush1.msra.mxu0 0.0
    %3255 = vmatprep.mubr.f32.mxu0 0.0
    %3256 = vmatmul.mubr.f32.gmra.mrb[0].mxu0 %v3185
    %v3257 = vpop.f32.mrb[0].mxu0
    %v3258 = vadd.f32 0.0, %v3257
    %v3259 = vpop.f32.mrb[0].mxu0
    %3260 = vdwg.mxu0
    %v3261 = vld [vmem:[%s8] sm:$0xff]
    %v3262 = vld [vmem:[%s8 + $0x8] sm:$0xff]
    %v3263 = vld [vmem:[%s8 + $0x10] sm:$0xff]
    %v3264 = vld [vmem:[%s8 + $0x18] sm:$0xff]
    %v3265 = vld [vmem:[%s8 + $0x20] sm:$0xff]
    %v3266 = vld [vmem:[%s8 + $0x28] sm:$0xff]
    %v3267 = vld [vmem:[%s8 + $0x30] sm:$0xff]
    %v3268 = vld [vmem:[%s8 + $0x38] sm:$0xff]
    %s3269 = scalar_lea.vmem %s7, 2
    %v3270 = vld [vmem:[%s3269] sm:$0x3]
    %v3272 = vsel %vm3183, %v3270, 0
    %3274 = vmatprep.subr.mxu0 0.0
    %3275 = vmatpush1.msra.mxu0 %v3179
    %3276 = vmatprep.subr.mxu0 0.0
    %3277 = vmatpush1.msra.mxu0 %v3180
    %3278 = vmatprep.subr.mxu0 0.0
    %3279 = vmatpush1.msra.mxu0 %v3189
    %3280 = vmatprep.subr.mxu0 0.0
    %3281 = vmatpush1.msra.mxu0 0.0
    %3282 = vmatprep.subr.mxu0 0.0
    %3283 = vmatpush1.msra.mxu0 0.0
    %3284 = vmatprep.subr.mxu0 0.0
    %3285 = vmatpush1.msra.mxu0 0.0
    %3286 = vmatprep.subr.mxu0 0.0
    %3287 = vmatpush1.msra.mxu0 0.0
    %3288 = vmatprep.subr.mxu0 0.0
    %3289 = vmatpush1.msra.mxu0 0.0
    %3290 = vmatprep.subr.mxu0 0.0
    %3291 = vmatpush1.msra.mxu0 0.0
    %3292 = vmatprep.subr.mxu0 0.0
    %3293 = vmatpush1.msra.mxu0 0.0
    %3294 = vmatprep.subr.mxu0 0.0
    %3295 = vmatpush1.msra.mxu0 0.0
    %3296 = vmatprep.subr.mxu0 0.0
    %3297 = vmatpush1.msra.mxu0 0.0
    %3298 = vmatprep.subr.mxu0 0.0
    %3299 = vmatpush1.msra.mxu0 0.0
    %3300 = vmatprep.subr.mxu0 0.0
    %3301 = vmatpush1.msra.mxu0 0.0
    %3302 = vmatprep.subr.mxu0 0.0
    %3303 = vmatpush1.msra.mxu0 0.0
    %3304 = vmatprep.subr.mxu0 0.0
    %3305 = vmatpush1.msra.mxu0 0.0
    %3306 = vmatprep.subr.mxu0 0.0
    %3307 = vmatpush1.msra.mxu0 0.0
    %3308 = vmatprep.subr.mxu0 0.0
    %3309 = vmatpush1.msra.mxu0 0.0
    %3310 = vmatprep.subr.mxu0 0.0
    %3311 = vmatpush1.msra.mxu0 0.0
    %3312 = vmatprep.subr.mxu0 0.0
    %3313 = vmatpush1.msra.mxu0 0.0
    %3314 = vmatprep.subr.mxu0 0.0
    %3315 = vmatpush1.msra.mxu0 0.0
    %3316 = vmatprep.subr.mxu0 0.0
    %3317 = vmatpush1.msra.mxu0 0.0
    %3318 = vmatprep.subr.mxu0 0.0
    %3319 = vmatpush1.msra.mxu0 0.0
    %3320 = vmatprep.subr.mxu0 0.0
    %3321 = vmatpush1.msra.mxu0 0.0
    %3322 = vmatprep.subr.mxu0 0.0
    %3323 = vmatpush1.msra.mxu0 0.0
    %3324 = vmatprep.subr.mxu0 0.0
    %3325 = vmatpush1.msra.mxu0 0.0
    %3326 = vmatprep.subr.mxu0 0.0
    %3327 = vmatpush1.msra.mxu0 0.0
    %3328 = vmatprep.subr.mxu0 0.0
    %3329 = vmatpush1.msra.mxu0 0.0
    %3330 = vmatprep.subr.mxu0 0.0
    %3331 = vmatpush1.msra.mxu0 0.0
    %3332 = vmatprep.subr.mxu0 0.0
    %3333 = vmatpush1.msra.mxu0 0.0
    %3334 = vmatprep.subr.mxu0 0.0
    %3335 = vmatpush1.msra.mxu0 0.0
    %3336 = vmatprep.subr.mxu0 0.0
    %3337 = vmatpush1.msra.mxu0 0.0
    %3338 = vmatprep.mubr.f32.mxu0 0.0
    %3339 = vmatmul.mubr.f32.gmra.mrb[0].mxu0 %v3272
    %v3340 = vpop.f32.mrb[0].mxu0
    %v3341 = vadd.f32 0.0, %v3340
    %v3342 = vpop.f32.mrb[0].mxu0
    %3343 = vdwg.mxu0
    %s3344 = scalar_lea.vmem %s8, 64
    %v3345 = vld [vmem:[%s3344] sm:$0xff]
    %v3346 = vld [vmem:[%s3344 + $0x8] sm:$0xff]
    %v3347 = vld [vmem:[%s3344 + $0x10] sm:$0xff]
    %v3348 = vld [vmem:[%s3344 + $0x18] sm:$0xff]
    %v3349 = vld [vmem:[%s3344 + $0x20] sm:$0xff]
    %v3350 = vld [vmem:[%s3344 + $0x28] sm:$0xff]
    %v3351 = vld [vmem:[%s3344 + $0x30] sm:$0xff]
    %v3352 = vld [vmem:[%s3344 + $0x38] sm:$0xff]
    %vm3353 = vcmask 523264
    %v3355 = vsel %vm3353, %v3341, 0
    %3357 = vmatprep.subr.mxu0 0.0
    %3358 = vmatpush1.msra.mxu0 %v3345
    %3359 = vmatprep.subr.mxu0 0.0
    %3360 = vmatpush1.msra.mxu0 %v3346
    %3361 = vmatprep.subr.mxu0 0.0
    %3362 = vmatpush1.msra.mxu0 %v3347
    %3363 = vmatprep.subr.mxu0 0.0
    %3364 = vmatpush1.msra.mxu0 %v3348
    %3365 = vmatprep.subr.mxu0 0.0
    %3366 = vmatpush1.msra.mxu0 %v3349
    %3367 = vmatprep.subr.mxu0 0.0
    %3368 = vmatpush1.msra.mxu0 %v3350
    %3369 = vmatprep.subr.mxu0 0.0
    %3370 = vmatpush1.msra.mxu0 %v3351
    %3371 = vmatprep.subr.mxu0 0.0
    %3372 = vmatpush1.msra.mxu0 %v3352
    %3373 = vmatprep.subr.mxu0 0.0
    %3374 = vmatpush1.msra.mxu0 0.0
    %3375 = vmatprep.subr.mxu0 0.0
    %3376 = vmatpush1.msra.mxu0 0.0
    %3377 = vmatprep.subr.mxu0 0.0
    %3378 = vmatpush1.msra.mxu0 0.0
    %3379 = vmatprep.subr.mxu0 0.0
    %3380 = vmatpush1.msra.mxu0 0.0
    %3381 = vmatprep.subr.mxu0 0.0
    %3382 = vmatpush1.msra.mxu0 0.0
    %3383 = vmatprep.subr.mxu0 0.0
    %3384 = vmatpush1.msra.mxu0 0.0
    %3385 = vmatprep.subr.mxu0 0.0
    %3386 = vmatpush1.msra.mxu0 0.0
    %3387 = vmatprep.subr.mxu0 0.0
    %3388 = vmatpush1.msra.mxu0 0.0
    %3389 = vmatprep.subr.mxu0 0.0
    %3390 = vmatpush1.msra.mxu0 0.0
    %3391 = vmatprep.subr.mxu0 0.0
    %3392 = vmatpush1.msra.mxu0 0.0
    %3393 = vmatprep.subr.mxu0 0.0
    %3394 = vmatpush1.msra.mxu0 0.0
    %3395 = vmatprep.subr.mxu0 0.0
    %3396 = vmatpush1.msra.mxu0 0.0
    %3397 = vmatprep.subr.mxu0 0.0
    %3398 = vmatpush1.msra.mxu0 0.0
    %3399 = vmatprep.subr.mxu0 0.0
    %3400 = vmatpush1.msra.mxu0 0.0
    %3401 = vmatprep.subr.mxu0 0.0
    %3402 = vmatpush1.msra.mxu0 0.0
    %3403 = vmatprep.subr.mxu0 0.0
    %3404 = vmatpush1.msra.mxu0 0.0
    %3405 = vmatprep.subr.mxu0 0.0
    %3406 = vmatpush1.msra.mxu0 0.0
    %3407 = vmatprep.subr.mxu0 0.0
    %3408 = vmatpush1.msra.mxu0 0.0
    %3409 = vmatprep.subr.mxu0 0.0
    %3410 = vmatpush1.msra.mxu0 0.0
    %3411 = vmatprep.subr.mxu0 0.0
    %3412 = vmatpush1.msra.mxu0 0.0
    %3413 = vmatprep.subr.mxu0 0.0
    %3414 = vmatpush1.msra.mxu0 0.0
    %3415 = vmatprep.subr.mxu0 0.0
    %3416 = vmatpush1.msra.mxu0 0.0
    %3417 = vmatprep.subr.mxu0 0.0
    %3418 = vmatpush1.msra.mxu0 0.0
    %3419 = vmatprep.subr.mxu0 0.0
    %3420 = vmatpush1.msra.mxu0 0.0
    %3421 = vmatprep.mubr.f32.mxu0 0.0
    %3422 = vmatmul.mubr.f32.gmra.mrb[0].mxu0 %v3355
    %v3423 = vpop.f32.mrb[0].mxu0
    %v3424 = vadd.f32 0.0, %v3423
    %v3425 = vpop.f32.mrb[0].mxu0
    %3426 = vdwg.mxu0
    %v3428 = vsel %vm3353, %v3258, 0
    %3430 = vmatprep.subr.mxu0 0.0
    %3431 = vmatpush1.msra.mxu0 %v3261
    %3432 = vmatprep.subr.mxu0 0.0
    %3433 = vmatpush1.msra.mxu0 %v3262
    %3434 = vmatprep.subr.mxu0 0.0
    %3435 = vmatpush1.msra.mxu0 %v3263
    %3436 = vmatprep.subr.mxu0 0.0
    %3437 = vmatpush1.msra.mxu0 %v3264
    %3438 = vmatprep.subr.mxu0 0.0
    %3439 = vmatpush1.msra.mxu0 %v3265
    %3440 = vmatprep.subr.mxu0 0.0
    %3441 = vmatpush1.msra.mxu0 %v3266
    %3442 = vmatprep.subr.mxu0 0.0
    %3443 = vmatpush1.msra.mxu0 %v3267
    %3444 = vmatprep.subr.mxu0 0.0
    %3445 = vmatpush1.msra.mxu0 %v3268
    %3446 = vmatprep.subr.mxu0 0.0
    %3447 = vmatpush1.msra.mxu0 0.0
    %3448 = vmatprep.subr.mxu0 0.0
    %3449 = vmatpush1.msra.mxu0 0.0
    %3450 = vmatprep.subr.mxu0 0.0
    %3451 = vmatpush1.msra.mxu0 0.0
    %3452 = vmatprep.subr.mxu0 0.0
    %3453 = vmatpush1.msra.mxu0 0.0
    %3454 = vmatprep.subr.mxu0 0.0
    %3455 = vmatpush1.msra.mxu0 0.0
    %3456 = vmatprep.subr.mxu0 0.0
    %3457 = vmatpush1.msra.mxu0 0.0
    %3458 = vmatprep.subr.mxu0 0.0
    %3459 = vmatpush1.msra.mxu0 0.0
    %3460 = vmatprep.subr.mxu0 0.0
    %3461 = vmatpush1.msra.mxu0 0.0
    %3462 = vmatprep.subr.mxu0 0.0
    %3463 = vmatpush1.msra.mxu0 0.0
    %3464 = vmatprep.subr.mxu0 0.0
    %3465 = vmatpush1.msra.mxu0 0.0
    %3466 = vmatprep.subr.mxu0 0.0
    %3467 = vmatpush1.msra.mxu0 0.0
    %3468 = vmatprep.subr.mxu0 0.0
    %3469 = vmatpush1.msra.mxu0 0.0
    %3470 = vmatprep.subr.mxu0 0.0
    %3471 = vmatpush1.msra.mxu0 0.0
    %3472 = vmatprep.subr.mxu0 0.0
    %3473 = vmatpush1.msra.mxu0 0.0
    %3474 = vmatprep.subr.mxu0 0.0
    %3475 = vmatpush1.msra.mxu0 0.0
    %3476 = vmatprep.subr.mxu0 0.0
    %3477 = vmatpush1.msra.mxu0 0.0
    %3478 = vmatprep.subr.mxu0 0.0
    %3479 = vmatpush1.msra.mxu0 0.0
    %3480 = vmatprep.subr.mxu0 0.0
    %3481 = vmatpush1.msra.mxu0 0.0
    %3482 = vmatprep.subr.mxu0 0.0
    %3483 = vmatpush1.msra.mxu0 0.0
    %3484 = vmatprep.subr.mxu0 0.0
    %3485 = vmatpush1.msra.mxu0 0.0
    %3486 = vmatprep.subr.mxu0 0.0
    %3487 = vmatpush1.msra.mxu0 0.0
    %3488 = vmatprep.subr.mxu0 0.0
    %3489 = vmatpush1.msra.mxu0 0.0
    %3490 = vmatprep.subr.mxu0 0.0
    %3491 = vmatpush1.msra.mxu0 0.0
    %3492 = vmatprep.subr.mxu0 0.0
    %3493 = vmatpush1.msra.mxu0 0.0
    %3494 = vmatprep.mubr.f32.mxu0 0.0
    %3495 = vmatmul.mubr.f32.gmra.mrb[0].mxu0 %v3428
    %v3496 = vpop.f32.mrb[0].mxu0
    %v3497 = vadd.f32 %v3424, %v3496
    %v3498 = vpop.f32.mrb[0].mxu0
    %3499 = vdwg.mxu0
    %s3500 = scalar_lea.vmem %s7, 4
    %v3501 = vld [vmem:[%s3500] sm:$0x3]
    %v3503 = vsel %vm3183, %v3501, 0
    %3505 = vmatprep.subr.mxu0 0.0
    %3506 = vmatpush1.msra.mxu0 %v3179
    %3507 = vmatprep.subr.mxu0 0.0
    %3508 = vmatpush1.msra.mxu0 %v3180
    %3509 = vmatprep.subr.mxu0 0.0
    %3510 = vmatpush1.msra.mxu0 %v3189
    %3511 = vmatprep.subr.mxu0 0.0
    %3512 = vmatpush1.msra.mxu0 0.0
    %3513 = vmatprep.subr.mxu0 0.0
    %3514 = vmatpush1.msra.mxu0 0.0
    %3515 = vmatprep.subr.mxu0 0.0
    %3516 = vmatpush1.msra.mxu0 0.0
    %3517 = vmatprep.subr.mxu0 0.0
    %3518 = vmatpush1.msra.mxu0 0.0
    %3519 = vmatprep.subr.mxu0 0.0
    %3520 = vmatpush1.msra.mxu0 0.0
    %3521 = vmatprep.subr.mxu0 0.0
    %3522 = vmatpush1.msra.mxu0 0.0
    %3523 = vmatprep.subr.mxu0 0.0
    %3524 = vmatpush1.msra.mxu0 0.0
    %3525 = vmatprep.subr.mxu0 0.0
    %3526 = vmatpush1.msra.mxu0 0.0
    %3527 = vmatprep.subr.mxu0 0.0
    %3528 = vmatpush1.msra.mxu0 0.0
    %3529 = vmatprep.subr.mxu0 0.0
    %3530 = vmatpush1.msra.mxu0 0.0
    %3531 = vmatprep.subr.mxu0 0.0
    %3532 = vmatpush1.msra.mxu0 0.0
    %3533 = vmatprep.subr.mxu0 0.0
    %3534 = vmatpush1.msra.mxu0 0.0
    %3535 = vmatprep.subr.mxu0 0.0
    %3536 = vmatpush1.msra.mxu0 0.0
    %3537 = vmatprep.subr.mxu0 0.0
    %3538 = vmatpush1.msra.mxu0 0.0
    %3539 = vmatprep.subr.mxu0 0.0
    %3540 = vmatpush1.msra.mxu0 0.0
    %3541 = vmatprep.subr.mxu0 0.0
    %3542 = vmatpush1.msra.mxu0 0.0
    %3543 = vmatprep.subr.mxu0 0.0
    %3544 = vmatpush1.msra.mxu0 0.0
    %3545 = vmatprep.subr.mxu0 0.0
    %3546 = vmatpush1.msra.mxu0 0.0
    %3547 = vmatprep.subr.mxu0 0.0
    %3548 = vmatpush1.msra.mxu0 0.0
    %3549 = vmatprep.subr.mxu0 0.0
    %3550 = vmatpush1.msra.mxu0 0.0
    %3551 = vmatprep.subr.mxu0 0.0
    %3552 = vmatpush1.msra.mxu0 0.0
    %3553 = vmatprep.subr.mxu0 0.0
    %3554 = vmatpush1.msra.mxu0 0.0
    %3555 = vmatprep.subr.mxu0 0.0
    %3556 = vmatpush1.msra.mxu0 0.0
    %3557 = vmatprep.subr.mxu0 0.0
    %3558 = vmatpush1.msra.mxu0 0.0
    %3559 = vmatprep.subr.mxu0 0.0
    %3560 = vmatpush1.msra.mxu0 0.0
    %3561 = vmatprep.subr.mxu0 0.0
    %3562 = vmatpush1.msra.mxu0 0.0
    %3563 = vmatprep.subr.mxu0 0.0
    %3564 = vmatpush1.msra.mxu0 0.0
    %3565 = vmatprep.subr.mxu0 0.0
    %3566 = vmatpush1.msra.mxu0 0.0
    %3567 = vmatprep.subr.mxu0 0.0
    %3568 = vmatpush1.msra.mxu0 0.0
    %3569 = vmatprep.mubr.f32.mxu0 0.0
    %3570 = vmatmul.mubr.f32.gmra.mrb[0].mxu0 %v3503
    %v3571 = vpop.f32.mrb[0].mxu0
    %v3572 = vadd.f32 0.0, %v3571
    %v3573 = vpop.f32.mrb[0].mxu0
    %3574 = vdwg.mxu0
    %s3575 = scalar_lea.vmem %s8, 128
    %v3576 = vld [vmem:[%s3575] sm:$0xff]
    %v3577 = vld [vmem:[%s3575 + $0x8] sm:$0xff]
    %v3578 = vld [vmem:[%s3575 + $0x10] sm:$0xff]
    %v3579 = vld [vmem:[%s3575 + $0x18] sm:$0xff]
    %v3580 = vld [vmem:[%s3575 + $0x20] sm:$0xff]
    %v3581 = vld [vmem:[%s3575 + $0x28] sm:$0xff]
    %v3582 = vld [vmem:[%s3575 + $0x30] sm:$0xff]
    %v3583 = vld [vmem:[%s3575 + $0x38] sm:$0xff]
    %v3585 = vsel %vm3353, %v3572, 0
    %3587 = vmatprep.subr.mxu0 0.0
    %3588 = vmatpush1.msra.mxu0 %v3576
    %3589 = vmatprep.subr.mxu0 0.0
    %3590 = vmatpush1.msra.mxu0 %v3577
    %3591 = vmatprep.subr.mxu0 0.0
    %3592 = vmatpush1.msra.mxu0 %v3578
    %3593 = vmatprep.subr.mxu0 0.0
    %3594 = vmatpush1.msra.mxu0 %v3579
    %3595 = vmatprep.subr.mxu0 0.0
    %3596 = vmatpush1.msra.mxu0 %v3580
    %3597 = vmatprep.subr.mxu0 0.0
    %3598 = vmatpush1.msra.mxu0 %v3581
    %3599 = vmatprep.subr.mxu0 0.0
    %3600 = vmatpush1.msra.mxu0 %v3582
    %3601 = vmatprep.subr.mxu0 0.0
    %3602 = vmatpush1.msra.mxu0 %v3583
    %3603 = vmatprep.subr.mxu0 0.0
    %3604 = vmatpush1.msra.mxu0 0.0
    %3605 = vmatprep.subr.mxu0 0.0
    %3606 = vmatpush1.msra.mxu0 0.0
    %3607 = vmatprep.subr.mxu0 0.0
    %3608 = vmatpush1.msra.mxu0 0.0
    %3609 = vmatprep.subr.mxu0 0.0
    %3610 = vmatpush1.msra.mxu0 0.0
    %3611 = vmatprep.subr.mxu0 0.0
    %3612 = vmatpush1.msra.mxu0 0.0
    %3613 = vmatprep.subr.mxu0 0.0
    %3614 = vmatpush1.msra.mxu0 0.0
    %3615 = vmatprep.subr.mxu0 0.0
    %3616 = vmatpush1.msra.mxu0 0.0
    %3617 = vmatprep.subr.mxu0 0.0
    %3618 = vmatpush1.msra.mxu0 0.0
    %3619 = vmatprep.subr.mxu0 0.0
    %3620 = vmatpush1.msra.mxu0 0.0
    %3621 = vmatprep.subr.mxu0 0.0
    %3622 = vmatpush1.msra.mxu0 0.0
    %3623 = vmatprep.subr.mxu0 0.0
    %3624 = vmatpush1.msra.mxu0 0.0
    %3625 = vmatprep.subr.mxu0 0.0
    %3626 = vmatpush1.msra.mxu0 0.0
    %3627 = vmatprep.subr.mxu0 0.0
    %3628 = vmatpush1.msra.mxu0 0.0
    %3629 = vmatprep.subr.mxu0 0.0
    %3630 = vmatpush1.msra.mxu0 0.0
    %3631 = vmatprep.subr.mxu0 0.0
    %3632 = vmatpush1.msra.mxu0 0.0
    %3633 = vmatprep.subr.mxu0 0.0
    %3634 = vmatpush1.msra.mxu0 0.0
    %3635 = vmatprep.subr.mxu0 0.0
    %3636 = vmatpush1.msra.mxu0 0.0
    %3637 = vmatprep.subr.mxu0 0.0
    %3638 = vmatpush1.msra.mxu0 0.0
    %3639 = vmatprep.subr.mxu0 0.0
    %3640 = vmatpush1.msra.mxu0 0.0
    %3641 = vmatprep.subr.mxu0 0.0
    %3642 = vmatpush1.msra.mxu0 0.0
    %3643 = vmatprep.subr.mxu0 0.0
    %3644 = vmatpush1.msra.mxu0 0.0
    %3645 = vmatprep.subr.mxu0 0.0
    %3646 = vmatpush1.msra.mxu0 0.0
    %3647 = vmatprep.subr.mxu0 0.0
    %3648 = vmatpush1.msra.mxu0 0.0
    %3649 = vmatprep.subr.mxu0 0.0
    %3650 = vmatpush1.msra.mxu0 0.0
    %3651 = vmatprep.mubr.f32.mxu0 0.0
    %3652 = vmatmul.mubr.f32.gmra.mrb[0].mxu0 %v3585
    %v3653 = vpop.f32.mrb[0].mxu0
    %v3654 = vadd.f32 0.0, %v3653
    %v3655 = vpop.f32.mrb[0].mxu0
    %3656 = vdwg.mxu0
    %v3657 = vadd.f32 %v3497, %v3654
    %s3658 = scalar_lea.vmem %s7, 6
    %v3659 = vld [vmem:[%s3658] sm:$0x3]
    %v3661 = vsel %vm3183, %v3659, 0
    %3663 = vmatprep.subr.mxu0 0.0
    %3664 = vmatpush1.msra.mxu0 %v3179
    %3665 = vmatprep.subr.mxu0 0.0
    %3666 = vmatpush1.msra.mxu0 %v3180
    %3667 = vmatprep.subr.mxu0 0.0
    %3668 = vmatpush1.msra.mxu0 %v3189
    %3669 = vmatprep.subr.mxu0 0.0
    %3670 = vmatpush1.msra.mxu0 0.0
    %3671 = vmatprep.subr.mxu0 0.0
    %3672 = vmatpush1.msra.mxu0 0.0
    %3673 = vmatprep.subr.mxu0 0.0
    %3674 = vmatpush1.msra.mxu0 0.0
    %3675 = vmatprep.subr.mxu0 0.0
    %3676 = vmatpush1.msra.mxu0 0.0
    %3677 = vmatprep.subr.mxu0 0.0
    %3678 = vmatpush1.msra.mxu0 0.0
    %3679 = vmatprep.subr.mxu0 0.0
    %3680 = vmatpush1.msra.mxu0 0.0
    %3681 = vmatprep.subr.mxu0 0.0
    %3682 = vmatpush1.msra.mxu0 0.0
    %3683 = vmatprep.subr.mxu0 0.0
    %3684 = vmatpush1.msra.mxu0 0.0
    %3685 = vmatprep.subr.mxu0 0.0
    %3686 = vmatpush1.msra.mxu0 0.0
    %3687 = vmatprep.subr.mxu0 0.0
    %3688 = vmatpush1.msra.mxu0 0.0
    %3689 = vmatprep.subr.mxu0 0.0
    %3690 = vmatpush1.msra.mxu0 0.0
    %3691 = vmatprep.subr.mxu0 0.0
    %3692 = vmatpush1.msra.mxu0 0.0
    %3693 = vmatprep.subr.mxu0 0.0
    %3694 = vmatpush1.msra.mxu0 0.0
    %3695 = vmatprep.subr.mxu0 0.0
    %3696 = vmatpush1.msra.mxu0 0.0
    %3697 = vmatprep.subr.mxu0 0.0
    %3698 = vmatpush1.msra.mxu0 0.0
    %3699 = vmatprep.subr.mxu0 0.0
    %3700 = vmatpush1.msra.mxu0 0.0
    %3701 = vmatprep.subr.mxu0 0.0
    %3702 = vmatpush1.msra.mxu0 0.0
    %3703 = vmatprep.subr.mxu0 0.0
    %3704 = vmatpush1.msra.mxu0 0.0
    %3705 = vmatprep.subr.mxu0 0.0
    %3706 = vmatpush1.msra.mxu0 0.0
    %3707 = vmatprep.subr.mxu0 0.0
    %3708 = vmatpush1.msra.mxu0 0.0
    %3709 = vmatprep.subr.mxu0 0.0
    %3710 = vmatpush1.msra.mxu0 0.0
    %3711 = vmatprep.subr.mxu0 0.0
    %3712 = vmatpush1.msra.mxu0 0.0
    %3713 = vmatprep.subr.mxu0 0.0
    %3714 = vmatpush1.msra.mxu0 0.0
    %3715 = vmatprep.subr.mxu0 0.0
    %3716 = vmatpush1.msra.mxu0 0.0
    %3717 = vmatprep.subr.mxu0 0.0
    %3718 = vmatpush1.msra.mxu0 0.0
    %3719 = vmatprep.subr.mxu0 0.0
    %3720 = vmatpush1.msra.mxu0 0.0
    %3721 = vmatprep.subr.mxu0 0.0
    %3722 = vmatpush1.msra.mxu0 0.0
    %3723 = vmatprep.subr.mxu0 0.0
    %3724 = vmatpush1.msra.mxu0 0.0
    %3725 = vmatprep.subr.mxu0 0.0
    %3726 = vmatpush1.msra.mxu0 0.0
    %3727 = vmatprep.mubr.f32.mxu0 0.0
    %3728 = vmatmul.mubr.f32.gmra.mrb[0].mxu0 %v3661
    %v3729 = vpop.f32.mrb[0].mxu0
    %v3730 = vadd.f32 0.0, %v3729
    %v3731 = vpop.f32.mrb[0].mxu0
    %3732 = vdwg.mxu0
    %s3733 = scalar_lea.vmem %s8, 192
    %v3734 = vld [vmem:[%s3733] sm:$0xff]
    %v3735 = vld [vmem:[%s3733 + $0x8] sm:$0xff]
    %v3736 = vld [vmem:[%s3733 + $0x10] sm:$0xff]
    %v3737 = vld [vmem:[%s3733 + $0x18] sm:$0xff]
    %v3738 = vld [vmem:[%s3733 + $0x20] sm:$0xff]
    %v3739 = vld [vmem:[%s3733 + $0x28] sm:$0xff]
    %v3740 = vld [vmem:[%s3733 + $0x30] sm:$0xff]
    %v3741 = vld [vmem:[%s3733 + $0x38] sm:$0xff]
    %v3743 = vsel %vm3353, %v3730, 0
    %3745 = vmatprep.subr.mxu0 0.0
    %3746 = vmatpush1.msra.mxu0 %v3734
    %3747 = vmatprep.subr.mxu0 0.0
    %3748 = vmatpush1.msra.mxu0 %v3735
    %3749 = vmatprep.subr.mxu0 0.0
    %3750 = vmatpush1.msra.mxu0 %v3736
    %3751 = vmatprep.subr.mxu0 0.0
    %3752 = vmatpush1.msra.mxu0 %v3737
    %3753 = vmatprep.subr.mxu0 0.0
    %3754 = vmatpush1.msra.mxu0 %v3738
    %3755 = vmatprep.subr.mxu0 0.0
    %3756 = vmatpush1.msra.mxu0 %v3739
    %3757 = vmatprep.subr.mxu0 0.0
    %3758 = vmatpush1.msra.mxu0 %v3740
    %3759 = vmatprep.subr.mxu0 0.0
    %3760 = vmatpush1.msra.mxu0 %v3741
    %3761 = vmatprep.subr.mxu0 0.0
    %3762 = vmatpush1.msra.mxu0 0.0
    %3763 = vmatprep.subr.mxu0 0.0
    %3764 = vmatpush1.msra.mxu0 0.0
    %3765 = vmatprep.subr.mxu0 0.0
    %3766 = vmatpush1.msra.mxu0 0.0
    %3767 = vmatprep.subr.mxu0 0.0
    %3768 = vmatpush1.msra.mxu0 0.0
    %3769 = vmatprep.subr.mxu0 0.0
    %3770 = vmatpush1.msra.mxu0 0.0
    %3771 = vmatprep.subr.mxu0 0.0
    %3772 = vmatpush1.msra.mxu0 0.0
    %3773 = vmatprep.subr.mxu0 0.0
    %3774 = vmatpush1.msra.mxu0 0.0
    %3775 = vmatprep.subr.mxu0 0.0
    %3776 = vmatpush1.msra.mxu0 0.0
    %3777 = vmatprep.subr.mxu0 0.0
    %3778 = vmatpush1.msra.mxu0 0.0
    %3779 = vmatprep.subr.mxu0 0.0
    %3780 = vmatpush1.msra.mxu0 0.0
    %3781 = vmatprep.subr.mxu0 0.0
    %3782 = vmatpush1.msra.mxu0 0.0
    %3783 = vmatprep.subr.mxu0 0.0
    %3784 = vmatpush1.msra.mxu0 0.0
    %3785 = vmatprep.subr.mxu0 0.0
    %3786 = vmatpush1.msra.mxu0 0.0
    %3787 = vmatprep.subr.mxu0 0.0
    %3788 = vmatpush1.msra.mxu0 0.0
    %3789 = vmatprep.subr.mxu0 0.0
    %3790 = vmatpush1.msra.mxu0 0.0
    %3791 = vmatprep.subr.mxu0 0.0
    %3792 = vmatpush1.msra.mxu0 0.0
    %3793 = vmatprep.subr.mxu0 0.0
    %3794 = vmatpush1.msra.mxu0 0.0
    %3795 = vmatprep.subr.mxu0 0.0
    %3796 = vmatpush1.msra.mxu0 0.0
    %3797 = vmatprep.subr.mxu0 0.0
    %3798 = vmatpush1.msra.mxu0 0.0
    %3799 = vmatprep.subr.mxu0 0.0
    %3800 = vmatpush1.msra.mxu0 0.0
    %3801 = vmatprep.subr.mxu0 0.0
    %3802 = vmatpush1.msra.mxu0 0.0
    %3803 = vmatprep.subr.mxu0 0.0
    %3804 = vmatpush1.msra.mxu0 0.0
    %3805 = vmatprep.subr.mxu0 0.0
    %3806 = vmatpush1.msra.mxu0 0.0
    %3807 = vmatprep.subr.mxu0 0.0
    %3808 = vmatpush1.msra.mxu0 0.0
    %3809 = vmatprep.mubr.f32.mxu0 0.0
    %3810 = vmatmul.mubr.f32.gmra.mrb[0].mxu0 %v3743
    %v3811 = vpop.f32.mrb[0].mxu0
    %v3812 = vadd.f32 0.0, %v3811
    %v3813 = vpop.f32.mrb[0].mxu0
    %3814 = vdwg.mxu0
    %v3815 = vadd.f32 %v3657, %v3812
    %s3816 = scalar_lea.vmem %s7, 8
    %v3817 = vld [vmem:[%s3816] sm:$0x3]
    %v3819 = vsel %vm3183, %v3817, 0
    %3821 = vmatprep.subr.mxu0 0.0
    %3822 = vmatpush1.msra.mxu0 %v3179
    %3823 = vmatprep.subr.mxu0 0.0
    %3824 = vmatpush1.msra.mxu0 %v3180
    %3825 = vmatprep.subr.mxu0 0.0
    %3826 = vmatpush1.msra.mxu0 %v3189
    %3827 = vmatprep.subr.mxu0 0.0
    %3828 = vmatpush1.msra.mxu0 0.0
    %3829 = vmatprep.subr.mxu0 0.0
    %3830 = vmatpush1.msra.mxu0 0.0
    %3831 = vmatprep.subr.mxu0 0.0
    %3832 = vmatpush1.msra.mxu0 0.0
    %3833 = vmatprep.subr.mxu0 0.0
    %3834 = vmatpush1.msra.mxu0 0.0
    %3835 = vmatprep.subr.mxu0 0.0
    %3836 = vmatpush1.msra.mxu0 0.0
    %3837 = vmatprep.subr.mxu0 0.0
    %3838 = vmatpush1.msra.mxu0 0.0
    %3839 = vmatprep.subr.mxu0 0.0
    %3840 = vmatpush1.msra.mxu0 0.0
    %3841 = vmatprep.subr.mxu0 0.0
    %3842 = vmatpush1.msra.mxu0 0.0
    %3843 = vmatprep.subr.mxu0 0.0
    %3844 = vmatpush1.msra.mxu0 0.0
    %3845 = vmatprep.subr.mxu0 0.0
    %3846 = vmatpush1.msra.mxu0 0.0
    %3847 = vmatprep.subr.mxu0 0.0
    %3848 = vmatpush1.msra.mxu0 0.0
    %3849 = vmatprep.subr.mxu0 0.0
    %3850 = vmatpush1.msra.mxu0 0.0
    %3851 = vmatprep.subr.mxu0 0.0
    %3852 = vmatpush1.msra.mxu0 0.0
    %3853 = vmatprep.subr.mxu0 0.0
    %3854 = vmatpush1.msra.mxu0 0.0
    %3855 = vmatprep.subr.mxu0 0.0
    %3856 = vmatpush1.msra.mxu0 0.0
    %3857 = vmatprep.subr.mxu0 0.0
    %3858 = vmatpush1.msra.mxu0 0.0
    %3859 = vmatprep.subr.mxu0 0.0
    %3860 = vmatpush1.msra.mxu0 0.0
    %3861 = vmatprep.subr.mxu0 0.0
    %3862 = vmatpush1.msra.mxu0 0.0
    %3863 = vmatprep.subr.mxu0 0.0
    %3864 = vmatpush1.msra.mxu0 0.0
    %3865 = vmatprep.subr.mxu0 0.0
    %3866 = vmatpush1.msra.mxu0 0.0
    %3867 = vmatprep.subr.mxu0 0.0
    %3868 = vmatpush1.msra.mxu0 0.0
    %3869 = vmatprep.subr.mxu0 0.0
    %3870 = vmatpush1.msra.mxu0 0.0
    %3871 = vmatprep.subr.mxu0 0.0
    %3872 = vmatpush1.msra.mxu0 0.0
    %3873 = vmatprep.subr.mxu0 0.0
    %3874 = vmatpush1.msra.mxu0 0.0
    %3875 = vmatprep.subr.mxu0 0.0
    %3876 = vmatpush1.msra.mxu0 0.0
    %3877 = vmatprep.subr.mxu0 0.0
    %3878 = vmatpush1.msra.mxu0 0.0
    %3879 = vmatprep.subr.mxu0 0.0
    %3880 = vmatpush1.msra.mxu0 0.0
    %3881 = vmatprep.subr.mxu0 0.0
    %3882 = vmatpush1.msra.mxu0 0.0
    %3883 = vmatprep.subr.mxu0 0.0
    %3884 = vmatpush1.msra.mxu0 0.0
    %3885 = vmatprep.mubr.f32.mxu0 0.0
    %3886 = vmatmul.mubr.f32.gmra.mrb[0].mxu0 %v3819
    %v3887 = vpop.f32.mrb[0].mxu0
    %v3888 = vadd.f32 0.0, %v3887
    %v3889 = vpop.f32.mrb[0].mxu0
    %3890 = vdwg.mxu0
    %s3891 = scalar_lea.vmem %s8, 256
    %v3892 = vld [vmem:[%s3891] sm:$0xff]
    %v3893 = vld [vmem:[%s3891 + $0x8] sm:$0xff]
    %v3894 = vld [vmem:[%s3891 + $0x10] sm:$0xff]
    %v3895 = vld [vmem:[%s3891 + $0x18] sm:$0xff]
    %v3896 = vld [vmem:[%s3891 + $0x20] sm:$0xff]
    %v3897 = vld [vmem:[%s3891 + $0x28] sm:$0xff]
    %v3898 = vld [vmem:[%s3891 + $0x30] sm:$0xff]
    %v3899 = vld [vmem:[%s3891 + $0x38] sm:$0xff]
    %v3901 = vsel %vm3353, %v3888, 0
    %3903 = vmatprep.subr.mxu0 0.0
    %3904 = vmatpush1.msra.mxu0 %v3892
    %3905 = vmatprep.subr.mxu0 0.0
    %3906 = vmatpush1.msra.mxu0 %v3893
    %3907 = vmatprep.subr.mxu0 0.0
    %3908 = vmatpush1.msra.mxu0 %v3894
    %3909 = vmatprep.subr.mxu0 0.0
    %3910 = vmatpush1.msra.mxu0 %v3895
    %3911 = vmatprep.subr.mxu0 0.0
    %3912 = vmatpush1.msra.mxu0 %v3896
    %3913 = vmatprep.subr.mxu0 0.0
    %3914 = vmatpush1.msra.mxu0 %v3897
    %3915 = vmatprep.subr.mxu0 0.0
    %3916 = vmatpush1.msra.mxu0 %v3898
    %3917 = vmatprep.subr.mxu0 0.0
    %3918 = vmatpush1.msra.mxu0 %v3899
    %3919 = vmatprep.subr.mxu0 0.0
    %3920 = vmatpush1.msra.mxu0 0.0
    %3921 = vmatprep.subr.mxu0 0.0
    %3922 = vmatpush1.msra.mxu0 0.0
    %3923 = vmatprep.subr.mxu0 0.0
    %3924 = vmatpush1.msra.mxu0 0.0
    %3925 = vmatprep.subr.mxu0 0.0
    %3926 = vmatpush1.msra.mxu0 0.0
    %3927 = vmatprep.subr.mxu0 0.0
    %3928 = vmatpush1.msra.mxu0 0.0
    %3929 = vmatprep.subr.mxu0 0.0
    %3930 = vmatpush1.msra.mxu0 0.0
    %3931 = vmatprep.subr.mxu0 0.0
    %3932 = vmatpush1.msra.mxu0 0.0
    %3933 = vmatprep.subr.mxu0 0.0
    %3934 = vmatpush1.msra.mxu0 0.0
    %3935 = vmatprep.subr.mxu0 0.0
    %3936 = vmatpush1.msra.mxu0 0.0
    %3937 = vmatprep.subr.mxu0 0.0
    %3938 = vmatpush1.msra.mxu0 0.0
    %3939 = vmatprep.subr.mxu0 0.0
    %3940 = vmatpush1.msra.mxu0 0.0
    %3941 = vmatprep.subr.mxu0 0.0
    %3942 = vmatpush1.msra.mxu0 0.0
    %3943 = vmatprep.subr.mxu0 0.0
    %3944 = vmatpush1.msra.mxu0 0.0
    %3945 = vmatprep.subr.mxu0 0.0
    %3946 = vmatpush1.msra.mxu0 0.0
    %3947 = vmatprep.subr.mxu0 0.0
    %3948 = vmatpush1.msra.mxu0 0.0
    %3949 = vmatprep.subr.mxu0 0.0
    %3950 = vmatpush1.msra.mxu0 0.0
    %3951 = vmatprep.subr.mxu0 0.0
    %3952 = vmatpush1.msra.mxu0 0.0
    %3953 = vmatprep.subr.mxu0 0.0
    %3954 = vmatpush1.msra.mxu0 0.0
    %3955 = vmatprep.subr.mxu0 0.0
    %3956 = vmatpush1.msra.mxu0 0.0
    %3957 = vmatprep.subr.mxu0 0.0
    %3958 = vmatpush1.msra.mxu0 0.0
    %3959 = vmatprep.subr.mxu0 0.0
    %3960 = vmatpush1.msra.mxu0 0.0
    %3961 = vmatprep.subr.mxu0 0.0
    %3962 = vmatpush1.msra.mxu0 0.0
    %3963 = vmatprep.subr.mxu0 0.0
    %3964 = vmatpush1.msra.mxu0 0.0
    %3965 = vmatprep.subr.mxu0 0.0
    %3966 = vmatpush1.msra.mxu0 0.0
    %3967 = vmatprep.mubr.f32.mxu0 0.0
    %3968 = vmatmul.mubr.f32.gmra.mrb[0].mxu0 %v3901
    %v3969 = vpop.f32.mrb[0].mxu0
    %v3970 = vadd.f32 0.0, %v3969
    %v3971 = vpop.f32.mrb[0].mxu0
    %3972 = vdwg.mxu0
    %v3973 = vadd.f32 %v3815, %v3970
    %s3974 = scalar_lea.vmem %s7, 10
    %v3975 = vld [vmem:[%s3974] sm:$0x3]
    %v3977 = vsel %vm3183, %v3975, 0
    %3979 = vmatprep.subr.mxu0 0.0
    %3980 = vmatpush1.msra.mxu0 %v3179
    %3981 = vmatprep.subr.mxu0 0.0
    %3982 = vmatpush1.msra.mxu0 %v3180
    %3983 = vmatprep.subr.mxu0 0.0
    %3984 = vmatpush1.msra.mxu0 %v3189
    %3985 = vmatprep.subr.mxu0 0.0
    %3986 = vmatpush1.msra.mxu0 0.0
    %3987 = vmatprep.subr.mxu0 0.0
    %3988 = vmatpush1.msra.mxu0 0.0
    %3989 = vmatprep.subr.mxu0 0.0
    %3990 = vmatpush1.msra.mxu0 0.0
    %3991 = vmatprep.subr.mxu0 0.0
    %3992 = vmatpush1.msra.mxu0 0.0
    %3993 = vmatprep.subr.mxu0 0.0
    %3994 = vmatpush1.msra.mxu0 0.0
    %3995 = vmatprep.subr.mxu0 0.0
    %3996 = vmatpush1.msra.mxu0 0.0
    %3997 = vmatprep.subr.mxu0 0.0
    %3998 = vmatpush1.msra.mxu0 0.0
    %3999 = vmatprep.subr.mxu0 0.0
    %4000 = vmatpush1.msra.mxu0 0.0
    %4001 = vmatprep.subr.mxu0 0.0
    %4002 = vmatpush1.msra.mxu0 0.0
    %4003 = vmatprep.subr.mxu0 0.0
    %4004 = vmatpush1.msra.mxu0 0.0
    %4005 = vmatprep.subr.mxu0 0.0
    %4006 = vmatpush1.msra.mxu0 0.0
    %4007 = vmatprep.subr.mxu0 0.0
    %4008 = vmatpush1.msra.mxu0 0.0
    %4009 = vmatprep.subr.mxu0 0.0
    %4010 = vmatpush1.msra.mxu0 0.0
    %4011 = vmatprep.subr.mxu0 0.0
    %4012 = vmatpush1.msra.mxu0 0.0
    %4013 = vmatprep.subr.mxu0 0.0
    %4014 = vmatpush1.msra.mxu0 0.0
    %4015 = vmatprep.subr.mxu0 0.0
    %4016 = vmatpush1.msra.mxu0 0.0
    %4017 = vmatprep.subr.mxu0 0.0
    %4018 = vmatpush1.msra.mxu0 0.0
    %4019 = vmatprep.subr.mxu0 0.0
    %4020 = vmatpush1.msra.mxu0 0.0
    %4021 = vmatprep.subr.mxu0 0.0
    %4022 = vmatpush1.msra.mxu0 0.0
    %4023 = vmatprep.subr.mxu0 0.0
    %4024 = vmatpush1.msra.mxu0 0.0
    %4025 = vmatprep.subr.mxu0 0.0
    %4026 = vmatpush1.msra.mxu0 0.0
    %4027 = vmatprep.subr.mxu0 0.0
    %4028 = vmatpush1.msra.mxu0 0.0
    %4029 = vmatprep.subr.mxu0 0.0
    %4030 = vmatpush1.msra.mxu0 0.0
    %4031 = vmatprep.subr.mxu0 0.0
    %4032 = vmatpush1.msra.mxu0 0.0
    %4033 = vmatprep.subr.mxu0 0.0
    %4034 = vmatpush1.msra.mxu0 0.0
    %4035 = vmatprep.subr.mxu0 0.0
    %4036 = vmatpush1.msra.mxu0 0.0
    %4037 = vmatprep.subr.mxu0 0.0
    %4038 = vmatpush1.msra.mxu0 0.0
    %4039 = vmatprep.subr.mxu0 0.0
    %4040 = vmatpush1.msra.mxu0 0.0
    %4041 = vmatprep.subr.mxu0 0.0
    %4042 = vmatpush1.msra.mxu0 0.0
    %4043 = vmatprep.mubr.f32.mxu0 0.0
    %4044 = vmatmul.mubr.f32.gmra.mrb[0].mxu0 %v3977
    %v4045 = vpop.f32.mrb[0].mxu0
    %v4046 = vadd.f32 0.0, %v4045
    %v4047 = vpop.f32.mrb[0].mxu0
    %4048 = vdwg.mxu0
    %s4049 = scalar_lea.vmem %s8, 320
    %v4050 = vld [vmem:[%s4049] sm:$0xff]
    %v4051 = vld [vmem:[%s4049 + $0x8] sm:$0xff]
    %v4052 = vld [vmem:[%s4049 + $0x10] sm:$0xff]
    %v4053 = vld [vmem:[%s4049 + $0x18] sm:$0xff]
    %v4054 = vld [vmem:[%s4049 + $0x20] sm:$0xff]
    %v4055 = vld [vmem:[%s4049 + $0x28] sm:$0xff]
    %v4056 = vld [vmem:[%s4049 + $0x30] sm:$0xff]
    %v4057 = vld [vmem:[%s4049 + $0x38] sm:$0xff]
    %v4059 = vsel %vm3353, %v4046, 0
    %4061 = vmatprep.subr.mxu0 0.0
    %4062 = vmatpush1.msra.mxu0 %v4050
    %4063 = vmatprep.subr.mxu0 0.0
    %4064 = vmatpush1.msra.mxu0 %v4051
    %4065 = vmatprep.subr.mxu0 0.0
    %4066 = vmatpush1.msra.mxu0 %v4052
    %4067 = vmatprep.subr.mxu0 0.0
    %4068 = vmatpush1.msra.mxu0 %v4053
    %4069 = vmatprep.subr.mxu0 0.0
    %4070 = vmatpush1.msra.mxu0 %v4054
    %4071 = vmatprep.subr.mxu0 0.0
    %4072 = vmatpush1.msra.mxu0 %v4055
    %4073 = vmatprep.subr.mxu0 0.0
    %4074 = vmatpush1.msra.mxu0 %v4056
    %4075 = vmatprep.subr.mxu0 0.0
    %4076 = vmatpush1.msra.mxu0 %v4057
    %4077 = vmatprep.subr.mxu0 0.0
    %4078 = vmatpush1.msra.mxu0 0.0
    %4079 = vmatprep.subr.mxu0 0.0
    %4080 = vmatpush1.msra.mxu0 0.0
    %4081 = vmatprep.subr.mxu0 0.0
    %4082 = vmatpush1.msra.mxu0 0.0
    %4083 = vmatprep.subr.mxu0 0.0
    %4084 = vmatpush1.msra.mxu0 0.0
    %4085 = vmatprep.subr.mxu0 0.0
    %4086 = vmatpush1.msra.mxu0 0.0
    %4087 = vmatprep.subr.mxu0 0.0
    %4088 = vmatpush1.msra.mxu0 0.0
    %4089 = vmatprep.subr.mxu0 0.0
    %4090 = vmatpush1.msra.mxu0 0.0
    %4091 = vmatprep.subr.mxu0 0.0
    %4092 = vmatpush1.msra.mxu0 0.0
    %4093 = vmatprep.subr.mxu0 0.0
    %4094 = vmatpush1.msra.mxu0 0.0
    %4095 = vmatprep.subr.mxu0 0.0
    %4096 = vmatpush1.msra.mxu0 0.0
    %4097 = vmatprep.subr.mxu0 0.0
    %4098 = vmatpush1.msra.mxu0 0.0
    %4099 = vmatprep.subr.mxu0 0.0
    %4100 = vmatpush1.msra.mxu0 0.0
    %4101 = vmatprep.subr.mxu0 0.0
    %4102 = vmatpush1.msra.mxu0 0.0
    %4103 = vmatprep.subr.mxu0 0.0
    %4104 = vmatpush1.msra.mxu0 0.0
    %4105 = vmatprep.subr.mxu0 0.0
    %4106 = vmatpush1.msra.mxu0 0.0
    %4107 = vmatprep.subr.mxu0 0.0
    %4108 = vmatpush1.msra.mxu0 0.0
    %4109 = vmatprep.subr.mxu0 0.0
    %4110 = vmatpush1.msra.mxu0 0.0
    %4111 = vmatprep.subr.mxu0 0.0
    %4112 = vmatpush1.msra.mxu0 0.0
    %4113 = vmatprep.subr.mxu0 0.0
    %4114 = vmatpush1.msra.mxu0 0.0
    %4115 = vmatprep.subr.mxu0 0.0
    %4116 = vmatpush1.msra.mxu0 0.0
    %4117 = vmatprep.subr.mxu0 0.0
    %4118 = vmatpush1.msra.mxu0 0.0
    %4119 = vmatprep.subr.mxu0 0.0
    %4120 = vmatpush1.msra.mxu0 0.0
    %4121 = vmatprep.subr.mxu0 0.0
    %4122 = vmatpush1.msra.mxu0 0.0
    %4123 = vmatprep.subr.mxu0 0.0
    %4124 = vmatpush1.msra.mxu0 0.0
    %4125 = vmatprep.mubr.f32.mxu0 0.0
    %4126 = vmatmul.mubr.f32.gmra.mrb[0].mxu0 %v4059
    %v4127 = vpop.f32.mrb[0].mxu0
    %v4128 = vadd.f32 0.0, %v4127
    %v4129 = vpop.f32.mrb[0].mxu0
    %4130 = vdwg.mxu0
    %v4131 = vadd.f32 %v3973, %v4128
    %s4132 = scalar_lea.vmem %s7, 12
    %v4133 = vld [vmem:[%s4132] sm:$0x3]
    %v4135 = vsel %vm3183, %v4133, 0
    %4137 = vmatprep.subr.mxu0 0.0
    %4138 = vmatpush1.msra.mxu0 %v3179
    %4139 = vmatprep.subr.mxu0 0.0
    %4140 = vmatpush1.msra.mxu0 %v3180
    %4141 = vmatprep.subr.mxu0 0.0
    %4142 = vmatpush1.msra.mxu0 %v3189
    %4143 = vmatprep.subr.mxu0 0.0
    %4144 = vmatpush1.msra.mxu0 0.0
    %4145 = vmatprep.subr.mxu0 0.0
    %4146 = vmatpush1.msra.mxu0 0.0
    %4147 = vmatprep.subr.mxu0 0.0
    %4148 = vmatpush1.msra.mxu0 0.0
    %4149 = vmatprep.subr.mxu0 0.0
    %4150 = vmatpush1.msra.mxu0 0.0
    %4151 = vmatprep.subr.mxu0 0.0
    %4152 = vmatpush1.msra.mxu0 0.0
    %4153 = vmatprep.subr.mxu0 0.0
    %4154 = vmatpush1.msra.mxu0 0.0
    %4155 = vmatprep.subr.mxu0 0.0
    %4156 = vmatpush1.msra.mxu0 0.0
    %4157 = vmatprep.subr.mxu0 0.0
    %4158 = vmatpush1.msra.mxu0 0.0
    %4159 = vmatprep.subr.mxu0 0.0
    %4160 = vmatpush1.msra.mxu0 0.0
    %4161 = vmatprep.subr.mxu0 0.0
    %4162 = vmatpush1.msra.mxu0 0.0
    %4163 = vmatprep.subr.mxu0 0.0
    %4164 = vmatpush1.msra.mxu0 0.0
    %4165 = vmatprep.subr.mxu0 0.0
    %4166 = vmatpush1.msra.mxu0 0.0
    %4167 = vmatprep.subr.mxu0 0.0
    %4168 = vmatpush1.msra.mxu0 0.0
    %4169 = vmatprep.subr.mxu0 0.0
    %4170 = vmatpush1.msra.mxu0 0.0
    %4171 = vmatprep.subr.mxu0 0.0
    %4172 = vmatpush1.msra.mxu0 0.0
    %4173 = vmatprep.subr.mxu0 0.0
    %4174 = vmatpush1.msra.mxu0 0.0
    %4175 = vmatprep.subr.mxu0 0.0
    %4176 = vmatpush1.msra.mxu0 0.0
    %4177 = vmatprep.subr.mxu0 0.0
    %4178 = vmatpush1.msra.mxu0 0.0
    %4179 = vmatprep.subr.mxu0 0.0
    %4180 = vmatpush1.msra.mxu0 0.0
    %4181 = vmatprep.subr.mxu0 0.0
    %4182 = vmatpush1.msra.mxu0 0.0
    %4183 = vmatprep.subr.mxu0 0.0
    %4184 = vmatpush1.msra.mxu0 0.0
    %4185 = vmatprep.subr.mxu0 0.0
    %4186 = vmatpush1.msra.mxu0 0.0
    %4187 = vmatprep.subr.mxu0 0.0
    %4188 = vmatpush1.msra.mxu0 0.0
    %4189 = vmatprep.subr.mxu0 0.0
    %4190 = vmatpush1.msra.mxu0 0.0
    %4191 = vmatprep.subr.mxu0 0.0
    %4192 = vmatpush1.msra.mxu0 0.0
    %4193 = vmatprep.subr.mxu0 0.0
    %4194 = vmatpush1.msra.mxu0 0.0
    %4195 = vmatprep.subr.mxu0 0.0
    %4196 = vmatpush1.msra.mxu0 0.0
    %4197 = vmatprep.subr.mxu0 0.0
    %4198 = vmatpush1.msra.mxu0 0.0
    %4199 = vmatprep.subr.mxu0 0.0
    %4200 = vmatpush1.msra.mxu0 0.0
    %4201 = vmatprep.mubr.f32.mxu0 0.0
    %4202 = vmatmul.mubr.f32.gmra.mrb[0].mxu0 %v4135
    %v4203 = vpop.f32.mrb[0].mxu0
    %v4204 = vadd.f32 0.0, %v4203
    %v4205 = vpop.f32.mrb[0].mxu0
    %4206 = vdwg.mxu0
    %s4207 = scalar_lea.vmem %s8, 384
    %v4208 = vld [vmem:[%s4207] sm:$0xff]
    %v4209 = vld [vmem:[%s4207 + $0x8] sm:$0xff]
    %v4210 = vld [vmem:[%s4207 + $0x10] sm:$0xff]
    %v4211 = vld [vmem:[%s4207 + $0x18] sm:$0xff]
    %v4212 = vld [vmem:[%s4207 + $0x20] sm:$0xff]
    %v4213 = vld [vmem:[%s4207 + $0x28] sm:$0xff]
    %v4214 = vld [vmem:[%s4207 + $0x30] sm:$0xff]
    %v4215 = vld [vmem:[%s4207 + $0x38] sm:$0xff]
    %v4217 = vsel %vm3353, %v4204, 0
    %4219 = vmatprep.subr.mxu0 0.0
    %4220 = vmatpush1.msra.mxu0 %v4208
    %4221 = vmatprep.subr.mxu0 0.0
    %4222 = vmatpush1.msra.mxu0 %v4209
    %4223 = vmatprep.subr.mxu0 0.0
    %4224 = vmatpush1.msra.mxu0 %v4210
    %4225 = vmatprep.subr.mxu0 0.0
    %4226 = vmatpush1.msra.mxu0 %v4211
    %4227 = vmatprep.subr.mxu0 0.0
    %4228 = vmatpush1.msra.mxu0 %v4212
    %4229 = vmatprep.subr.mxu0 0.0
    %4230 = vmatpush1.msra.mxu0 %v4213
    %4231 = vmatprep.subr.mxu0 0.0
    %4232 = vmatpush1.msra.mxu0 %v4214
    %4233 = vmatprep.subr.mxu0 0.0
    %4234 = vmatpush1.msra.mxu0 %v4215
    %4235 = vmatprep.subr.mxu0 0.0
    %4236 = vmatpush1.msra.mxu0 0.0
    %4237 = vmatprep.subr.mxu0 0.0
    %4238 = vmatpush1.msra.mxu0 0.0
    %4239 = vmatprep.subr.mxu0 0.0
    %4240 = vmatpush1.msra.mxu0 0.0
    %4241 = vmatprep.subr.mxu0 0.0
    %4242 = vmatpush1.msra.mxu0 0.0
    %4243 = vmatprep.subr.mxu0 0.0
    %4244 = vmatpush1.msra.mxu0 0.0
    %4245 = vmatprep.subr.mxu0 0.0
    %4246 = vmatpush1.msra.mxu0 0.0
    %4247 = vmatprep.subr.mxu0 0.0
    %4248 = vmatpush1.msra.mxu0 0.0
    %4249 = vmatprep.subr.mxu0 0.0
    %4250 = vmatpush1.msra.mxu0 0.0
    %4251 = vmatprep.subr.mxu0 0.0
    %4252 = vmatpush1.msra.mxu0 0.0
    %4253 = vmatprep.subr.mxu0 0.0
    %4254 = vmatpush1.msra.mxu0 0.0
    %4255 = vmatprep.subr.mxu0 0.0
    %4256 = vmatpush1.msra.mxu0 0.0
    %4257 = vmatprep.subr.mxu0 0.0
    %4258 = vmatpush1.msra.mxu0 0.0
    %4259 = vmatprep.subr.mxu0 0.0
    %4260 = vmatpush1.msra.mxu0 0.0
    %4261 = vmatprep.subr.mxu0 0.0
    %4262 = vmatpush1.msra.mxu0 0.0
    %4263 = vmatprep.subr.mxu0 0.0
    %4264 = vmatpush1.msra.mxu0 0.0
    %4265 = vmatprep.subr.mxu0 0.0
    %4266 = vmatpush1.msra.mxu0 0.0
    %4267 = vmatprep.subr.mxu0 0.0
    %4268 = vmatpush1.msra.mxu0 0.0
    %4269 = vmatprep.subr.mxu0 0.0
    %4270 = vmatpush1.msra.mxu0 0.0
    %4271 = vmatprep.subr.mxu0 0.0
    %4272 = vmatpush1.msra.mxu0 0.0
    %4273 = vmatprep.subr.mxu0 0.0
    %4274 = vmatpush1.msra.mxu0 0.0
    %4275 = vmatprep.subr.mxu0 0.0
    %4276 = vmatpush1.msra.mxu0 0.0
    %4277 = vmatprep.subr.mxu0 0.0
    %4278 = vmatpush1.msra.mxu0 0.0
    %4279 = vmatprep.subr.mxu0 0.0
    %4280 = vmatpush1.msra.mxu0 0.0
    %4281 = vmatprep.subr.mxu0 0.0
    %4282 = vmatpush1.msra.mxu0 0.0
    %4283 = vmatprep.mubr.f32.mxu0 0.0
    %4284 = vmatmul.mubr.f32.gmra.mrb[0].mxu0 %v4217
    %v4285 = vpop.f32.mrb[0].mxu0
    %v4286 = vadd.f32 0.0, %v4285
    %v4287 = vpop.f32.mrb[0].mxu0
    %4288 = vdwg.mxu0
    %v4289 = vadd.f32 %v4131, %v4286
    %s4290 = scalar_lea.vmem %s7, 14
    %v4291 = vld [vmem:[%s4290] sm:$0x3]
    %v4293 = vsel %vm3183, %v4291, 0
    %4295 = vmatprep.subr.mxu0 0.0
    %4296 = vmatpush1.msra.mxu0 %v3179
    %4297 = vmatprep.subr.mxu0 0.0
    %4298 = vmatpush1.msra.mxu0 %v3180
    %4299 = vmatprep.subr.mxu0 0.0
    %4300 = vmatpush1.msra.mxu0 %v3189
    %4301 = vmatprep.subr.mxu0 0.0
    %4302 = vmatpush1.msra.mxu0 0.0
    %4303 = vmatprep.subr.mxu0 0.0
    %4304 = vmatpush1.msra.mxu0 0.0
    %4305 = vmatprep.subr.mxu0 0.0
    %4306 = vmatpush1.msra.mxu0 0.0
    %4307 = vmatprep.subr.mxu0 0.0
    %4308 = vmatpush1.msra.mxu0 0.0
    %4309 = vmatprep.subr.mxu0 0.0
    %4310 = vmatpush1.msra.mxu0 0.0
    %4311 = vmatprep.subr.mxu0 0.0
    %4312 = vmatpush1.msra.mxu0 0.0
    %4313 = vmatprep.subr.mxu0 0.0
    %4314 = vmatpush1.msra.mxu0 0.0
    %4315 = vmatprep.subr.mxu0 0.0
    %4316 = vmatpush1.msra.mxu0 0.0
    %4317 = vmatprep.subr.mxu0 0.0
    %4318 = vmatpush1.msra.mxu0 0.0
    %4319 = vmatprep.subr.mxu0 0.0
    %4320 = vmatpush1.msra.mxu0 0.0
    %4321 = vmatprep.subr.mxu0 0.0
    %4322 = vmatpush1.msra.mxu0 0.0
    %4323 = vmatprep.subr.mxu0 0.0
    %4324 = vmatpush1.msra.mxu0 0.0
    %4325 = vmatprep.subr.mxu0 0.0
    %4326 = vmatpush1.msra.mxu0 0.0
    %4327 = vmatprep.subr.mxu0 0.0
    %4328 = vmatpush1.msra.mxu0 0.0
    %4329 = vmatprep.subr.mxu0 0.0
    %4330 = vmatpush1.msra.mxu0 0.0
    %4331 = vmatprep.subr.mxu0 0.0
    %4332 = vmatpush1.msra.mxu0 0.0
    %4333 = vmatprep.subr.mxu0 0.0
    %4334 = vmatpush1.msra.mxu0 0.0
    %4335 = vmatprep.subr.mxu0 0.0
    %4336 = vmatpush1.msra.mxu0 0.0
    %4337 = vmatprep.subr.mxu0 0.0
    %4338 = vmatpush1.msra.mxu0 0.0
    %4339 = vmatprep.subr.mxu0 0.0
    %4340 = vmatpush1.msra.mxu0 0.0
    %4341 = vmatprep.subr.mxu0 0.0
    %4342 = vmatpush1.msra.mxu0 0.0
    %4343 = vmatprep.subr.mxu0 0.0
    %4344 = vmatpush1.msra.mxu0 0.0
    %4345 = vmatprep.subr.mxu0 0.0
    %4346 = vmatpush1.msra.mxu0 0.0
    %4347 = vmatprep.subr.mxu0 0.0
    %4348 = vmatpush1.msra.mxu0 0.0
    %4349 = vmatprep.subr.mxu0 0.0
    %4350 = vmatpush1.msra.mxu0 0.0
    %4351 = vmatprep.subr.mxu0 0.0
    %4352 = vmatpush1.msra.mxu0 0.0
    %4353 = vmatprep.subr.mxu0 0.0
    %4354 = vmatpush1.msra.mxu0 0.0
    %4355 = vmatprep.subr.mxu0 0.0
    %4356 = vmatpush1.msra.mxu0 0.0
    %4357 = vmatprep.subr.mxu0 0.0
    %4358 = vmatpush1.msra.mxu0 0.0
    %4359 = vmatprep.mubr.f32.mxu0 0.0
    %4360 = vmatmul.mubr.f32.gmra.mrb[0].mxu0 %v4293
    %v4361 = vpop.f32.mrb[0].mxu0
    %v4362 = vadd.f32 0.0, %v4361
    %v4363 = vpop.f32.mrb[0].mxu0
    %4364 = vdwg.mxu0
    %s4365 = scalar_lea.vmem %s8, 448
    %v4366 = vld [vmem:[%s4365] sm:$0xff]
    %v4367 = vld [vmem:[%s4365 + $0x8] sm:$0xff]
    %v4368 = vld [vmem:[%s4365 + $0x10] sm:$0xff]
    %v4369 = vld [vmem:[%s4365 + $0x18] sm:$0xff]
    %v4370 = vld [vmem:[%s4365 + $0x20] sm:$0xff]
    %v4371 = vld [vmem:[%s4365 + $0x28] sm:$0xff]
    %v4372 = vld [vmem:[%s4365 + $0x30] sm:$0xff]
    %v4373 = vld [vmem:[%s4365 + $0x38] sm:$0xff]
    %v4375 = vsel %vm3353, %v4362, 0
    %4377 = vmatprep.subr.mxu0 0.0
    %4378 = vmatpush1.msra.mxu0 %v4366
    %4379 = vmatprep.subr.mxu0 0.0
    %4380 = vmatpush1.msra.mxu0 %v4367
    %4381 = vmatprep.subr.mxu0 0.0
    %4382 = vmatpush1.msra.mxu0 %v4368
    %4383 = vmatprep.subr.mxu0 0.0
    %4384 = vmatpush1.msra.mxu0 %v4369
    %4385 = vmatprep.subr.mxu0 0.0
    %4386 = vmatpush1.msra.mxu0 %v4370
    %4387 = vmatprep.subr.mxu0 0.0
    %4388 = vmatpush1.msra.mxu0 %v4371
    %4389 = vmatprep.subr.mxu0 0.0
    %4390 = vmatpush1.msra.mxu0 %v4372
    %4391 = vmatprep.subr.mxu0 0.0
    %4392 = vmatpush1.msra.mxu0 %v4373
    %4393 = vmatprep.subr.mxu0 0.0
    %4394 = vmatpush1.msra.mxu0 0.0
    %4395 = vmatprep.subr.mxu0 0.0
    %4396 = vmatpush1.msra.mxu0 0.0
    %4397 = vmatprep.subr.mxu0 0.0
    %4398 = vmatpush1.msra.mxu0 0.0
    %4399 = vmatprep.subr.mxu0 0.0
    %4400 = vmatpush1.msra.mxu0 0.0
    %4401 = vmatprep.subr.mxu0 0.0
    %4402 = vmatpush1.msra.mxu0 0.0
    %4403 = vmatprep.subr.mxu0 0.0
    %4404 = vmatpush1.msra.mxu0 0.0
    %4405 = vmatprep.subr.mxu0 0.0
    %4406 = vmatpush1.msra.mxu0 0.0
    %4407 = vmatprep.subr.mxu0 0.0
    %4408 = vmatpush1.msra.mxu0 0.0
    %4409 = vmatprep.subr.mxu0 0.0
    %4410 = vmatpush1.msra.mxu0 0.0
    %4411 = vmatprep.subr.mxu0 0.0
    %4412 = vmatpush1.msra.mxu0 0.0
    %4413 = vmatprep.subr.mxu0 0.0
    %4414 = vmatpush1.msra.mxu0 0.0
    %4415 = vmatprep.subr.mxu0 0.0
    %4416 = vmatpush1.msra.mxu0 0.0
    %4417 = vmatprep.subr.mxu0 0.0
    %4418 = vmatpush1.msra.mxu0 0.0
    %4419 = vmatprep.subr.mxu0 0.0
    %4420 = vmatpush1.msra.mxu0 0.0
    %4421 = vmatprep.subr.mxu0 0.0
    %4422 = vmatpush1.msra.mxu0 0.0
    %4423 = vmatprep.subr.mxu0 0.0
    %4424 = vmatpush1.msra.mxu0 0.0
    %4425 = vmatprep.subr.mxu0 0.0
    %4426 = vmatpush1.msra.mxu0 0.0
    %4427 = vmatprep.subr.mxu0 0.0
    %4428 = vmatpush1.msra.mxu0 0.0
    %4429 = vmatprep.subr.mxu0 0.0
    %4430 = vmatpush1.msra.mxu0 0.0
    %4431 = vmatprep.subr.mxu0 0.0
    %4432 = vmatpush1.msra.mxu0 0.0
    %4433 = vmatprep.subr.mxu0 0.0
    %4434 = vmatpush1.msra.mxu0 0.0
    %4435 = vmatprep.subr.mxu0 0.0
    %4436 = vmatpush1.msra.mxu0 0.0
    %4437 = vmatprep.subr.mxu0 0.0
    %4438 = vmatpush1.msra.mxu0 0.0
    %4439 = vmatprep.subr.mxu0 0.0
    %4440 = vmatpush1.msra.mxu0 0.0
    %4441 = vmatprep.mubr.f32.mxu0 0.0
    %4442 = vmatmul.mubr.f32.gmra.mrb[0].mxu0 %v4375
    %v4443 = vpop.f32.mrb[0].mxu0
    %v4444 = vadd.f32 0.0, %v4443
    %v4445 = vpop.f32.mrb[0].mxu0
    %4446 = vdwg.mxu0
    %v4447 = vadd.f32 %v4289, %v4444
    %s4448 = scalar_lea.vmem %s7, 16
    %v4449 = vld [vmem:[%s4448] sm:$0x3]
    %v4451 = vsel %vm3183, %v4449, 0
    %4453 = vmatprep.subr.mxu0 0.0
    %4454 = vmatpush1.msra.mxu0 %v3179
    %4455 = vmatprep.subr.mxu0 0.0
    %4456 = vmatpush1.msra.mxu0 %v3180
    %4457 = vmatprep.subr.mxu0 0.0
    %4458 = vmatpush1.msra.mxu0 %v3189
    %4459 = vmatprep.subr.mxu0 0.0
    %4460 = vmatpush1.msra.mxu0 0.0
    %4461 = vmatprep.subr.mxu0 0.0
    %4462 = vmatpush1.msra.mxu0 0.0
    %4463 = vmatprep.subr.mxu0 0.0
    %4464 = vmatpush1.msra.mxu0 0.0
    %4465 = vmatprep.subr.mxu0 0.0
    %4466 = vmatpush1.msra.mxu0 0.0
    %4467 = vmatprep.subr.mxu0 0.0
    %4468 = vmatpush1.msra.mxu0 0.0
    %4469 = vmatprep.subr.mxu0 0.0
    %4470 = vmatpush1.msra.mxu0 0.0
    %4471 = vmatprep.subr.mxu0 0.0
    %4472 = vmatpush1.msra.mxu0 0.0
    %4473 = vmatprep.subr.mxu0 0.0
    %4474 = vmatpush1.msra.mxu0 0.0
    %4475 = vmatprep.subr.mxu0 0.0
    %4476 = vmatpush1.msra.mxu0 0.0
    %4477 = vmatprep.subr.mxu0 0.0
    %4478 = vmatpush1.msra.mxu0 0.0
    %4479 = vmatprep.subr.mxu0 0.0
    %4480 = vmatpush1.msra.mxu0 0.0
    %4481 = vmatprep.subr.mxu0 0.0
    %4482 = vmatpush1.msra.mxu0 0.0
    %4483 = vmatprep.subr.mxu0 0.0
    %4484 = vmatpush1.msra.mxu0 0.0
    %4485 = vmatprep.subr.mxu0 0.0
    %4486 = vmatpush1.msra.mxu0 0.0
    %4487 = vmatprep.subr.mxu0 0.0
    %4488 = vmatpush1.msra.mxu0 0.0
    %4489 = vmatprep.subr.mxu0 0.0
    %4490 = vmatpush1.msra.mxu0 0.0
    %4491 = vmatprep.subr.mxu0 0.0
    %4492 = vmatpush1.msra.mxu0 0.0
    %4493 = vmatprep.subr.mxu0 0.0
    %4494 = vmatpush1.msra.mxu0 0.0
    %4495 = vmatprep.subr.mxu0 0.0
    %4496 = vmatpush1.msra.mxu0 0.0
    %4497 = vmatprep.subr.mxu0 0.0
    %4498 = vmatpush1.msra.mxu0 0.0
    %4499 = vmatprep.subr.mxu0 0.0
    %4500 = vmatpush1.msra.mxu0 0.0
    %4501 = vmatprep.subr.mxu0 0.0
    %4502 = vmatpush1.msra.mxu0 0.0
    %4503 = vmatprep.subr.mxu0 0.0
    %4504 = vmatpush1.msra.mxu0 0.0
    %4505 = vmatprep.subr.mxu0 0.0
    %4506 = vmatpush1.msra.mxu0 0.0
    %4507 = vmatprep.subr.mxu0 0.0
    %4508 = vmatpush1.msra.mxu0 0.0
    %4509 = vmatprep.subr.mxu0 0.0
    %4510 = vmatpush1.msra.mxu0 0.0
    %4511 = vmatprep.subr.mxu0 0.0
    %4512 = vmatpush1.msra.mxu0 0.0
    %4513 = vmatprep.subr.mxu0 0.0
    %4514 = vmatpush1.msra.mxu0 0.0
    %4515 = vmatprep.subr.mxu0 0.0
    %4516 = vmatpush1.msra.mxu0 0.0
    %4517 = vmatprep.mubr.f32.mxu0 0.0
    %4518 = vmatmul.mubr.f32.gmra.mrb[0].mxu0 %v4451
    %v4519 = vpop.f32.mrb[0].mxu0
    %v4520 = vadd.f32 0.0, %v4519
    %v4521 = vpop.f32.mrb[0].mxu0
    %4522 = vdwg.mxu0
    %s4523 = scalar_lea.vmem %s8, 512
    %v4524 = vld [vmem:[%s4523] sm:$0xff]
    %v4525 = vld [vmem:[%s4523 + $0x8] sm:$0xff]
    %v4526 = vld [vmem:[%s4523 + $0x10] sm:$0xff]
    %v4527 = vld [vmem:[%s4523 + $0x18] sm:$0xff]
    %v4528 = vld [vmem:[%s4523 + $0x20] sm:$0xff]
    %v4529 = vld [vmem:[%s4523 + $0x28] sm:$0xff]
    %v4530 = vld [vmem:[%s4523 + $0x30] sm:$0xff]
    %v4531 = vld [vmem:[%s4523 + $0x38] sm:$0xff]
    %v4533 = vsel %vm3353, %v4520, 0
    %4535 = vmatprep.subr.mxu0 0.0
    %4536 = vmatpush1.msra.mxu0 %v4524
    %4537 = vmatprep.subr.mxu0 0.0
    %4538 = vmatpush1.msra.mxu0 %v4525
    %4539 = vmatprep.subr.mxu0 0.0
    %4540 = vmatpush1.msra.mxu0 %v4526
    %4541 = vmatprep.subr.mxu0 0.0
    %4542 = vmatpush1.msra.mxu0 %v4527
    %4543 = vmatprep.subr.mxu0 0.0
    %4544 = vmatpush1.msra.mxu0 %v4528
    %4545 = vmatprep.subr.mxu0 0.0
    %4546 = vmatpush1.msra.mxu0 %v4529
    %4547 = vmatprep.subr.mxu0 0.0
    %4548 = vmatpush1.msra.mxu0 %v4530
    %4549 = vmatprep.subr.mxu0 0.0
    %4550 = vmatpush1.msra.mxu0 %v4531
    %4551 = vmatprep.subr.mxu0 0.0
    %4552 = vmatpush1.msra.mxu0 0.0
    %4553 = vmatprep.subr.mxu0 0.0
    %4554 = vmatpush1.msra.mxu0 0.0
    %4555 = vmatprep.subr.mxu0 0.0
    %4556 = vmatpush1.msra.mxu0 0.0
    %4557 = vmatprep.subr.mxu0 0.0
    %4558 = vmatpush1.msra.mxu0 0.0
    %4559 = vmatprep.subr.mxu0 0.0
    %4560 = vmatpush1.msra.mxu0 0.0
    %4561 = vmatprep.subr.mxu0 0.0
    %4562 = vmatpush1.msra.mxu0 0.0
    %4563 = vmatprep.subr.mxu0 0.0
    %4564 = vmatpush1.msra.mxu0 0.0
    %4565 = vmatprep.subr.mxu0 0.0
    %4566 = vmatpush1.msra.mxu0 0.0
    %4567 = vmatprep.subr.mxu0 0.0
    %4568 = vmatpush1.msra.mxu0 0.0
    %4569 = vmatprep.subr.mxu0 0.0
    %4570 = vmatpush1.msra.mxu0 0.0
    %4571 = vmatprep.subr.mxu0 0.0
    %4572 = vmatpush1.msra.mxu0 0.0
    %4573 = vmatprep.subr.mxu0 0.0
    %4574 = vmatpush1.msra.mxu0 0.0
    %4575 = vmatprep.subr.mxu0 0.0
    %4576 = vmatpush1.msra.mxu0 0.0
    %4577 = vmatprep.subr.mxu0 0.0
    %4578 = vmatpush1.msra.mxu0 0.0
    %4579 = vmatprep.subr.mxu0 0.0
    %4580 = vmatpush1.msra.mxu0 0.0
    %4581 = vmatprep.subr.mxu0 0.0
    %4582 = vmatpush1.msra.mxu0 0.0
    %4583 = vmatprep.subr.mxu0 0.0
    %4584 = vmatpush1.msra.mxu0 0.0
    %4585 = vmatprep.subr.mxu0 0.0
    %4586 = vmatpush1.msra.mxu0 0.0
    %4587 = vmatprep.subr.mxu0 0.0
    %4588 = vmatpush1.msra.mxu0 0.0
    %4589 = vmatprep.subr.mxu0 0.0
    %4590 = vmatpush1.msra.mxu0 0.0
    %4591 = vmatprep.subr.mxu0 0.0
    %4592 = vmatpush1.msra.mxu0 0.0
    %4593 = vmatprep.subr.mxu0 0.0
    %4594 = vmatpush1.msra.mxu0 0.0
    %4595 = vmatprep.subr.mxu0 0.0
    %4596 = vmatpush1.msra.mxu0 0.0
    %4597 = vmatprep.subr.mxu0 0.0
    %4598 = vmatpush1.msra.mxu0 0.0
    %4599 = vmatprep.mubr.f32.mxu0 0.0
    %4600 = vmatmul.mubr.f32.gmra.mrb[0].mxu0 %v4533
    %v4601 = vpop.f32.mrb[0].mxu0
    %v4602 = vadd.f32 0.0, %v4601
    %v4603 = vpop.f32.mrb[0].mxu0
    %4604 = vdwg.mxu0
    %v4605 = vadd.f32 %v4447, %v4602
    %v4606 = vld [vmem:[%s9] sm:$0x1]
    %v4608 = vlaneseq
    %v4609 = vshrl.u32 %v4608, 7
    %v4610 = vsub.s32 0, %v4609
    %v4611 = vrot.slane %v4606, %v4610
    %v4613 = vadd.f32 %v4605, %v4611
    %v4614 = vmax.f32 %v4613, 0.0
    %v4615 = vld [vmem:[%s11] sm:$0xff]
    %v4616 = vld [vmem:[%s11 + $0x8] sm:$0xff]
    %v4617 = vld [vmem:[%s11 + $0x10] sm:$0xff]
    %v4618 = vld [vmem:[%s11 + $0x18] sm:$0xff]
    %v4619 = vld [vmem:[%s11 + $0x20] sm:$0xff]
    %v4620 = vld [vmem:[%s11 + $0x28] sm:$0xff]
    %v4621 = vld [vmem:[%s11 + $0x30] sm:$0xff]
    %v4622 = vld [vmem:[%s11 + $0x38] sm:$0xff]
    %v4623 = vld [vmem:[%s1] sm:$0x3]
    %v4624 = vld [vmem:[%s12] sm:$0x7]
    %vm4625 = vcmask 23552
    %v4627 = vsel %vm4625, %v4623, 0
    %vm4629 = vcmask 1042432
    %v4631 = vsel %vm4629, %v4624, 0
    %4633 = vmatprep.subr.mxu0 0.0
    %4634 = vmatpush1.msra.mxu0 %v4631
    %4635 = vmatprep.subr.mxu0 0.0
    %4636 = vmatpush1.msra.mxu0 0.0
    %4637 = vmatprep.subr.mxu0 0.0
    %4638 = vmatpush1.msra.mxu0 0.0
    %4639 = vmatprep.subr.mxu0 0.0
    %4640 = vmatpush1.msra.mxu0 0.0
    %4641 = vmatprep.subr.mxu0 0.0
    %4642 = vmatpush1.msra.mxu0 0.0
    %4643 = vmatprep.subr.mxu0 0.0
    %4644 = vmatpush1.msra.mxu0 0.0
    %4645 = vmatprep.subr.mxu0 0.0
    %4646 = vmatpush1.msra.mxu0 0.0
    %4647 = vmatprep.subr.mxu0 0.0
    %4648 = vmatpush1.msra.mxu0 0.0
    %4649 = vmatprep.subr.mxu0 0.0
    %4650 = vmatpush1.msra.mxu0 0.0
    %4651 = vmatprep.subr.mxu0 0.0
    %4652 = vmatpush1.msra.mxu0 0.0
    %4653 = vmatprep.subr.mxu0 0.0
    %4654 = vmatpush1.msra.mxu0 0.0
    %4655 = vmatprep.subr.mxu0 0.0
    %4656 = vmatpush1.msra.mxu0 0.0
    %4657 = vmatprep.subr.mxu0 0.0
    %4658 = vmatpush1.msra.mxu0 0.0
    %4659 = vmatprep.subr.mxu0 0.0
    %4660 = vmatpush1.msra.mxu0 0.0
    %4661 = vmatprep.subr.mxu0 0.0
    %4662 = vmatpush1.msra.mxu0 0.0
    %4663 = vmatprep.subr.mxu0 0.0
    %4664 = vmatpush1.msra.mxu0 0.0
    %4665 = vmatprep.subr.mxu0 0.0
    %4666 = vmatpush1.msra.mxu0 0.0
    %4667 = vmatprep.subr.mxu0 0.0
    %4668 = vmatpush1.msra.mxu0 0.0
    %4669 = vmatprep.subr.mxu0 0.0
    %4670 = vmatpush1.msra.mxu0 0.0
    %4671 = vmatprep.subr.mxu0 0.0
    %4672 = vmatpush1.msra.mxu0 0.0
    %4673 = vmatprep.subr.mxu0 0.0
    %4674 = vmatpush1.msra.mxu0 0.0
    %4675 = vmatprep.subr.mxu0 0.0
    %4676 = vmatpush1.msra.mxu0 0.0
    %4677 = vmatprep.subr.mxu0 0.0
    %4678 = vmatpush1.msra.mxu0 0.0
    %4679 = vmatprep.subr.mxu0 0.0
    %4680 = vmatpush1.msra.mxu0 0.0
    %4681 = vmatprep.subr.mxu0 0.0
    %4682 = vmatpush1.msra.mxu0 0.0
    %4683 = vmatprep.subr.mxu0 0.0
    %4684 = vmatpush1.msra.mxu0 0.0
    %4685 = vmatprep.subr.mxu0 0.0
    %4686 = vmatpush1.msra.mxu0 0.0
    %4687 = vmatprep.subr.mxu0 0.0
    %4688 = vmatpush1.msra.mxu0 0.0
    %4689 = vmatprep.subr.mxu0 0.0
    %4690 = vmatpush1.msra.mxu0 0.0
    %4691 = vmatprep.subr.mxu0 0.0
    %4692 = vmatpush1.msra.mxu0 0.0
    %4693 = vmatprep.subr.mxu0 0.0
    %4694 = vmatpush1.msra.mxu0 0.0
    %4695 = vmatprep.subr.mxu0 0.0
    %4696 = vmatpush1.msra.mxu0 0.0
    %4697 = vmatprep.mubr.f32.mxu0 0.0
    %4698 = vmatmul.mubr.f32.gmra.mrb[0].mxu0 %v4627
    %v4699 = vpop.f32.mrb[0].mxu0
    %v4700 = vadd.f32 0.0, %v4699
    %v4701 = vpop.f32.mrb[0].mxu0
    %4702 = vdwg.mxu0
    %v4704 = vsel %vm3353, %v4614, 0
    %4706 = vmatprep.subr.mxu0 0.0
    %4707 = vmatpush1.msra.mxu0 %v4615
    %4708 = vmatprep.subr.mxu0 0.0
    %4709 = vmatpush1.msra.mxu0 %v4616
    %4710 = vmatprep.subr.mxu0 0.0
    %4711 = vmatpush1.msra.mxu0 %v4617
    %4712 = vmatprep.subr.mxu0 0.0
    %4713 = vmatpush1.msra.mxu0 %v4618
    %4714 = vmatprep.subr.mxu0 0.0
    %4715 = vmatpush1.msra.mxu0 %v4619
    %4716 = vmatprep.subr.mxu0 0.0
    %4717 = vmatpush1.msra.mxu0 %v4620
    %4718 = vmatprep.subr.mxu0 0.0
    %4719 = vmatpush1.msra.mxu0 %v4621
    %4720 = vmatprep.subr.mxu0 0.0
    %4721 = vmatpush1.msra.mxu0 %v4622
    %4722 = vmatprep.subr.mxu0 0.0
    %4723 = vmatpush1.msra.mxu0 0.0
    %4724 = vmatprep.subr.mxu0 0.0
    %4725 = vmatpush1.msra.mxu0 0.0
    %4726 = vmatprep.subr.mxu0 0.0
    %4727 = vmatpush1.msra.mxu0 0.0
    %4728 = vmatprep.subr.mxu0 0.0
    %4729 = vmatpush1.msra.mxu0 0.0
    %4730 = vmatprep.subr.mxu0 0.0
    %4731 = vmatpush1.msra.mxu0 0.0
    %4732 = vmatprep.subr.mxu0 0.0
    %4733 = vmatpush1.msra.mxu0 0.0
    %4734 = vmatprep.subr.mxu0 0.0
    %4735 = vmatpush1.msra.mxu0 0.0
    %4736 = vmatprep.subr.mxu0 0.0
    %4737 = vmatpush1.msra.mxu0 0.0
    %4738 = vmatprep.subr.mxu0 0.0
    %4739 = vmatpush1.msra.mxu0 0.0
    %4740 = vmatprep.subr.mxu0 0.0
    %4741 = vmatpush1.msra.mxu0 0.0
    %4742 = vmatprep.subr.mxu0 0.0
    %4743 = vmatpush1.msra.mxu0 0.0
    %4744 = vmatprep.subr.mxu0 0.0
    %4745 = vmatpush1.msra.mxu0 0.0
    %4746 = vmatprep.subr.mxu0 0.0
    %4747 = vmatpush1.msra.mxu0 0.0
    %4748 = vmatprep.subr.mxu0 0.0
    %4749 = vmatpush1.msra.mxu0 0.0
    %4750 = vmatprep.subr.mxu0 0.0
    %4751 = vmatpush1.msra.mxu0 0.0
    %4752 = vmatprep.subr.mxu0 0.0
    %4753 = vmatpush1.msra.mxu0 0.0
    %4754 = vmatprep.subr.mxu0 0.0
    %4755 = vmatpush1.msra.mxu0 0.0
    %4756 = vmatprep.subr.mxu0 0.0
    %4757 = vmatpush1.msra.mxu0 0.0
    %4758 = vmatprep.subr.mxu0 0.0
    %4759 = vmatpush1.msra.mxu0 0.0
    %4760 = vmatprep.subr.mxu0 0.0
    %4761 = vmatpush1.msra.mxu0 0.0
    %4762 = vmatprep.subr.mxu0 0.0
    %4763 = vmatpush1.msra.mxu0 0.0
    %4764 = vmatprep.subr.mxu0 0.0
    %4765 = vmatpush1.msra.mxu0 0.0
    %4766 = vmatprep.subr.mxu0 0.0
    %4767 = vmatpush1.msra.mxu0 0.0
    %4768 = vmatprep.subr.mxu0 0.0
    %4769 = vmatpush1.msra.mxu0 0.0
    %4770 = vmatprep.mubr.f32.mxu0 0.0
    %4771 = vmatmul.mubr.f32.gmra.mrb[0].mxu0 %v4704
    %v4772 = vpop.f32.mrb[0].mxu0
    %v4773 = vadd.f32 %v4700, %v4772
    %v4774 = vpop.f32.mrb[0].mxu0
    %4775 = vdwg.mxu0
    %v4776 = vld [vmem:[%s13] sm:$0x1]
    %v4778 = vlaneseq
    %v4779 = vshrl.u32 %v4778, 7
    %v4780 = vsub.s32 0, %v4779
    %v4781 = vrot.slane %v4776, %v4780
    %v4783 = vadd.f32 %v4773, %v4781
    %v4784 = vmax.f32 %v4783, 0.0
    %4785 = vst [vmem:[#allocation2] sm:$0x3] %v4784
    // Predicated region
    $region58: #{_lambda_.1} parent=1 // pred_check
      _
    $region59: #{_lambda_.1} parent=1 // pred_check_branch
      %4787 = sbr.rel (0) target = $region61
    $region60: #{_lambda_.1} parent=1 // pred_region
      %s4789 = ssub.s32 32, 32
      %4790 = vsyncadd [#allocation3], %s4789
      %s4792 = sshll.u32 [#allocation2], 4
      %s4793 = int_to_ptr.vmem [resolvable:$true] %s4792
      %4795 = dma.vmem_to_hbm [thread:$0]  %s4793, 32, %s14, [#allocation3]
    $region61: #{_lambda_.1} parent=1 // pred_fallthru
      _
    // Predicated region
    $region62: #{_lambda_.1} parent=1 // pred_check
      _
    $region63: #{_lambda_.1} parent=1 // pred_check_branch
      %4797 = sbr.rel (0) target = $region65
    $region64: #{_lambda_.1} parent=1 // pred_region
      %4798 = dma.done [#allocation3], 32
    $region65: #{_lambda_.1} parent=1 // pred_fallthru
      _
    %4799 = vsyncpa [#allocation3], 1

</llo_original>
